<compile_context>
chip_gen: v7x
topology: tpu7x:2x2x1
jax: 0.10.0
libtpu: 0.0.40
codegen_flags: <defaults>
</compile_context>

<pallas_src>
import functools

import jax
import jax.numpy as jnp
from jax.experimental import pallas as pl
from jax.experimental.pallas import tpu as pltpu

EPS = 1e-3  # BatchNorm2d eps


def _fused_kernel(x_ref, w1_ref, w2_ref, gamma_ref, beta_ref, mask_l_ref, mask_r_ref,
                  o_ref, apad_ref, *, W, L):
    # x_ref:     (Cin, M)        bf16   input activations, channels-first, M = H*W
    # w1_ref:    (Cmid, Cin)     bf16   1x1 conv weight
    # w2_ref:    (9, Cout, Cmid) bf16   3x3 conv weight, tap-major (kh*3+kw)
    # gamma/beta:(Cmid, 1)       f32    BN affine params
    # mask_l/r:  (1, M_pad)      bf16   zero-masks for left/right spatial boundary (w==0 / w==W-1)
    # o_ref:     (Cout, M_pad)   f32    lane-dense output (M_pad = round_up(M, 128))
    # apad_ref:  (Cmid, PADW)    bf16   VMEM scratch: zero-padded post-ReLU activation
    M = x_ref.shape[1]
    M_pad = o_ref.shape[1]

    # ---- 1x1 conv on the MXU (bf16 operands, f32 accumulation) ----
    y = jnp.dot(w1_ref[...], x_ref[...], preferred_element_type=jnp.float32)  # (Cmid, M) f32

    # ---- training-mode BatchNorm: single-pass stats, folded scale/shift, then ReLU ----
    inv_m = 1.0 / M
    mean = jnp.sum(y, axis=1, keepdims=True) * inv_m                 # (Cmid, 1)
    ex2 = jnp.sum(y * y, axis=1, keepdims=True) * inv_m              # E[y^2]
    var = ex2 - mean * mean                                          # biased variance
    inv = jax.lax.rsqrt(var + EPS)
    scale = gamma_ref[...] * inv
    shift = beta_ref[...] - mean * scale
    a = jnp.maximum(y * scale + shift, 0.0).astype(jnp.bfloat16)     # (Cmid, M) bf16

    # ---- stage zero-padded activation in VMEM (stays on-chip) ----
    apad_ref[...] = jnp.zeros_like(apad_ref)
    apad_ref[:, pl.ds(L, M)] = a

    # ---- 3x3 "same" conv = 9 shifted matmuls accumulated in f32 ----
    acc = None
    for kh in range(3):
        for kw in range(3):
            s = (kh - 1) * W + (kw - 1)                              # flat row shift
            sh = apad_ref[:, pl.ds(L + s, M_pad)]                    # (Cmid, M_pad) bf16
            # h-boundary handled by the zero margins of apad; w-boundary needs a mask.
            if kw == 0:
                sh = sh * mask_l_ref[...]
            elif kw == 2:
                sh = sh * mask_r_ref[...]
            contrib = jnp.dot(w2_ref[kh * 3 + kw], sh,
                              preferred_element_type=jnp.float32)    # (Cout, M_pad) f32
            acc = contrib if acc is None else acc + contrib

    o_ref[...] = acc                                                 # lane-dense unmasked store


def _vmem_spec():
    return pl.BlockSpec(memory_space=pltpu.MemorySpace.VMEM)


@jax.jit
def forward(x_nchw, w1_oihw, gamma, beta, w2_oihw):
    N, Cin, H, W = x_nchw.shape
    assert N == 1, "fused kernel implemented for the module's batch size (N=1)"
    Cmid = w1_oihw.shape[0]
    Cout = w2_oihw.shape[0]
    M = H * W
    M_pad = ((M + 127) // 128) * 128          # 625 -> 640, lane-dense output width
    L = 128                                   # left zero margin in the padded scratch
    PADW = L + M_pad + 128                    # right margin covers max shift (+W+1)

    # Channels-first 2D views (no transposes needed for N=1), bf16 matmul operands.
    x2d = x_nchw.reshape(Cin, M).astype(jnp.bfloat16)                        # (Cin, M)
    w1m = w1_oihw[:, :, 0, 0].astype(jnp.bfloat16)                           # (Cmid, Cin)
    w2m = jnp.transpose(w2_oihw, (2, 3, 0, 1)).reshape(9, Cout, Cmid).astype(jnp.bfloat16)
    gamma2 = gamma.reshape(Cmid, 1).astype(jnp.float32)
    beta2 = beta.reshape(Cmid, 1).astype(jnp.float32)

    # Spatial-boundary masks over flattened (h*W + w) output columns.
    w_idx = jnp.arange(M_pad, dtype=jnp.int32) % W
    mask_l = (w_idx != 0).astype(jnp.bfloat16).reshape(1, M_pad)             # zero where w == 0
    mask_r = (w_idx != (W - 1)).astype(jnp.bfloat16).reshape(1, M_pad)       # zero where w == W-1

    flops = 2 * Cmid * Cin * M + 2 * 9 * Cout * Cmid * M_pad
    bytes_accessed = (x2d.size + w1m.size + w2m.size + mask_l.size + mask_r.size) * 2 \
                     + (gamma2.size + beta2.size) * 4 + Cout * M_pad * 4

    kernel = functools.partial(_fused_kernel, W=W, L=L)
    out2d = pl.pallas_call(
        kernel,
        out_shape=jax.ShapeDtypeStruct((Cout, M_pad), jnp.float32),
        in_specs=[_vmem_spec()] * 7,
        out_specs=_vmem_spec(),
        scratch_shapes=[pltpu.VMEM((Cmid, PADW), jnp.bfloat16)],
        cost_estimate=pl.CostEstimate(flops=flops, transcendentals=Cmid,
                                      bytes_accessed=bytes_accessed),
    )(x2d, w1m, w2m, gamma2, beta2, mask_l, mask_r)

    # (Cout, M_pad) -> (1, Cout, H, W): just drop padding columns and reshape (no transpose).
    return out2d[:, :M].reshape(1, Cout, H, W)


def reference(x_nchw, w1_oihw, gamma, beta, w2_oihw):
    # Pure-JAX f32 reference (training-mode BN), high precision.
    dn = ("NCHW", "OIHW", "NCHW")
    hp = jax.lax.Precision.HIGHEST
    y = jax.lax.conv_general_dilated(x_nchw, w1_oihw, (1, 1), "VALID",
                                     dimension_numbers=dn, precision=hp)
    mean = y.mean(axis=(0, 2, 3), keepdims=True)
    var = ((y - mean) ** 2).mean(axis=(0, 2, 3), keepdims=True)
    yhat = (y - mean) / jnp.sqrt(var + EPS) * gamma.reshape(1, -1, 1, 1) + beta.reshape(1, -1, 1, 1)
    a = jnp.maximum(yhat, 0.0)
    return jax.lax.conv_general_dilated(a, w2_oihw, (1, 1), ((1, 1), (1, 1)),
                                        dimension_numbers=dn, precision=hp)


if __name__ == "__main__":
    # Shapes implied by the module: Cin=288, Cmid=64, Cout=96; input 1x288x25x25.
    N, Cin, H, W = 1, 288, 25, 25
    Cmid, Cout = 64, 96

    key = jax.random.PRNGKey(0)
    k_x, k_w1, k_g, k_b, k_w2 = jax.random.split(key, 5)

    x76 = jax.random.normal(k_x, (N, Cin, H, W), dtype=jnp.float32)
    w1 = 0.05 * jax.random.normal(k_w1, (Cmid, Cin, 1, 1), dtype=jnp.float32)   # conv2d22 weight
    gamma = 1.0 + 0.1 * jax.random.normal(k_g, (Cmid,), dtype=jnp.float32)      # BN weight
    beta = 0.1 * jax.random.normal(k_b, (Cmid,), dtype=jnp.float32)             # BN bias
    w2 = 0.05 * jax.random.normal(k_w2, (Cout, Cmid, 3, 3), dtype=jnp.float32)  # conv2d23 weight

    out = forward(x76, w1, gamma, beta, w2)
    out = jax.block_until_ready(out)
    assert out.shape == (N, Cout, H, W), out.shape

    ref = jax.block_until_ready(reference(x76, w1, gamma, beta, w2))
    max_err = float(jnp.max(jnp.abs(out - ref)))
    # bf16 matmul operands (f32 accumulation) vs. an all-f32 reference; observed error ~1e-2.
    assert max_err < 4e-2, f"max abs error too large: {max_err}"

    print("KERNEL_OK")
</pallas_src>

<mosaic_0001>
module attributes {stable_mosaic.version = 11 : i64} {
  func.func @_fused_kernel(%arg0: memref<288x625xbf16, #tpu.memory_space<vmem>>, %arg1: memref<64x288xbf16, #tpu.memory_space<vmem>>, %arg2: memref<9x96x64xbf16, #tpu.memory_space<vmem>>, %arg3: memref<64x1xf32, #tpu.memory_space<vmem>>, %arg4: memref<64x1xf32, #tpu.memory_space<vmem>>, %arg5: memref<1x640xbf16, #tpu.memory_space<vmem>>, %arg6: memref<1x640xbf16, #tpu.memory_space<vmem>>, %arg7: memref<96x640xf32, #tpu.memory_space<vmem>>, %arg8: memref<64x896xbf16, #tpu.memory_space<vmem>>) attributes {dimension_semantics = [], scalar_prefetch = 0 : i64, scratch_operands = 1 : i64, tpu.core_type = #tpu.core_type<tc>} {
    %c0 = arith.constant 0 : index
    %c0_0 = arith.constant 0 : index
    %0 = vector.load %arg1[%c0, %c0_0] : memref<64x288xbf16, #tpu.memory_space<vmem>>, vector<64x288xbf16>
    %c0_1 = arith.constant 0 : index
    %c0_2 = arith.constant 0 : index
    %1 = vector.load %arg0[%c0_1, %c0_2] : memref<288x625xbf16, #tpu.memory_space<vmem>>, vector<288x625xbf16>
    %cst = arith.constant dense<0.000000e+00> : vector<64x625xf32>
    %2 = tpu.matmul %0, %1, %cst {dimension_numbers = #tpu.dot_dimension_numbers<[1], [0], [0], [1], [0, 0, 1, 1], [], []>} : vector<64x288xbf16>, vector<288x625xbf16>, vector<64x625xf32> -> vector<64x625xf32>
    %cst_3 = arith.constant dense<0.000000e+00> : vector<64xf32>
    %3 = vector.multi_reduction <add>, %2, %cst_3 [1] : vector<64x625xf32> to vector<64xf32>
    %4 = vector.shape_cast %3 : vector<64xf32> to vector<64x1xf32>
    %cst_4 = arith.constant 1.600000e-03 : f32
    %5 = vector.broadcast %cst_4 : f32 to vector<64x1xf32>
    %6 = arith.mulf %4, %5 : vector<64x1xf32>
    %7 = arith.mulf %2, %2 : vector<64x625xf32>
    %cst_5 = arith.constant dense<0.000000e+00> : vector<64xf32>
    %8 = vector.multi_reduction <add>, %7, %cst_5 [1] : vector<64x625xf32> to vector<64xf32>
    %9 = vector.shape_cast %8 : vector<64xf32> to vector<64x1xf32>
    %cst_6 = arith.constant 1.600000e-03 : f32
    %10 = vector.broadcast %cst_6 : f32 to vector<64x1xf32>
    %11 = arith.mulf %9, %10 : vector<64x1xf32>
    %12 = arith.mulf %6, %6 : vector<64x1xf32>
    %13 = arith.subf %11, %12 : vector<64x1xf32>
    %cst_7 = arith.constant 1.000000e-03 : f32
    %14 = vector.broadcast %cst_7 : f32 to vector<64x1xf32>
    %15 = arith.addf %13, %14 : vector<64x1xf32>
    %16 = math.rsqrt %15 : vector<64x1xf32>
    %c0_8 = arith.constant 0 : index
    %c0_9 = arith.constant 0 : index
    %17 = vector.load %arg3[%c0_8, %c0_9] : memref<64x1xf32, #tpu.memory_space<vmem>>, vector<64x1xf32>
    %18 = arith.mulf %17, %16 : vector<64x1xf32>
    %c0_10 = arith.constant 0 : index
    %c0_11 = arith.constant 0 : index
    %19 = vector.load %arg4[%c0_10, %c0_11] : memref<64x1xf32, #tpu.memory_space<vmem>>, vector<64x1xf32>
    %20 = arith.mulf %6, %18 : vector<64x1xf32>
    %21 = arith.subf %19, %20 : vector<64x1xf32>
    %22 = vector.broadcast %18 : vector<64x1xf32> to vector<64x625xf32>
    %23 = arith.mulf %2, %22 : vector<64x625xf32>
    %24 = vector.broadcast %21 : vector<64x1xf32> to vector<64x625xf32>
    %25 = arith.addf %23, %24 : vector<64x625xf32>
    %cst_12 = arith.constant 0.000000e+00 : f32
    %26 = vector.broadcast %cst_12 : f32 to vector<64x625xf32>
    %27 = arith.maximumf %25, %26 : vector<64x625xf32>
    %28 = arith.truncf %27 : vector<64x625xf32> to vector<64x625xbf16>
    %cst_13 = arith.constant 0.000000e+00 : bf16
    %29 = vector.broadcast %cst_13 : bf16 to vector<64x896xbf16>
    %c0_14 = arith.constant 0 : index
    %c0_15 = arith.constant 0 : index
    %30 = vector.load %arg8[%c0_14, %c0_15] : memref<64x896xbf16, #tpu.memory_space<vmem>>, vector<64x896xbf16>
    tpu.vector_store %arg8[%c0_14, %c0_15], %29 {strides = array<i32>} : memref<64x896xbf16, #tpu.memory_space<vmem>>, vector<64x896xbf16>,
    %c0_16 = arith.constant 0 : index
    %c128 = arith.constant 128 : index
    %31 = vector.load %arg8[%c0_16, %c128] : memref<64x896xbf16, #tpu.memory_space<vmem>>, vector<64x625xbf16>
    tpu.vector_store %arg8[%c0_16, %c128], %28 {strides = array<i32>} : memref<64x896xbf16, #tpu.memory_space<vmem>>, vector<64x625xbf16>,
    %c0_17 = arith.constant 0 : index
    %c102 = arith.constant 102 : index
    %32 = vector.load %arg8[%c0_17, %c102] : memref<64x896xbf16, #tpu.memory_space<vmem>>, vector<64x640xbf16>
    %c0_18 = arith.constant 0 : index
    %c0_19 = arith.constant 0 : index
    %33 = vector.load %arg5[%c0_18, %c0_19] : memref<1x640xbf16, #tpu.memory_space<vmem>>, vector<1x640xbf16>
    %34 = vector.broadcast %33 : vector<1x640xbf16> to vector<64x640xbf16>
    %35 = arith.mulf %32, %34 : vector<64x640xbf16>
    %c0_20 = arith.constant 0 : index
    %c0_21 = arith.constant 0 : index
    %c0_22 = arith.constant 0 : index
    %36 = vector.load %arg2[%c0_20, %c0_21, %c0_22] : memref<9x96x64xbf16, #tpu.memory_space<vmem>>, vector<1x96x64xbf16>
    %37 = vector.shape_cast %36 : vector<1x96x64xbf16> to vector<96x64xbf16>
    %cst_23 = arith.constant dense<0.000000e+00> : vector<96x640xf32>
    %38 = tpu.matmul %37, %35, %cst_23 {dimension_numbers = #tpu.dot_dimension_numbers<[1], [0], [0], [1], [0, 0, 1, 1], [], []>} : vector<96x64xbf16>, vector<64x640xbf16>, vector<96x640xf32> -> vector<96x640xf32>
    %c0_24 = arith.constant 0 : index
    %c103 = arith.constant 103 : index
    %39 = vector.load %arg8[%c0_24, %c103] : memref<64x896xbf16, #tpu.memory_space<vmem>>, vector<64x640xbf16>
    %c1 = arith.constant 1 : index
    %c0_25 = arith.constant 0 : index
    %c0_26 = arith.constant 0 : index
    %40 = vector.load %arg2[%c1, %c0_25, %c0_26] : memref<9x96x64xbf16, #tpu.memory_space<vmem>>, vector<1x96x64xbf16>
    %41 = vector.shape_cast %40 : vector<1x96x64xbf16> to vector<96x64xbf16>
    %cst_27 = arith.constant dense<0.000000e+00> : vector<96x640xf32>
    %42 = tpu.matmul %41, %39, %cst_27 {dimension_numbers = #tpu.dot_dimension_numbers<[1], [0], [0], [1], [0, 0, 1, 1], [], []>} : vector<96x64xbf16>, vector<64x640xbf16>, vector<96x640xf32> -> vector<96x640xf32>
    %43 = arith.addf %38, %42 : vector<96x640xf32>
    %c0_28 = arith.constant 0 : index
    %c104 = arith.constant 104 : index
    %44 = vector.load %arg8[%c0_28, %c104] : memref<64x896xbf16, #tpu.memory_space<vmem>>, vector<64x640xbf16>
    %c0_29 = arith.constant 0 : index
    %c0_30 = arith.constant 0 : index
    %45 = vector.load %arg6[%c0_29, %c0_30] : memref<1x640xbf16, #tpu.memory_space<vmem>>, vector<1x640xbf16>
    %46 = vector.broadcast %45 : vector<1x640xbf16> to vector<64x640xbf16>
    %47 = arith.mulf %44, %46 : vector<64x640xbf16>
    %c2 = arith.constant 2 : index
    %c0_31 = arith.constant 0 : index
    %c0_32 = arith.constant 0 : index
    %48 = vector.load %arg2[%c2, %c0_31, %c0_32] : memref<9x96x64xbf16, #tpu.memory_space<vmem>>, vector<1x96x64xbf16>
    %49 = vector.shape_cast %48 : vector<1x96x64xbf16> to vector<96x64xbf16>
    %cst_33 = arith.constant dense<0.000000e+00> : vector<96x640xf32>
    %50 = tpu.matmul %49, %47, %cst_33 {dimension_numbers = #tpu.dot_dimension_numbers<[1], [0], [0], [1], [0, 0, 1, 1], [], []>} : vector<96x64xbf16>, vector<64x640xbf16>, vector<96x640xf32> -> vector<96x640xf32>
    %51 = arith.addf %43, %50 : vector<96x640xf32>
    %c0_34 = arith.constant 0 : index
    %c127 = arith.constant 127 : index
    %52 = vector.load %arg8[%c0_34, %c127] : memref<64x896xbf16, #tpu.memory_space<vmem>>, vector<64x640xbf16>
    %c0_35 = arith.constant 0 : index
    %c0_36 = arith.constant 0 : index
    %53 = vector.load %arg5[%c0_35, %c0_36] : memref<1x640xbf16, #tpu.memory_space<vmem>>, vector<1x640xbf16>
    %54 = vector.broadcast %53 : vector<1x640xbf16> to vector<64x640xbf16>
    %55 = arith.mulf %52, %54 : vector<64x640xbf16>
    %c3 = arith.constant 3 : index
    %c0_37 = arith.constant 0 : index
    %c0_38 = arith.constant 0 : index
    %56 = vector.load %arg2[%c3, %c0_37, %c0_38] : memref<9x96x64xbf16, #tpu.memory_space<vmem>>, vector<1x96x64xbf16>
    %57 = vector.shape_cast %56 : vector<1x96x64xbf16> to vector<96x64xbf16>
    %cst_39 = arith.constant dense<0.000000e+00> : vector<96x640xf32>
    %58 = tpu.matmul %57, %55, %cst_39 {dimension_numbers = #tpu.dot_dimension_numbers<[1], [0], [0], [1], [0, 0, 1, 1], [], []>} : vector<96x64xbf16>, vector<64x640xbf16>, vector<96x640xf32> -> vector<96x640xf32>
    %59 = arith.addf %51, %58 : vector<96x640xf32>
    %c0_40 = arith.constant 0 : index
    %c128_41 = arith.constant 128 : index
    %60 = vector.load %arg8[%c0_40, %c128_41] : memref<64x896xbf16, #tpu.memory_space<vmem>>, vector<64x640xbf16>
    %c4 = arith.constant 4 : index
    %c0_42 = arith.constant 0 : index
    %c0_43 = arith.constant 0 : index
    %61 = vector.load %arg2[%c4, %c0_42, %c0_43] : memref<9x96x64xbf16, #tpu.memory_space<vmem>>, vector<1x96x64xbf16>
    %62 = vector.shape_cast %61 : vector<1x96x64xbf16> to vector<96x64xbf16>
    %cst_44 = arith.constant dense<0.000000e+00> : vector<96x640xf32>
    %63 = tpu.matmul %62, %60, %cst_44 {dimension_numbers = #tpu.dot_dimension_numbers<[1], [0], [0], [1], [0, 0, 1, 1], [], []>} : vector<96x64xbf16>, vector<64x640xbf16>, vector<96x640xf32> -> vector<96x640xf32>
    %64 = arith.addf %59, %63 : vector<96x640xf32>
    %c0_45 = arith.constant 0 : index
    %c129 = arith.constant 129 : index
    %65 = vector.load %arg8[%c0_45, %c129] : memref<64x896xbf16, #tpu.memory_space<vmem>>, vector<64x640xbf16>
    %c0_46 = arith.constant 0 : index
    %c0_47 = arith.constant 0 : index
    %66 = vector.load %arg6[%c0_46, %c0_47] : memref<1x640xbf16, #tpu.memory_space<vmem>>, vector<1x640xbf16>
    %67 = vector.broadcast %66 : vector<1x640xbf16> to vector<64x640xbf16>
    %68 = arith.mulf %65, %67 : vector<64x640xbf16>
    %c5 = arith.constant 5 : index
    %c0_48 = arith.constant 0 : index
    %c0_49 = arith.constant 0 : index
    %69 = vector.load %arg2[%c5, %c0_48, %c0_49] : memref<9x96x64xbf16, #tpu.memory_space<vmem>>, vector<1x96x64xbf16>
    %70 = vector.shape_cast %69 : vector<1x96x64xbf16> to vector<96x64xbf16>
    %cst_50 = arith.constant dense<0.000000e+00> : vector<96x640xf32>
    %71 = tpu.matmul %70, %68, %cst_50 {dimension_numbers = #tpu.dot_dimension_numbers<[1], [0], [0], [1], [0, 0, 1, 1], [], []>} : vector<96x64xbf16>, vector<64x640xbf16>, vector<96x640xf32> -> vector<96x640xf32>
    %72 = arith.addf %64, %71 : vector<96x640xf32>
    %c0_51 = arith.constant 0 : index
    %c152 = arith.constant 152 : index
    %73 = vector.load %arg8[%c0_51, %c152] : memref<64x896xbf16, #tpu.memory_space<vmem>>, vector<64x640xbf16>
    %c0_52 = arith.constant 0 : index
    %c0_53 = arith.constant 0 : index
    %74 = vector.load %arg5[%c0_52, %c0_53] : memref<1x640xbf16, #tpu.memory_space<vmem>>, vector<1x640xbf16>
    %75 = vector.broadcast %74 : vector<1x640xbf16> to vector<64x640xbf16>
    %76 = arith.mulf %73, %75 : vector<64x640xbf16>
    %c6 = arith.constant 6 : index
    %c0_54 = arith.constant 0 : index
    %c0_55 = arith.constant 0 : index
    %77 = vector.load %arg2[%c6, %c0_54, %c0_55] : memref<9x96x64xbf16, #tpu.memory_space<vmem>>, vector<1x96x64xbf16>
    %78 = vector.shape_cast %77 : vector<1x96x64xbf16> to vector<96x64xbf16>
    %cst_56 = arith.constant dense<0.000000e+00> : vector<96x640xf32>
    %79 = tpu.matmul %78, %76, %cst_56 {dimension_numbers = #tpu.dot_dimension_numbers<[1], [0], [0], [1], [0, 0, 1, 1], [], []>} : vector<96x64xbf16>, vector<64x640xbf16>, vector<96x640xf32> -> vector<96x640xf32>
    %80 = arith.addf %72, %79 : vector<96x640xf32>
    %c0_57 = arith.constant 0 : index
    %c153 = arith.constant 153 : index
    %81 = vector.load %arg8[%c0_57, %c153] : memref<64x896xbf16, #tpu.memory_space<vmem>>, vector<64x640xbf16>
    %c7 = arith.constant 7 : index
    %c0_58 = arith.constant 0 : index
    %c0_59 = arith.constant 0 : index
    %82 = vector.load %arg2[%c7, %c0_58, %c0_59] : memref<9x96x64xbf16, #tpu.memory_space<vmem>>, vector<1x96x64xbf16>
    %83 = vector.shape_cast %82 : vector<1x96x64xbf16> to vector<96x64xbf16>
    %cst_60 = arith.constant dense<0.000000e+00> : vector<96x640xf32>
    %84 = tpu.matmul %83, %81, %cst_60 {dimension_numbers = #tpu.dot_dimension_numbers<[1], [0], [0], [1], [0, 0, 1, 1], [], []>} : vector<96x64xbf16>, vector<64x640xbf16>, vector<96x640xf32> -> vector<96x640xf32>
    %85 = arith.addf %80, %84 : vector<96x640xf32>
    %c0_61 = arith.constant 0 : index
    %c154 = arith.constant 154 : index
    %86 = vector.load %arg8[%c0_61, %c154] : memref<64x896xbf16, #tpu.memory_space<vmem>>, vector<64x640xbf16>
    %c0_62 = arith.constant 0 : index
    %c0_63 = arith.constant 0 : index
    %87 = vector.load %arg6[%c0_62, %c0_63] : memref<1x640xbf16, #tpu.memory_space<vmem>>, vector<1x640xbf16>
    %88 = vector.broadcast %87 : vector<1x640xbf16> to vector<64x640xbf16>
    %89 = arith.mulf %86, %88 : vector<64x640xbf16>
    %c8 = arith.constant 8 : index
    %c0_64 = arith.constant 0 : index
    %c0_65 = arith.constant 0 : index
    %90 = vector.load %arg2[%c8, %c0_64, %c0_65] : memref<9x96x64xbf16, #tpu.memory_space<vmem>>, vector<1x96x64xbf16>
    %91 = vector.shape_cast %90 : vector<1x96x64xbf16> to vector<96x64xbf16>
    %cst_66 = arith.constant dense<0.000000e+00> : vector<96x640xf32>
    %92 = tpu.matmul %91, %89, %cst_66 {dimension_numbers = #tpu.dot_dimension_numbers<[1], [0], [0], [1], [0, 0, 1, 1], [], []>} : vector<96x64xbf16>, vector<64x640xbf16>, vector<96x640xf32> -> vector<96x640xf32>
    %93 = arith.addf %85, %92 : vector<96x640xf32>
    %c0_67 = arith.constant 0 : index
    %c0_68 = arith.constant 0 : index
    %94 = vector.load %arg7[%c0_67, %c0_68] : memref<96x640xf32, #tpu.memory_space<vmem>>, vector<96x640xf32>
    tpu.vector_store %arg7[%c0_67, %c0_68], %93 {strides = array<i32>} : memref<96x640xf32, #tpu.memory_space<vmem>>, vector<96x640xf32>,
    return
  }
}

</mosaic_0001>

<llo_original>
// kernel: forward.1
$region0: #{forward.1}
  #allocation0 [shape = 'u32[]', space=smem, size = 0x4, offset = 0x4, fixed_abs, tag = 'smem constant byte address 0x4 - core index']
  #allocation1 [shape = 'u32[144,128]{1,0:T(1,128)}', space=vmem, size = 0x12000, scoped, tag = 'internal scratch']
  #allocation2 [shape = 'bf16[64,896]{1,0:T(16,128)(2,1)}', space=vmem, size = 0x1c000, scoped, tag = 'scratch operand']
  %s0 = inlined_call_operand.vmem [shape: bf16[288,625], index: 0, kind: input, shape index: {}]
  %s1 = inlined_call_operand.vmem [shape: bf16[64,288], index: 1, kind: input, shape index: {}]
  %s2 = inlined_call_operand.vmem [shape: bf16[9,96,64], index: 2, kind: input, shape index: {}]
  %s3 = inlined_call_operand.vmem [shape: f32[64,1], index: 3, kind: input, shape index: {}]
  %s4 = inlined_call_operand.vmem [shape: f32[64,1], index: 4, kind: input, shape index: {}]
  %s5 = inlined_call_operand.vmem [shape: bf16[1,640], index: 5, kind: input, shape index: {}]
  %s6 = inlined_call_operand.vmem [shape: bf16[1,640], index: 6, kind: input, shape index: {}]
  %s7 = inlined_call_operand.vmem [shape: f32[96,640], index: 7, kind: output, shape index: {}]
  %s8 = sld [smem:[#allocation0]]
  $region38: #{forward.1} parent=0
    _
  %s10 = ssub.s32 1, %s8
  %s11 = scalar_select 0, %s10, %s8
  // Predicated region
  $region2: #{forward.1} parent=0 // pred_check
    _
  $region3: #{forward.1} parent=0 // pred_check_branch
    %13 = sbr.rel (0) target = $region5
  $region4: #{forward.1} parent=0 // pred_region
    _
  $region5: #{forward.1} parent=0 // pred_fallthru
    _
  // Predicated region
  $region6: #{forward.1} parent=0 // pred_check
    _
  $region7: #{forward.1} parent=0 // pred_check_branch
    %15 = sbr.rel (0) target = $region9
  $region8: #{forward.1} parent=0 // pred_region
    _
  $region9: #{forward.1} parent=0 // pred_fallthru
    _
  // Predicated region
  $region10: #{forward.1} parent=0 // pred_check
    _
  $region11: #{forward.1} parent=0 // pred_check_branch
    %17 = sbr.rel (0) target = $region13
  $region12: #{forward.1} parent=0 // pred_region
    _
  $region13: #{forward.1} parent=0 // pred_fallthru
    _
  // Predicated region
  $region14: #{forward.1} parent=0 // pred_check
    _
  $region15: #{forward.1} parent=0 // pred_check_branch
    %19 = sbr.rel (0) target = $region17
  $region16: #{forward.1} parent=0 // pred_region
    _
  $region17: #{forward.1} parent=0 // pred_fallthru
    _
  // Predicated region
  $region18: #{forward.1} parent=0 // pred_check
    _
  $region19: #{forward.1} parent=0 // pred_check_branch
    %21 = sbr.rel (0) target = $region21
  $region20: #{forward.1} parent=0 // pred_region
    _
  $region21: #{forward.1} parent=0 // pred_fallthru
    _
  // Predicated region
  $region22: #{forward.1} parent=0 // pred_check
    _
  $region23: #{forward.1} parent=0 // pred_check_branch
    %23 = sbr.rel (0) target = $region25
  $region24: #{forward.1} parent=0 // pred_region
    _
  $region25: #{forward.1} parent=0 // pred_fallthru
    _
  // Predicated region
  $region26: #{forward.1} parent=0 // pred_check
    _
  $region27: #{forward.1} parent=0 // pred_check_branch
    %25 = sbr.rel (0) target = $region29
  $region28: #{forward.1} parent=0 // pred_region
    _
  $region29: #{forward.1} parent=0 // pred_fallthru
    _
  %v27 = vld [vmem:[%s1] sm:$0xff]
  %v28 = vld [vmem:[%s1 + $0x8] sm:$0xf]
  %v29 = vld [vmem:[%s1 + $0xc] sm:$0xff]
  %v30 = vld [vmem:[%s1 + $0x14] sm:$0xf]
  %v31 = vld [vmem:[%s1 + $0x18] sm:$0xff]
  %v32 = vld [vmem:[%s1 + $0x20] sm:$0xf]
  %v33 = vld [vmem:[%s1 + $0x24] sm:$0xff]
  %v34 = vld [vmem:[%s1 + $0x2c] sm:$0xf]
  %v35 = vld [vmem:[%s1 + $0x30] sm:$0xff]
  %v36 = vld [vmem:[%s1 + $0x38] sm:$0xf]
  %v37 = vld [vmem:[%s1 + $0x3c] sm:$0xff]
  %v38 = vld [vmem:[%s1 + $0x44] sm:$0xf]
  %v39 = vld [vmem:[%s1 + $0x48] sm:$0xff]
  %v40 = vld [vmem:[%s1 + $0x50] sm:$0xf]
  %v41 = vld [vmem:[%s1 + $0x54] sm:$0xff]
  %v42 = vld [vmem:[%s1 + $0x5c] sm:$0xf]
  %v43 = vld [vmem:[%s0] sm:$0xff]
  %v44 = vld [vmem:[%s0 + $0x8] sm:$0xff]
  %v45 = vld [vmem:[%s0 + $0x10] sm:$0xf]
  %v46 = vld [vmem:[%s0 + $0x14] sm:$0xff]
  %v47 = vld [vmem:[%s0 + $0x1c] sm:$0xff]
  %v48 = vld [vmem:[%s0 + $0x24] sm:$0xf]
  %v49 = vld [vmem:[%s0 + $0x28] sm:$0xff]
  %v50 = vld [vmem:[%s0 + $0x30] sm:$0xff]
  %v51 = vld [vmem:[%s0 + $0x38] sm:$0xf]
  %v52 = vld [vmem:[%s0 + $0x3c] sm:$0xff]
  %v53 = vld [vmem:[%s0 + $0x44] sm:$0xff]
  %v54 = vld [vmem:[%s0 + $0x4c] sm:$0xf]
  %v55 = vld [vmem:[%s0 + $0x50] sm:$0xff]
  %v56 = vld [vmem:[%s0 + $0x58] sm:$0xff]
  %v57 = vld [vmem:[%s0 + $0x60] sm:$0xf]
  %v58 = vld [vmem:[%s0 + $0x64] sm:$0xff]
  %v59 = vld [vmem:[%s0 + $0x6c] sm:$0xff]
  %v60 = vld [vmem:[%s0 + $0x74] sm:$0xf]
  %v61 = vld [vmem:[%s0 + $0x78] sm:$0xff]
  %v62 = vld [vmem:[%s0 + $0x80] sm:$0xff]
  %v63 = vld [vmem:[%s0 + $0x88] sm:$0xf]
  %v64 = vld [vmem:[%s0 + $0x8c] sm:$0xff]
  %v65 = vld [vmem:[%s0 + $0x94] sm:$0xff]
  %v66 = vld [vmem:[%s0 + $0x9c] sm:$0xf]
  %v67 = vld [vmem:[%s0 + $0xa0] sm:$0xff]
  %v68 = vld [vmem:[%s0 + $0xa8] sm:$0xff]
  %v69 = vld [vmem:[%s0 + $0xb0] sm:$0xf]
  %v70 = vld [vmem:[%s0 + $0xb4] sm:$0xff]
  %v71 = vld [vmem:[%s0 + $0xbc] sm:$0xff]
  %v72 = vld [vmem:[%s0 + $0xc4] sm:$0xf]
  %v73 = vld [vmem:[%s0 + $0xc8] sm:$0xff]
  %v74 = vld [vmem:[%s0 + $0xd0] sm:$0xff]
  %v75 = vld [vmem:[%s0 + $0xd8] sm:$0xf]
  %v76 = vld [vmem:[%s0 + $0xdc] sm:$0xff]
  %v77 = vld [vmem:[%s0 + $0xe4] sm:$0xff]
  %v78 = vld [vmem:[%s0 + $0xec] sm:$0xf]
  %v79 = vld [vmem:[%s0 + $0xf0] sm:$0xff]
  %v80 = vld [vmem:[%s0 + $0xf8] sm:$0xff]
  %v81 = vld [vmem:[%s0 + $0x100] sm:$0xf]
  %v82 = vld [vmem:[%s0 + $0x104] sm:$0xff]
  %v83 = vld [vmem:[%s0 + $0x10c] sm:$0xff]
  %v84 = vld [vmem:[%s0 + $0x114] sm:$0xf]
  %v85 = vld [vmem:[%s0 + $0x118] sm:$0xff]
  %v86 = vld [vmem:[%s0 + $0x120] sm:$0xff]
  %v87 = vld [vmem:[%s0 + $0x128] sm:$0xf]
  %v88 = vld [vmem:[%s0 + $0x12c] sm:$0xff]
  %v89 = vld [vmem:[%s0 + $0x134] sm:$0xff]
  %v90 = vld [vmem:[%s0 + $0x13c] sm:$0xf]
  %v91 = vld [vmem:[%s0 + $0x140] sm:$0xff]
  %v92 = vld [vmem:[%s0 + $0x148] sm:$0xff]
  %v93 = vld [vmem:[%s0 + $0x150] sm:$0xf]
  %v94 = vld [vmem:[%s0 + $0x154] sm:$0xff]
  %v95 = vld [vmem:[%s0 + $0x15c] sm:$0xff]
  %v96 = vld [vmem:[%s0 + $0x164] sm:$0xf]
  %v97 = vld [vmem:[%s0 + $0x168] sm:$0xff]
  %v98 = vld [vmem:[%s0 + $0x170] sm:$0xff]
  %v99 = vld [vmem:[%s0 + $0x178] sm:$0xf]
  %v100 = vld [vmem:[%s0 + $0x17c] sm:$0xff]
  %v101 = vld [vmem:[%s0 + $0x184] sm:$0xff]
  %v102 = vld [vmem:[%s0 + $0x18c] sm:$0xf]
  %v103 = vld [vmem:[%s0 + $0x190] sm:$0xff]
  %v104 = vld [vmem:[%s0 + $0x198] sm:$0xff]
  %v105 = vld [vmem:[%s0 + $0x1a0] sm:$0xf]
  %v106 = vld [vmem:[%s0 + $0x1a4] sm:$0xff]
  %v107 = vld [vmem:[%s0 + $0x1ac] sm:$0xff]
  %v108 = vld [vmem:[%s0 + $0x1b4] sm:$0xf]
  %v109 = vld [vmem:[%s0 + $0x1b8] sm:$0xff]
  %v110 = vld [vmem:[%s0 + $0x1c0] sm:$0xff]
  %v111 = vld [vmem:[%s0 + $0x1c8] sm:$0xf]
  %v112 = vld [vmem:[%s0 + $0x1cc] sm:$0xff]
  %v113 = vld [vmem:[%s0 + $0x1d4] sm:$0xff]
  %v114 = vld [vmem:[%s0 + $0x1dc] sm:$0xf]
  %v115 = vld [vmem:[%s0 + $0x1e0] sm:$0xff]
  %v116 = vld [vmem:[%s0 + $0x1e8] sm:$0xff]
  %v117 = vld [vmem:[%s0 + $0x1f0] sm:$0xf]
  %v118 = vld [vmem:[%s0 + $0x1f4] sm:$0xff]
  %v119 = vld [vmem:[%s0 + $0x1fc] sm:$0xff]
  %v120 = vld [vmem:[%s0 + $0x204] sm:$0xf]
  %v121 = vld [vmem:[%s0 + $0x208] sm:$0xff]
  %v122 = vld [vmem:[%s0 + $0x210] sm:$0xff]
  %v123 = vld [vmem:[%s0 + $0x218] sm:$0xf]
  %v124 = vld [vmem:[%s0 + $0x21c] sm:$0xff]
  %v125 = vld [vmem:[%s0 + $0x224] sm:$0xff]
  %v126 = vld [vmem:[%s0 + $0x22c] sm:$0xf]
  %v127 = vld [vmem:[%s0 + $0x230] sm:$0xff]
  %v128 = vld [vmem:[%s0 + $0x238] sm:$0xff]
  %v129 = vld [vmem:[%s0 + $0x240] sm:$0xf]
  %v130 = vld [vmem:[%s0 + $0x244] sm:$0xff]
  %v131 = vld [vmem:[%s0 + $0x24c] sm:$0xff]
  %v132 = vld [vmem:[%s0 + $0x254] sm:$0xf]
  %v133 = vld [vmem:[%s0 + $0x258] sm:$0xff]
  %v134 = vld [vmem:[%s0 + $0x260] sm:$0xff]
  %v135 = vld [vmem:[%s0 + $0x268] sm:$0xf]
  %v136 = vld [vmem:[%s0 + $0x26c] sm:$0xff]
  %v137 = vld [vmem:[%s0 + $0x274] sm:$0xff]
  %v138 = vld [vmem:[%s0 + $0x27c] sm:$0xf]
  %v139 = vld [vmem:[%s0 + $0x280] sm:$0xff]
  %v140 = vld [vmem:[%s0 + $0x288] sm:$0xff]
  %v141 = vld [vmem:[%s0 + $0x290] sm:$0xf]
  %v142 = vld [vmem:[%s0 + $0x294] sm:$0xff]
  %v143 = vld [vmem:[%s0 + $0x29c] sm:$0xff]
  %v144 = vld [vmem:[%s0 + $0x2a4] sm:$0xf]
  %v145 = vld [vmem:[%s0 + $0x2a8] sm:$0xff]
  %v146 = vld [vmem:[%s0 + $0x2b0] sm:$0xff]
  %v147 = vld [vmem:[%s0 + $0x2b8] sm:$0xf]
  %v148 = vld [vmem:[%s0 + $0x2bc] sm:$0xff]
  %v149 = vld [vmem:[%s0 + $0x2c4] sm:$0xff]
  %v150 = vld [vmem:[%s0 + $0x2cc] sm:$0xf]
  %v167 = vunpack.c.l.b16 %v27
  %v168 = vunpack.c.h.b16 %v27
  %v169 = vunpack.c.l.b16 %v28
  %v170 = vunpack.c.l.b16 %v29
  %v171 = vunpack.c.h.b16 %v29
  %v172 = vunpack.c.l.b16 %v30
  %v173 = vunpack.c.l.b16 %v31
  %v174 = vunpack.c.h.b16 %v31
  %v175 = vunpack.c.l.b16 %v32
  %v176 = vunpack.c.l.b16 %v33
  %v177 = vunpack.c.h.b16 %v33
  %v178 = vunpack.c.l.b16 %v34
  %v179 = vunpack.c.l.b16 %v35
  %v180 = vunpack.c.h.b16 %v35
  %v181 = vunpack.c.l.b16 %v36
  %v182 = vunpack.c.l.b16 %v37
  %v183 = vunpack.c.h.b16 %v37
  %v184 = vunpack.c.l.b16 %v38
  %v185 = vunpack.c.l.b16 %v39
  %v186 = vunpack.c.h.b16 %v39
  %v187 = vunpack.c.l.b16 %v40
  %v188 = vunpack.c.l.b16 %v41
  %v189 = vunpack.c.h.b16 %v41
  %v190 = vunpack.c.l.b16 %v42
  %v191 = vpack.c.b16 %v170, %v167
  %v192 = vpack.c.b16 %v171, %v168
  %v193 = vpack.c.b16 %v172, %v169
  %v194 = vpack.c.b16 %v176, %v173
  %v195 = vpack.c.b16 %v177, %v174
  %v196 = vpack.c.b16 %v178, %v175
  %v197 = vpack.c.b16 %v182, %v179
  %v198 = vpack.c.b16 %v183, %v180
  %v199 = vpack.c.b16 %v184, %v181
  %v200 = vpack.c.b16 %v188, %v185
  %v201 = vpack.c.b16 %v189, %v186
  %v202 = vpack.c.b16 %v190, %v187
  %v319 = vunpack.c.l.b16 %v43
  %v320 = vunpack.c.h.b16 %v43
  %v321 = vunpack.c.l.b16 %v44
  %v322 = vunpack.c.h.b16 %v44
  %v323 = vunpack.c.l.b16 %v45
  %v324 = vunpack.c.l.b16 %v46
  %v325 = vunpack.c.h.b16 %v46
  %v326 = vunpack.c.l.b16 %v47
  %v327 = vunpack.c.h.b16 %v47
  %v328 = vunpack.c.l.b16 %v48
  %v329 = vunpack.c.l.b16 %v49
  %v330 = vunpack.c.h.b16 %v49
  %v331 = vunpack.c.l.b16 %v50
  %v332 = vunpack.c.h.b16 %v50
  %v333 = vunpack.c.l.b16 %v51
  %v334 = vunpack.c.l.b16 %v52
  %v335 = vunpack.c.h.b16 %v52
  %v336 = vunpack.c.l.b16 %v53
  %v337 = vunpack.c.h.b16 %v53
  %v338 = vunpack.c.l.b16 %v54
  %v339 = vunpack.c.l.b16 %v55
  %v340 = vunpack.c.h.b16 %v55
  %v341 = vunpack.c.l.b16 %v56
  %v342 = vunpack.c.h.b16 %v56
  %v343 = vunpack.c.l.b16 %v57
  %v344 = vunpack.c.l.b16 %v58
  %v345 = vunpack.c.h.b16 %v58
  %v346 = vunpack.c.l.b16 %v59
  %v347 = vunpack.c.h.b16 %v59
  %v348 = vunpack.c.l.b16 %v60
  %v349 = vunpack.c.l.b16 %v61
  %v350 = vunpack.c.h.b16 %v61
  %v351 = vunpack.c.l.b16 %v62
  %v352 = vunpack.c.h.b16 %v62
  %v353 = vunpack.c.l.b16 %v63
  %v354 = vunpack.c.l.b16 %v64
  %v355 = vunpack.c.h.b16 %v64
  %v356 = vunpack.c.l.b16 %v65
  %v357 = vunpack.c.h.b16 %v65
  %v358 = vunpack.c.l.b16 %v66
  %v359 = vunpack.c.l.b16 %v67
  %v360 = vunpack.c.h.b16 %v67
  %v361 = vunpack.c.l.b16 %v68
  %v362 = vunpack.c.h.b16 %v68
  %v363 = vunpack.c.l.b16 %v69
  %v364 = vunpack.c.l.b16 %v70
  %v365 = vunpack.c.h.b16 %v70
  %v366 = vunpack.c.l.b16 %v71
  %v367 = vunpack.c.h.b16 %v71
  %v368 = vunpack.c.l.b16 %v72
  %v369 = vunpack.c.l.b16 %v73
  %v370 = vunpack.c.h.b16 %v73
  %v371 = vunpack.c.l.b16 %v74
  %v372 = vunpack.c.h.b16 %v74
  %v373 = vunpack.c.l.b16 %v75
  %v374 = vunpack.c.l.b16 %v76
  %v375 = vunpack.c.h.b16 %v76
  %v376 = vunpack.c.l.b16 %v77
  %v377 = vunpack.c.h.b16 %v77
  %v378 = vunpack.c.l.b16 %v78
  %v379 = vunpack.c.l.b16 %v79
  %v380 = vunpack.c.h.b16 %v79
  %v381 = vunpack.c.l.b16 %v80
  %v382 = vunpack.c.h.b16 %v80
  %v383 = vunpack.c.l.b16 %v81
  %v384 = vunpack.c.l.b16 %v82
  %v385 = vunpack.c.h.b16 %v82
  %v386 = vunpack.c.l.b16 %v83
  %v387 = vunpack.c.h.b16 %v83
  %v388 = vunpack.c.l.b16 %v84
  %v389 = vunpack.c.l.b16 %v85
  %v390 = vunpack.c.h.b16 %v85
  %v391 = vunpack.c.l.b16 %v86
  %v392 = vunpack.c.h.b16 %v86
  %v393 = vunpack.c.l.b16 %v87
  %v394 = vunpack.c.l.b16 %v88
  %v395 = vunpack.c.h.b16 %v88
  %v396 = vunpack.c.l.b16 %v89
  %v397 = vunpack.c.h.b16 %v89
  %v398 = vunpack.c.l.b16 %v90
  %v399 = vunpack.c.l.b16 %v91
  %v400 = vunpack.c.h.b16 %v91
  %v401 = vunpack.c.l.b16 %v92
  %v402 = vunpack.c.h.b16 %v92
  %v403 = vunpack.c.l.b16 %v93
  %v404 = vunpack.c.l.b16 %v94
  %v405 = vunpack.c.h.b16 %v94
  %v406 = vunpack.c.l.b16 %v95
  %v407 = vunpack.c.h.b16 %v95
  %v408 = vunpack.c.l.b16 %v96
  %v409 = vunpack.c.l.b16 %v97
  %v410 = vunpack.c.h.b16 %v97
  %v411 = vunpack.c.l.b16 %v98
  %v412 = vunpack.c.h.b16 %v98
  %v413 = vunpack.c.l.b16 %v99
  %v414 = vunpack.c.l.b16 %v100
  %v415 = vunpack.c.h.b16 %v100
  %v416 = vunpack.c.l.b16 %v101
  %v417 = vunpack.c.h.b16 %v101
  %v418 = vunpack.c.l.b16 %v102
  %v419 = vunpack.c.l.b16 %v103
  %v420 = vunpack.c.h.b16 %v103
  %v421 = vunpack.c.l.b16 %v104
  %v422 = vunpack.c.h.b16 %v104
  %v423 = vunpack.c.l.b16 %v105
  %v424 = vunpack.c.l.b16 %v106
  %v425 = vunpack.c.h.b16 %v106
  %v426 = vunpack.c.l.b16 %v107
  %v427 = vunpack.c.h.b16 %v107
  %v428 = vunpack.c.l.b16 %v108
  %v429 = vunpack.c.l.b16 %v109
  %v430 = vunpack.c.h.b16 %v109
  %v431 = vunpack.c.l.b16 %v110
  %v432 = vunpack.c.h.b16 %v110
  %v433 = vunpack.c.l.b16 %v111
  %v434 = vunpack.c.l.b16 %v112
  %v435 = vunpack.c.h.b16 %v112
  %v436 = vunpack.c.l.b16 %v113
  %v437 = vunpack.c.h.b16 %v113
  %v438 = vunpack.c.l.b16 %v114
  %v439 = vunpack.c.l.b16 %v115
  %v440 = vunpack.c.h.b16 %v115
  %v441 = vunpack.c.l.b16 %v116
  %v442 = vunpack.c.h.b16 %v116
  %v443 = vunpack.c.l.b16 %v117
  %v444 = vunpack.c.l.b16 %v118
  %v445 = vunpack.c.h.b16 %v118
  %v446 = vunpack.c.l.b16 %v119
  %v447 = vunpack.c.h.b16 %v119
  %v448 = vunpack.c.l.b16 %v120
  %v449 = vunpack.c.l.b16 %v121
  %v450 = vunpack.c.h.b16 %v121
  %v451 = vunpack.c.l.b16 %v122
  %v452 = vunpack.c.h.b16 %v122
  %v453 = vunpack.c.l.b16 %v123
  %v454 = vunpack.c.l.b16 %v124
  %v455 = vunpack.c.h.b16 %v124
  %v456 = vunpack.c.l.b16 %v125
  %v457 = vunpack.c.h.b16 %v125
  %v458 = vunpack.c.l.b16 %v126
  %v459 = vunpack.c.l.b16 %v127
  %v460 = vunpack.c.h.b16 %v127
  %v461 = vunpack.c.l.b16 %v128
  %v462 = vunpack.c.h.b16 %v128
  %v463 = vunpack.c.l.b16 %v129
  %v464 = vunpack.c.l.b16 %v130
  %v465 = vunpack.c.h.b16 %v130
  %v466 = vunpack.c.l.b16 %v131
  %v467 = vunpack.c.h.b16 %v131
  %v468 = vunpack.c.l.b16 %v132
  %v469 = vunpack.c.l.b16 %v133
  %v470 = vunpack.c.h.b16 %v133
  %v471 = vunpack.c.l.b16 %v134
  %v472 = vunpack.c.h.b16 %v134
  %v473 = vunpack.c.l.b16 %v135
  %v474 = vunpack.c.l.b16 %v136
  %v475 = vunpack.c.h.b16 %v136
  %v476 = vunpack.c.l.b16 %v137
  %v477 = vunpack.c.h.b16 %v137
  %v478 = vunpack.c.l.b16 %v138
  %v479 = vunpack.c.l.b16 %v139
  %v480 = vunpack.c.h.b16 %v139
  %v481 = vunpack.c.l.b16 %v140
  %v482 = vunpack.c.h.b16 %v140
  %v483 = vunpack.c.l.b16 %v141
  %v484 = vunpack.c.l.b16 %v142
  %v485 = vunpack.c.h.b16 %v142
  %v486 = vunpack.c.l.b16 %v143
  %v487 = vunpack.c.h.b16 %v143
  %v488 = vunpack.c.l.b16 %v144
  %v489 = vunpack.c.l.b16 %v145
  %v490 = vunpack.c.h.b16 %v145
  %v491 = vunpack.c.l.b16 %v146
  %v492 = vunpack.c.h.b16 %v146
  %v493 = vunpack.c.l.b16 %v147
  %v494 = vunpack.c.l.b16 %v148
  %v495 = vunpack.c.h.b16 %v148
  %v496 = vunpack.c.l.b16 %v149
  %v497 = vunpack.c.h.b16 %v149
  %v498 = vunpack.c.l.b16 %v150
  %v499 = vpack.c.b16 %v324, %v319
  %v500 = vpack.c.b16 %v325, %v320
  %v501 = vpack.c.b16 %v326, %v321
  %v502 = vpack.c.b16 %v327, %v322
  %v503 = vpack.c.b16 %v328, %v323
  %v504 = vpack.c.b16 %v334, %v329
  %v505 = vpack.c.b16 %v335, %v330
  %v506 = vpack.c.b16 %v336, %v331
  %v507 = vpack.c.b16 %v337, %v332
  %v508 = vpack.c.b16 %v338, %v333
  %v509 = vpack.c.b16 %v344, %v339
  %v510 = vpack.c.b16 %v345, %v340
  %v511 = vpack.c.b16 %v346, %v341
  %v512 = vpack.c.b16 %v347, %v342
  %v513 = vpack.c.b16 %v348, %v343
  %v514 = vpack.c.b16 %v354, %v349
  %v515 = vpack.c.b16 %v355, %v350
  %v516 = vpack.c.b16 %v356, %v351
  %v517 = vpack.c.b16 %v357, %v352
  %v518 = vpack.c.b16 %v358, %v353
  %v519 = vpack.c.b16 %v364, %v359
  %v520 = vpack.c.b16 %v365, %v360
  %v521 = vpack.c.b16 %v366, %v361
  %v522 = vpack.c.b16 %v367, %v362
  %v523 = vpack.c.b16 %v368, %v363
  %v524 = vpack.c.b16 %v374, %v369
  %v525 = vpack.c.b16 %v375, %v370
  %v526 = vpack.c.b16 %v376, %v371
  %v527 = vpack.c.b16 %v377, %v372
  %v528 = vpack.c.b16 %v378, %v373
  %v529 = vpack.c.b16 %v384, %v379
  %v530 = vpack.c.b16 %v385, %v380
  %v531 = vpack.c.b16 %v386, %v381
  %v532 = vpack.c.b16 %v387, %v382
  %v533 = vpack.c.b16 %v388, %v383
  %v534 = vpack.c.b16 %v394, %v389
  %v535 = vpack.c.b16 %v395, %v390
  %v536 = vpack.c.b16 %v396, %v391
  %v537 = vpack.c.b16 %v397, %v392
  %v538 = vpack.c.b16 %v398, %v393
  %v539 = vpack.c.b16 %v404, %v399
  %v540 = vpack.c.b16 %v405, %v400
  %v541 = vpack.c.b16 %v406, %v401
  %v542 = vpack.c.b16 %v407, %v402
  %v543 = vpack.c.b16 %v408, %v403
  %v544 = vpack.c.b16 %v414, %v409
  %v545 = vpack.c.b16 %v415, %v410
  %v546 = vpack.c.b16 %v416, %v411
  %v547 = vpack.c.b16 %v417, %v412
  %v548 = vpack.c.b16 %v418, %v413
  %v549 = vpack.c.b16 %v424, %v419
  %v550 = vpack.c.b16 %v425, %v420
  %v551 = vpack.c.b16 %v426, %v421
  %v552 = vpack.c.b16 %v427, %v422
  %v553 = vpack.c.b16 %v428, %v423
  %v554 = vpack.c.b16 %v434, %v429
  %v555 = vpack.c.b16 %v435, %v430
  %v556 = vpack.c.b16 %v436, %v431
  %v557 = vpack.c.b16 %v437, %v432
  %v558 = vpack.c.b16 %v438, %v433
  %v559 = vpack.c.b16 %v444, %v439
  %v560 = vpack.c.b16 %v445, %v440
  %v561 = vpack.c.b16 %v446, %v441
  %v562 = vpack.c.b16 %v447, %v442
  %v563 = vpack.c.b16 %v448, %v443
  %v564 = vpack.c.b16 %v454, %v449
  %v565 = vpack.c.b16 %v455, %v450
  %v566 = vpack.c.b16 %v456, %v451
  %v567 = vpack.c.b16 %v457, %v452
  %v568 = vpack.c.b16 %v458, %v453
  %v569 = vpack.c.b16 %v464, %v459
  %v570 = vpack.c.b16 %v465, %v460
  %v571 = vpack.c.b16 %v466, %v461
  %v572 = vpack.c.b16 %v467, %v462
  %v573 = vpack.c.b16 %v468, %v463
  %v574 = vpack.c.b16 %v474, %v469
  %v575 = vpack.c.b16 %v475, %v470
  %v576 = vpack.c.b16 %v476, %v471
  %v577 = vpack.c.b16 %v477, %v472
  %v578 = vpack.c.b16 %v478, %v473
  %v579 = vpack.c.b16 %v484, %v479
  %v580 = vpack.c.b16 %v485, %v480
  %v581 = vpack.c.b16 %v486, %v481
  %v582 = vpack.c.b16 %v487, %v482
  %v583 = vpack.c.b16 %v488, %v483
  %v584 = vpack.c.b16 %v494, %v489
  %v585 = vpack.c.b16 %v495, %v490
  %v586 = vpack.c.b16 %v496, %v491
  %v587 = vpack.c.b16 %v497, %v492
  %v588 = vpack.c.b16 %v498, %v493
  %vm679 = vcmask 261120
  %v681 = vsel %vm679, %v193, 0
  %v684 = vsel %vm679, %v196, 0
  %v687 = vsel %vm679, %v199, 0
  %v690 = vsel %vm679, %v202, 0
  %692 = vmatprep.subr.bf16.mxu0 %v500
  %693 = vmatpush1.bf16.msra.mxu0 %v499
  %694 = vmatprep.subr.bf16.mxu0 %v505
  %695 = vmatpush1.bf16.msra.mxu0 %v504
  %696 = vmatprep.subr.bf16.mxu0 %v510
  %697 = vmatpush1.bf16.msra.mxu0 %v509
  %698 = vmatprep.subr.bf16.mxu0 %v515
  %699 = vmatpush1.bf16.msra.mxu0 %v514
  %700 = vmatprep.subr.bf16.mxu0 %v520
  %701 = vmatpush1.bf16.msra.mxu0 %v519
  %702 = vmatprep.subr.bf16.mxu0 %v525
  %703 = vmatpush1.bf16.msra.mxu0 %v524
  %704 = vmatprep.subr.bf16.mxu0 %v530
  %705 = vmatpush1.bf16.msra.mxu0 %v529
  %706 = vmatprep.subr.bf16.mxu0 %v535
  %707 = vmatpush1.bf16.msra.mxu0 %v534
  %708 = vmatprep.subr.bf16.mxu0 %v540
  %709 = vmatpush1.bf16.msra.mxu0 %v539
  %710 = vmatprep.subr.bf16.mxu0 %v545
  %711 = vmatpush1.bf16.msra.mxu0 %v544
  %712 = vmatprep.subr.bf16.mxu0 %v550
  %713 = vmatpush1.bf16.msra.mxu0 %v549
  %714 = vmatprep.subr.bf16.mxu0 %v555
  %715 = vmatpush1.bf16.msra.mxu0 %v554
  %716 = vmatprep.subr.bf16.mxu0 %v560
  %717 = vmatpush1.bf16.msra.mxu0 %v559
  %718 = vmatprep.subr.bf16.mxu0 %v565
  %719 = vmatpush1.bf16.msra.mxu0 %v564
  %720 = vmatprep.subr.bf16.mxu0 %v570
  %721 = vmatpush1.bf16.msra.mxu0 %v569
  %722 = vmatprep.subr.bf16.mxu0 %v575
  %723 = vmatpush1.bf16.msra.mxu0 %v574
  %724 = vmatprep.mubr.bf16.mxu0 %v192
  %725 = vmatmul.mubr.bf16.gmra.mrb[0].mxu0 %v191
  %v726 = vpop.f32.mrb[0].mxu0
  %v727 = vadd.f32 0.0, %v726
  %v728 = vpop.f32.mrb[0].mxu0
  %v729 = vadd.f32 0.0, %v728
  %v730 = vpop.f32.mrb[0].mxu0
  %v731 = vadd.f32 0.0, %v730
  %v732 = vpop.f32.mrb[0].mxu0
  %v733 = vadd.f32 0.0, %v732
  %734 = vmatprep.mubr.bf16.mxu0 %v195
  %735 = vmatmul.mubr.bf16.gmra.mrb[0].mxu0 %v194
  %v736 = vpop.f32.mrb[0].mxu0
  %v737 = vadd.f32 0.0, %v736
  %v738 = vpop.f32.mrb[0].mxu0
  %v739 = vadd.f32 0.0, %v738
  %v740 = vpop.f32.mrb[0].mxu0
  %v741 = vadd.f32 0.0, %v740
  %v742 = vpop.f32.mrb[0].mxu0
  %v743 = vadd.f32 0.0, %v742
  %744 = vmatprep.mubr.bf16.mxu0 %v198
  %745 = vmatmul.mubr.bf16.gmra.mrb[0].mxu0 %v197
  %v746 = vpop.f32.mrb[0].mxu0
  %v747 = vadd.f32 0.0, %v746
  %v748 = vpop.f32.mrb[0].mxu0
  %v749 = vadd.f32 0.0, %v748
  %v750 = vpop.f32.mrb[0].mxu0
  %v751 = vadd.f32 0.0, %v750
  %v752 = vpop.f32.mrb[0].mxu0
  %v753 = vadd.f32 0.0, %v752
  %754 = vmatprep.mubr.bf16.mxu0 %v201
  %755 = vmatmul.mubr.bf16.gmra.mrb[0].mxu0 %v200
  %v756 = vpop.f32.mrb[0].mxu0
  %v757 = vadd.f32 0.0, %v756
  %v758 = vpop.f32.mrb[0].mxu0
  %v759 = vadd.f32 0.0, %v758
  %v760 = vpop.f32.mrb[0].mxu0
  %v761 = vadd.f32 0.0, %v760
  %v762 = vpop.f32.mrb[0].mxu0
  %v763 = vadd.f32 0.0, %v762
  %764 = vdwg.mxu0
  %765 = vmatprep.subr.bf16.mxu0 %v580
  %766 = vmatpush1.bf16.msra.mxu0 %v579
  %767 = vmatprep.subr.bf16.mxu0 %v585
  %768 = vmatpush1.bf16.msra.mxu0 %v584
  %769 = vmatprep.subr.bf16.mxu0 0
  %770 = vmatpush1.bf16.msra.mxu0 0
  %771 = vmatprep.subr.bf16.mxu0 0
  %772 = vmatpush1.bf16.msra.mxu0 0
  %773 = vmatprep.subr.bf16.mxu0 0
  %774 = vmatpush1.bf16.msra.mxu0 0
  %775 = vmatprep.subr.bf16.mxu0 0
  %776 = vmatpush1.bf16.msra.mxu0 0
  %777 = vmatprep.subr.bf16.mxu0 0
  %778 = vmatpush1.bf16.msra.mxu0 0
  %779 = vmatprep.subr.bf16.mxu0 0
  %780 = vmatpush1.bf16.msra.mxu0 0
  %781 = vmatprep.subr.bf16.mxu0 0
  %782 = vmatpush1.bf16.msra.mxu0 0
  %783 = vmatprep.subr.bf16.mxu0 0
  %784 = vmatpush1.bf16.msra.mxu0 0
  %785 = vmatprep.subr.bf16.mxu0 0
  %786 = vmatpush1.bf16.msra.mxu0 0
  %787 = vmatprep.subr.bf16.mxu0 0
  %788 = vmatpush1.bf16.msra.mxu0 0
  %789 = vmatprep.subr.bf16.mxu0 0
  %790 = vmatpush1.bf16.msra.mxu0 0
  %791 = vmatprep.subr.bf16.mxu0 0
  %792 = vmatpush1.bf16.msra.mxu0 0
  %793 = vmatprep.subr.bf16.mxu0 0
  %794 = vmatpush1.bf16.msra.mxu0 0
  %795 = vmatprep.subr.bf16.mxu0 0
  %796 = vmatpush1.bf16.msra.mxu0 0
  %797 = vmatprep.mubr.bf16.mxu0 0
  %798 = vmatmul.mubr.bf16.gmra.mrb[0].mxu0 %v681
  %v799 = vpop.f32.mrb[0].mxu0
  %v800 = vadd.f32 %v727, %v799
  %v801 = vpop.f32.mrb[0].mxu0
  %v802 = vadd.f32 %v729, %v801
  %v803 = vpop.f32.mrb[0].mxu0
  %v804 = vadd.f32 %v731, %v803
  %v805 = vpop.f32.mrb[0].mxu0
  %v806 = vadd.f32 %v733, %v805
  %807 = vmatprep.mubr.bf16.mxu0 0
  %808 = vmatmul.mubr.bf16.gmra.mrb[0].mxu0 %v684
  %v809 = vpop.f32.mrb[0].mxu0
  %v810 = vadd.f32 %v737, %v809
  %v811 = vpop.f32.mrb[0].mxu0
  %v812 = vadd.f32 %v739, %v811
  %v813 = vpop.f32.mrb[0].mxu0
  %v814 = vadd.f32 %v741, %v813
  %v815 = vpop.f32.mrb[0].mxu0
  %v816 = vadd.f32 %v743, %v815
  %817 = vmatprep.mubr.bf16.mxu0 0
  %818 = vmatmul.mubr.bf16.gmra.mrb[0].mxu0 %v687
  %v819 = vpop.f32.mrb[0].mxu0
  %v820 = vadd.f32 %v747, %v819
  %v821 = vpop.f32.mrb[0].mxu0
  %v822 = vadd.f32 %v749, %v821
  %v823 = vpop.f32.mrb[0].mxu0
  %v824 = vadd.f32 %v751, %v823
  %v825 = vpop.f32.mrb[0].mxu0
  %v826 = vadd.f32 %v753, %v825
  %827 = vmatprep.mubr.bf16.mxu0 0
  %828 = vmatmul.mubr.bf16.gmra.mrb[0].mxu0 %v690
  %v829 = vpop.f32.mrb[0].mxu0
  %v830 = vadd.f32 %v757, %v829
  %v831 = vpop.f32.mrb[0].mxu0
  %v832 = vadd.f32 %v759, %v831
  %v833 = vpop.f32.mrb[0].mxu0
  %v834 = vadd.f32 %v761, %v833
  %v835 = vpop.f32.mrb[0].mxu0
  %v836 = vadd.f32 %v763, %v835
  %837 = vdwg.mxu0
  %838 = vmatprep.subr.bf16.mxu0 %v502
  %839 = vmatpush1.bf16.msra.mxu0 %v501
  %840 = vmatprep.subr.bf16.mxu0 %v507
  %841 = vmatpush1.bf16.msra.mxu0 %v506
  %842 = vmatprep.subr.bf16.mxu0 %v512
  %843 = vmatpush1.bf16.msra.mxu0 %v511
  %844 = vmatprep.subr.bf16.mxu0 %v517
  %845 = vmatpush1.bf16.msra.mxu0 %v516
  %846 = vmatprep.subr.bf16.mxu0 %v522
  %847 = vmatpush1.bf16.msra.mxu0 %v521
  %848 = vmatprep.subr.bf16.mxu0 %v527
  %849 = vmatpush1.bf16.msra.mxu0 %v526
  %850 = vmatprep.subr.bf16.mxu0 %v532
  %851 = vmatpush1.bf16.msra.mxu0 %v531
  %852 = vmatprep.subr.bf16.mxu0 %v537
  %853 = vmatpush1.bf16.msra.mxu0 %v536
  %854 = vmatprep.subr.bf16.mxu0 %v542
  %855 = vmatpush1.bf16.msra.mxu0 %v541
  %856 = vmatprep.subr.bf16.mxu0 %v547
  %857 = vmatpush1.bf16.msra.mxu0 %v546
  %858 = vmatprep.subr.bf16.mxu0 %v552
  %859 = vmatpush1.bf16.msra.mxu0 %v551
  %860 = vmatprep.subr.bf16.mxu0 %v557
  %861 = vmatpush1.bf16.msra.mxu0 %v556
  %862 = vmatprep.subr.bf16.mxu0 %v562
  %863 = vmatpush1.bf16.msra.mxu0 %v561
  %864 = vmatprep.subr.bf16.mxu0 %v567
  %865 = vmatpush1.bf16.msra.mxu0 %v566
  %866 = vmatprep.subr.bf16.mxu0 %v572
  %867 = vmatpush1.bf16.msra.mxu0 %v571
  %868 = vmatprep.subr.bf16.mxu0 %v577
  %869 = vmatpush1.bf16.msra.mxu0 %v576
  %870 = vmatprep.mubr.bf16.mxu0 %v192
  %871 = vmatmul.mubr.bf16.gmra.mrb[0].mxu0 %v191
  %v872 = vpop.f32.mrb[0].mxu0
  %v873 = vadd.f32 0.0, %v872
  %v874 = vpop.f32.mrb[0].mxu0
  %v875 = vadd.f32 0.0, %v874
  %v876 = vpop.f32.mrb[0].mxu0
  %v877 = vadd.f32 0.0, %v876
  %v878 = vpop.f32.mrb[0].mxu0
  %v879 = vadd.f32 0.0, %v878
  %880 = vmatprep.mubr.bf16.mxu0 %v195
  %881 = vmatmul.mubr.bf16.gmra.mrb[0].mxu0 %v194
  %v882 = vpop.f32.mrb[0].mxu0
  %v883 = vadd.f32 0.0, %v882
  %v884 = vpop.f32.mrb[0].mxu0
  %v885 = vadd.f32 0.0, %v884
  %v886 = vpop.f32.mrb[0].mxu0
  %v887 = vadd.f32 0.0, %v886
  %v888 = vpop.f32.mrb[0].mxu0
  %v889 = vadd.f32 0.0, %v888
  %890 = vmatprep.mubr.bf16.mxu0 %v198
  %891 = vmatmul.mubr.bf16.gmra.mrb[0].mxu0 %v197
  %v892 = vpop.f32.mrb[0].mxu0
  %v893 = vadd.f32 0.0, %v892
  %v894 = vpop.f32.mrb[0].mxu0
  %v895 = vadd.f32 0.0, %v894
  %v896 = vpop.f32.mrb[0].mxu0
  %v897 = vadd.f32 0.0, %v896
  %v898 = vpop.f32.mrb[0].mxu0
  %v899 = vadd.f32 0.0, %v898
  %900 = vmatprep.mubr.bf16.mxu0 %v201
  %901 = vmatmul.mubr.bf16.gmra.mrb[0].mxu0 %v200
  %v902 = vpop.f32.mrb[0].mxu0
  %v903 = vadd.f32 0.0, %v902
  %v904 = vpop.f32.mrb[0].mxu0
  %v905 = vadd.f32 0.0, %v904
  %v906 = vpop.f32.mrb[0].mxu0
  %v907 = vadd.f32 0.0, %v906
  %v908 = vpop.f32.mrb[0].mxu0
  %v909 = vadd.f32 0.0, %v908
  %910 = vdwg.mxu0
  %911 = vmatprep.subr.bf16.mxu0 %v582
  %912 = vmatpush1.bf16.msra.mxu0 %v581
  %913 = vmatprep.subr.bf16.mxu0 %v587
  %914 = vmatpush1.bf16.msra.mxu0 %v586
  %915 = vmatprep.subr.bf16.mxu0 0
  %916 = vmatpush1.bf16.msra.mxu0 0
  %917 = vmatprep.subr.bf16.mxu0 0
  %918 = vmatpush1.bf16.msra.mxu0 0
  %919 = vmatprep.subr.bf16.mxu0 0
  %920 = vmatpush1.bf16.msra.mxu0 0
  %921 = vmatprep.subr.bf16.mxu0 0
  %922 = vmatpush1.bf16.msra.mxu0 0
  %923 = vmatprep.subr.bf16.mxu0 0
  %924 = vmatpush1.bf16.msra.mxu0 0
  %925 = vmatprep.subr.bf16.mxu0 0
  %926 = vmatpush1.bf16.msra.mxu0 0
  %927 = vmatprep.subr.bf16.mxu0 0
  %928 = vmatpush1.bf16.msra.mxu0 0
  %929 = vmatprep.subr.bf16.mxu0 0
  %930 = vmatpush1.bf16.msra.mxu0 0
  %931 = vmatprep.subr.bf16.mxu0 0
  %932 = vmatpush1.bf16.msra.mxu0 0
  %933 = vmatprep.subr.bf16.mxu0 0
  %934 = vmatpush1.bf16.msra.mxu0 0
  %935 = vmatprep.subr.bf16.mxu0 0
  %936 = vmatpush1.bf16.msra.mxu0 0
  %937 = vmatprep.subr.bf16.mxu0 0
  %938 = vmatpush1.bf16.msra.mxu0 0
  %939 = vmatprep.subr.bf16.mxu0 0
  %940 = vmatpush1.bf16.msra.mxu0 0
  %941 = vmatprep.subr.bf16.mxu0 0
  %942 = vmatpush1.bf16.msra.mxu0 0
  %943 = vmatprep.mubr.bf16.mxu0 0
  %944 = vmatmul.mubr.bf16.gmra.mrb[0].mxu0 %v681
  %v945 = vpop.f32.mrb[0].mxu0
  %v946 = vadd.f32 %v873, %v945
  %v947 = vpop.f32.mrb[0].mxu0
  %v948 = vadd.f32 %v875, %v947
  %v949 = vpop.f32.mrb[0].mxu0
  %v950 = vadd.f32 %v877, %v949
  %v951 = vpop.f32.mrb[0].mxu0
  %v952 = vadd.f32 %v879, %v951
  %953 = vmatprep.mubr.bf16.mxu0 0
  %954 = vmatmul.mubr.bf16.gmra.mrb[0].mxu0 %v684
  %v955 = vpop.f32.mrb[0].mxu0
  %v956 = vadd.f32 %v883, %v955
  %v957 = vpop.f32.mrb[0].mxu0
  %v958 = vadd.f32 %v885, %v957
  %v959 = vpop.f32.mrb[0].mxu0
  %v960 = vadd.f32 %v887, %v959
  %v961 = vpop.f32.mrb[0].mxu0
  %v962 = vadd.f32 %v889, %v961
  %963 = vmatprep.mubr.bf16.mxu0 0
  %964 = vmatmul.mubr.bf16.gmra.mrb[0].mxu0 %v687
  %v965 = vpop.f32.mrb[0].mxu0
  %v966 = vadd.f32 %v893, %v965
  %v967 = vpop.f32.mrb[0].mxu0
  %v968 = vadd.f32 %v895, %v967
  %v969 = vpop.f32.mrb[0].mxu0
  %v970 = vadd.f32 %v897, %v969
  %v971 = vpop.f32.mrb[0].mxu0
  %v972 = vadd.f32 %v899, %v971
  %973 = vmatprep.mubr.bf16.mxu0 0
  %974 = vmatmul.mubr.bf16.gmra.mrb[0].mxu0 %v690
  %v975 = vpop.f32.mrb[0].mxu0
  %v976 = vadd.f32 %v903, %v975
  %v977 = vpop.f32.mrb[0].mxu0
  %v978 = vadd.f32 %v905, %v977
  %v979 = vpop.f32.mrb[0].mxu0
  %v980 = vadd.f32 %v907, %v979
  %v981 = vpop.f32.mrb[0].mxu0
  %v982 = vadd.f32 %v909, %v981
  %983 = vdwg.mxu0
  %984 = vmatprep.subr.bf16.mxu0 0
  %985 = vmatpush1.bf16.msra.mxu0 %v503
  %986 = vmatprep.subr.bf16.mxu0 0
  %987 = vmatpush1.bf16.msra.mxu0 %v508
  %988 = vmatprep.subr.bf16.mxu0 0
  %989 = vmatpush1.bf16.msra.mxu0 %v513
  %990 = vmatprep.subr.bf16.mxu0 0
  %991 = vmatpush1.bf16.msra.mxu0 %v518
  %992 = vmatprep.subr.bf16.mxu0 0
  %993 = vmatpush1.bf16.msra.mxu0 %v523
  %994 = vmatprep.subr.bf16.mxu0 0
  %995 = vmatpush1.bf16.msra.mxu0 %v528
  %996 = vmatprep.subr.bf16.mxu0 0
  %997 = vmatpush1.bf16.msra.mxu0 %v533
  %998 = vmatprep.subr.bf16.mxu0 0
  %999 = vmatpush1.bf16.msra.mxu0 %v538
  %1000 = vmatprep.subr.bf16.mxu0 0
  %1001 = vmatpush1.bf16.msra.mxu0 %v543
  %1002 = vmatprep.subr.bf16.mxu0 0
  %1003 = vmatpush1.bf16.msra.mxu0 %v548
  %1004 = vmatprep.subr.bf16.mxu0 0
  %1005 = vmatpush1.bf16.msra.mxu0 %v553
  %1006 = vmatprep.subr.bf16.mxu0 0
  %1007 = vmatpush1.bf16.msra.mxu0 %v558
  %1008 = vmatprep.subr.bf16.mxu0 0
  %1009 = vmatpush1.bf16.msra.mxu0 %v563
  %1010 = vmatprep.subr.bf16.mxu0 0
  %1011 = vmatpush1.bf16.msra.mxu0 %v568
  %1012 = vmatprep.subr.bf16.mxu0 0
  %1013 = vmatpush1.bf16.msra.mxu0 %v573
  %1014 = vmatprep.subr.bf16.mxu0 0
  %1015 = vmatpush1.bf16.msra.mxu0 %v578
  %1016 = vmatprep.mubr.bf16.mxu0 %v192
  %1017 = vmatmul.mubr.bf16.gmra.mrb[0].mxu0 %v191
  %v1018 = vpop.f32.mrb[0].mxu0
  %v1019 = vadd.f32 0.0, %v1018
  %v1020 = vpop.f32.mrb[0].mxu0
  %v1021 = vpop.f32.mrb[0].mxu0
  %v1022 = vadd.f32 0.0, %v1021
  %v1023 = vpop.f32.mrb[0].mxu0
  %1024 = vmatprep.mubr.bf16.mxu0 %v195
  %1025 = vmatmul.mubr.bf16.gmra.mrb[0].mxu0 %v194
  %v1026 = vpop.f32.mrb[0].mxu0
  %v1027 = vadd.f32 0.0, %v1026
  %v1028 = vpop.f32.mrb[0].mxu0
  %v1029 = vpop.f32.mrb[0].mxu0
  %v1030 = vadd.f32 0.0, %v1029
  %v1031 = vpop.f32.mrb[0].mxu0
  %1032 = vmatprep.mubr.bf16.mxu0 %v198
  %1033 = vmatmul.mubr.bf16.gmra.mrb[0].mxu0 %v197
  %v1034 = vpop.f32.mrb[0].mxu0
  %v1035 = vadd.f32 0.0, %v1034
  %v1036 = vpop.f32.mrb[0].mxu0
  %v1037 = vpop.f32.mrb[0].mxu0
  %v1038 = vadd.f32 0.0, %v1037
  %v1039 = vpop.f32.mrb[0].mxu0
  %1040 = vmatprep.mubr.bf16.mxu0 %v201
  %1041 = vmatmul.mubr.bf16.gmra.mrb[0].mxu0 %v200
  %v1042 = vpop.f32.mrb[0].mxu0
  %v1043 = vadd.f32 0.0, %v1042
  %v1044 = vpop.f32.mrb[0].mxu0
  %v1045 = vpop.f32.mrb[0].mxu0
  %v1046 = vadd.f32 0.0, %v1045
  %v1047 = vpop.f32.mrb[0].mxu0
  %1048 = vdwg.mxu0
  %1049 = vmatprep.subr.bf16.mxu0 0
  %1050 = vmatpush1.bf16.msra.mxu0 %v583
  %1051 = vmatprep.subr.bf16.mxu0 0
  %1052 = vmatpush1.bf16.msra.mxu0 %v588
  %1053 = vmatprep.subr.bf16.mxu0 0
  %1054 = vmatpush1.bf16.msra.mxu0 0
  %1055 = vmatprep.subr.bf16.mxu0 0
  %1056 = vmatpush1.bf16.msra.mxu0 0
  %1057 = vmatprep.subr.bf16.mxu0 0
  %1058 = vmatpush1.bf16.msra.mxu0 0
  %1059 = vmatprep.subr.bf16.mxu0 0
  %1060 = vmatpush1.bf16.msra.mxu0 0
  %1061 = vmatprep.subr.bf16.mxu0 0
  %1062 = vmatpush1.bf16.msra.mxu0 0
  %1063 = vmatprep.subr.bf16.mxu0 0
  %1064 = vmatpush1.bf16.msra.mxu0 0
  %1065 = vmatprep.subr.bf16.mxu0 0
  %1066 = vmatpush1.bf16.msra.mxu0 0
  %1067 = vmatprep.subr.bf16.mxu0 0
  %1068 = vmatpush1.bf16.msra.mxu0 0
  %1069 = vmatprep.subr.bf16.mxu0 0
  %1070 = vmatpush1.bf16.msra.mxu0 0
  %1071 = vmatprep.subr.bf16.mxu0 0
  %1072 = vmatpush1.bf16.msra.mxu0 0
  %1073 = vmatprep.subr.bf16.mxu0 0
  %1074 = vmatpush1.bf16.msra.mxu0 0
  %1075 = vmatprep.subr.bf16.mxu0 0
  %1076 = vmatpush1.bf16.msra.mxu0 0
  %1077 = vmatprep.subr.bf16.mxu0 0
  %1078 = vmatpush1.bf16.msra.mxu0 0
  %1079 = vmatprep.subr.bf16.mxu0 0
  %1080 = vmatpush1.bf16.msra.mxu0 0
  %1081 = vmatprep.mubr.bf16.mxu0 0
  %1082 = vmatmul.mubr.bf16.gmra.mrb[0].mxu0 %v681
  %v1083 = vpop.f32.mrb[0].mxu0
  %v1084 = vadd.f32 %v1019, %v1083
  %v1085 = vpop.f32.mrb[0].mxu0
  %v1086 = vpop.f32.mrb[0].mxu0
  %v1087 = vadd.f32 %v1022, %v1086
  %v1088 = vpop.f32.mrb[0].mxu0
  %1089 = vmatprep.mubr.bf16.mxu0 0
  %1090 = vmatmul.mubr.bf16.gmra.mrb[0].mxu0 %v684
  %v1091 = vpop.f32.mrb[0].mxu0
  %v1092 = vadd.f32 %v1027, %v1091
  %v1093 = vpop.f32.mrb[0].mxu0
  %v1094 = vpop.f32.mrb[0].mxu0
  %v1095 = vadd.f32 %v1030, %v1094
  %v1096 = vpop.f32.mrb[0].mxu0
  %1097 = vmatprep.mubr.bf16.mxu0 0
  %1098 = vmatmul.mubr.bf16.gmra.mrb[0].mxu0 %v687
  %v1099 = vpop.f32.mrb[0].mxu0
  %v1100 = vadd.f32 %v1035, %v1099
  %v1101 = vpop.f32.mrb[0].mxu0
  %v1102 = vpop.f32.mrb[0].mxu0
  %v1103 = vadd.f32 %v1038, %v1102
  %v1104 = vpop.f32.mrb[0].mxu0
  %1105 = vmatprep.mubr.bf16.mxu0 0
  %1106 = vmatmul.mubr.bf16.gmra.mrb[0].mxu0 %v690
  %v1107 = vpop.f32.mrb[0].mxu0
  %v1108 = vadd.f32 %v1043, %v1107
  %v1109 = vpop.f32.mrb[0].mxu0
  %v1110 = vpop.f32.mrb[0].mxu0
  %v1111 = vadd.f32 %v1046, %v1110
  %v1112 = vpop.f32.mrb[0].mxu0
  %1113 = vdwg.mxu0
  %v1114 = vadd.f32 %v800, %v802
  %v1115 = vadd.f32 %v1114, %v946
  %v1116 = vadd.f32 %v1115, %v948
  %vm1117 = vcmask 924672
  %v1118 = vsel %vm1117, %v1084, 0.0
  %v1119 = vadd.f32 %v1116, %v1118
  %1120 = vadd.xlane.f32.xlu0 %v1119
  %v1121 = vpop.xlane.xlu0 %1120
  %v1122 = vadd.f32 %v804, %v806
  %v1123 = vadd.f32 %v1122, %v950
  %v1124 = vadd.f32 %v1123, %v952
  %v1125 = vsel %vm1117, %v1087, 0.0
  %v1126 = vadd.f32 %v1124, %v1125
  %1127 = vadd.xlane.f32.xlu0 %v1126
  %v1128 = vpop.xlane.xlu0 %1127
  %v1129 = vadd.f32 %v810, %v812
  %v1130 = vadd.f32 %v1129, %v956
  %v1131 = vadd.f32 %v1130, %v958
  %v1132 = vsel %vm1117, %v1092, 0.0
  %v1133 = vadd.f32 %v1131, %v1132
  %1134 = vadd.xlane.f32.xlu0 %v1133
  %v1135 = vpop.xlane.xlu0 %1134
  %v1136 = vadd.f32 %v814, %v816
  %v1137 = vadd.f32 %v1136, %v960
  %v1138 = vadd.f32 %v1137, %v962
  %v1139 = vsel %vm1117, %v1095, 0.0
  %v1140 = vadd.f32 %v1138, %v1139
  %1141 = vadd.xlane.f32.xlu0 %v1140
  %v1142 = vpop.xlane.xlu0 %1141
  %v1143 = vadd.f32 %v820, %v822
  %v1144 = vadd.f32 %v1143, %v966
  %v1145 = vadd.f32 %v1144, %v968
  %v1146 = vsel %vm1117, %v1100, 0.0
  %v1147 = vadd.f32 %v1145, %v1146
  %1148 = vadd.xlane.f32.xlu0 %v1147
  %v1149 = vpop.xlane.xlu0 %1148
  %v1150 = vadd.f32 %v824, %v826
  %v1151 = vadd.f32 %v1150, %v970
  %v1152 = vadd.f32 %v1151, %v972
  %v1153 = vsel %vm1117, %v1103, 0.0
  %v1154 = vadd.f32 %v1152, %v1153
  %1155 = vadd.xlane.f32.xlu0 %v1154
  %v1156 = vpop.xlane.xlu0 %1155
  %v1157 = vadd.f32 %v830, %v832
  %v1158 = vadd.f32 %v1157, %v976
  %v1159 = vadd.f32 %v1158, %v978
  %v1160 = vsel %vm1117, %v1108, 0.0
  %v1161 = vadd.f32 %v1159, %v1160
  %1162 = vadd.xlane.f32.xlu0 %v1161
  %v1163 = vpop.xlane.xlu0 %1162
  %v1164 = vadd.f32 %v834, %v836
  %v1165 = vadd.f32 %v1164, %v980
  %v1166 = vadd.f32 %v1165, %v982
  %v1167 = vsel %vm1117, %v1111, 0.0
  %v1168 = vadd.f32 %v1166, %v1167
  %1169 = vadd.xlane.f32.xlu0 %v1168
  %v1170 = vpop.xlane.xlu0 %1169
  %v1171 = vmul.f32 %v1121, 0.0016
  %v1172 = vmul.f32 %v1128, 0.0016
  %v1173 = vmul.f32 %v1135, 0.0016
  %v1174 = vmul.f32 %v1142, 0.0016
  %v1175 = vmul.f32 %v1149, 0.0016
  %v1176 = vmul.f32 %v1156, 0.0016
  %v1177 = vmul.f32 %v1163, 0.0016
  %v1178 = vmul.f32 %v1170, 0.0016
  %v1179 = vmul.f32 %v800, %v800
  %v1180 = vmul.f32 %v802, %v802
  %v1181 = vmul.f32 %v946, %v946
  %v1182 = vmul.f32 %v948, %v948
  %v1183 = vmul.f32 %v1084, %v1084
  %v1184 = vmul.f32 %v804, %v804
  %v1185 = vmul.f32 %v806, %v806
  %v1186 = vmul.f32 %v950, %v950
  %v1187 = vmul.f32 %v952, %v952
  %v1188 = vmul.f32 %v1087, %v1087
  %v1189 = vmul.f32 %v810, %v810
  %v1190 = vmul.f32 %v812, %v812
  %v1191 = vmul.f32 %v956, %v956
  %v1192 = vmul.f32 %v958, %v958
  %v1193 = vmul.f32 %v1092, %v1092
  %v1194 = vmul.f32 %v814, %v814
  %v1195 = vmul.f32 %v816, %v816
  %v1196 = vmul.f32 %v960, %v960
  %v1197 = vmul.f32 %v962, %v962
  %v1198 = vmul.f32 %v1095, %v1095
  %v1199 = vmul.f32 %v820, %v820
  %v1200 = vmul.f32 %v822, %v822
  %v1201 = vmul.f32 %v966, %v966
  %v1202 = vmul.f32 %v968, %v968
  %v1203 = vmul.f32 %v1100, %v1100
  %v1204 = vmul.f32 %v824, %v824
  %v1205 = vmul.f32 %v826, %v826
  %v1206 = vmul.f32 %v970, %v970
  %v1207 = vmul.f32 %v972, %v972
  %v1208 = vmul.f32 %v1103, %v1103
  %v1209 = vmul.f32 %v830, %v830
  %v1210 = vmul.f32 %v832, %v832
  %v1211 = vmul.f32 %v976, %v976
  %v1212 = vmul.f32 %v978, %v978
  %v1213 = vmul.f32 %v1108, %v1108
  %v1214 = vmul.f32 %v834, %v834
  %v1215 = vmul.f32 %v836, %v836
  %v1216 = vmul.f32 %v980, %v980
  %v1217 = vmul.f32 %v982, %v982
  %v1218 = vmul.f32 %v1111, %v1111
  %v1219 = vadd.f32 %v1179, %v1180
  %v1220 = vadd.f32 %v1219, %v1181
  %v1221 = vadd.f32 %v1220, %v1182
  %v1222 = vsel %vm1117, %v1183, 0.0
  %v1223 = vadd.f32 %v1221, %v1222
  %1224 = vadd.xlane.f32.xlu0 %v1223
  %v1225 = vpop.xlane.xlu0 %1224
  %v1226 = vadd.f32 %v1184, %v1185
  %v1227 = vadd.f32 %v1226, %v1186
  %v1228 = vadd.f32 %v1227, %v1187
  %v1229 = vsel %vm1117, %v1188, 0.0
  %v1230 = vadd.f32 %v1228, %v1229
  %1231 = vadd.xlane.f32.xlu0 %v1230
  %v1232 = vpop.xlane.xlu0 %1231
  %v1233 = vadd.f32 %v1189, %v1190
  %v1234 = vadd.f32 %v1233, %v1191
  %v1235 = vadd.f32 %v1234, %v1192
  %v1236 = vsel %vm1117, %v1193, 0.0
  %v1237 = vadd.f32 %v1235, %v1236
  %1238 = vadd.xlane.f32.xlu0 %v1237
  %v1239 = vpop.xlane.xlu0 %1238
  %v1240 = vadd.f32 %v1194, %v1195
  %v1241 = vadd.f32 %v1240, %v1196
  %v1242 = vadd.f32 %v1241, %v1197
  %v1243 = vsel %vm1117, %v1198, 0.0
  %v1244 = vadd.f32 %v1242, %v1243
  %1245 = vadd.xlane.f32.xlu0 %v1244
  %v1246 = vpop.xlane.xlu0 %1245
  %v1247 = vadd.f32 %v1199, %v1200
  %v1248 = vadd.f32 %v1247, %v1201
  %v1249 = vadd.f32 %v1248, %v1202
  %v1250 = vsel %vm1117, %v1203, 0.0
  %v1251 = vadd.f32 %v1249, %v1250
  %1252 = vadd.xlane.f32.xlu0 %v1251
  %v1253 = vpop.xlane.xlu0 %1252
  %v1254 = vadd.f32 %v1204, %v1205
  %v1255 = vadd.f32 %v1254, %v1206
  %v1256 = vadd.f32 %v1255, %v1207
  %v1257 = vsel %vm1117, %v1208, 0.0
  %v1258 = vadd.f32 %v1256, %v1257
  %1259 = vadd.xlane.f32.xlu0 %v1258
  %v1260 = vpop.xlane.xlu0 %1259
  %v1261 = vadd.f32 %v1209, %v1210
  %v1262 = vadd.f32 %v1261, %v1211
  %v1263 = vadd.f32 %v1262, %v1212
  %v1264 = vsel %vm1117, %v1213, 0.0
  %v1265 = vadd.f32 %v1263, %v1264
  %1266 = vadd.xlane.f32.xlu0 %v1265
  %v1267 = vpop.xlane.xlu0 %1266
  %v1268 = vadd.f32 %v1214, %v1215
  %v1269 = vadd.f32 %v1268, %v1216
  %v1270 = vadd.f32 %v1269, %v1217
  %v1271 = vsel %vm1117, %v1218, 0.0
  %v1272 = vadd.f32 %v1270, %v1271
  %1273 = vadd.xlane.f32.xlu0 %v1272
  %v1274 = vpop.xlane.xlu0 %1273
  %v1275 = vmul.f32 %v1225, 0.0016
  %v1276 = vmul.f32 %v1232, 0.0016
  %v1277 = vmul.f32 %v1239, 0.0016
  %v1278 = vmul.f32 %v1246, 0.0016
  %v1279 = vmul.f32 %v1253, 0.0016
  %v1280 = vmul.f32 %v1260, 0.0016
  %v1281 = vmul.f32 %v1267, 0.0016
  %v1282 = vmul.f32 %v1274, 0.0016
  %v1283 = vmul.f32 %v1171, %v1171
  %v1284 = vmul.f32 %v1172, %v1172
  %v1285 = vmul.f32 %v1173, %v1173
  %v1286 = vmul.f32 %v1174, %v1174
  %v1287 = vmul.f32 %v1175, %v1175
  %v1288 = vmul.f32 %v1176, %v1176
  %v1289 = vmul.f32 %v1177, %v1177
  %v1290 = vmul.f32 %v1178, %v1178
  %v1291 = vsub.f32 %v1275, %v1283
  %v1292 = vsub.f32 %v1276, %v1284
  %v1293 = vsub.f32 %v1277, %v1285
  %v1294 = vsub.f32 %v1278, %v1286
  %v1295 = vsub.f32 %v1279, %v1287
  %v1296 = vsub.f32 %v1280, %v1288
  %v1297 = vsub.f32 %v1281, %v1289
  %v1298 = vsub.f32 %v1282, %v1290
  %v1299 = vadd.f32 %v1291, 0.001
  %v1300 = vadd.f32 %v1292, 0.001
  %v1301 = vadd.f32 %v1293, 0.001
  %v1302 = vadd.f32 %v1294, 0.001
  %v1303 = vadd.f32 %v1295, 0.001
  %v1304 = vadd.f32 %v1296, 0.001
  %v1305 = vadd.f32 %v1297, 0.001
  %v1306 = vadd.f32 %v1298, 0.001
  %v1307 = vrsqrt.pop %v1299
  %v1308 = vrsqrt.pop %v1300
  %v1309 = vrsqrt.pop %v1301
  %v1310 = vrsqrt.pop %v1302
  %v1311 = vrsqrt.pop %v1303
  %v1312 = vrsqrt.pop %v1304
  %v1313 = vrsqrt.pop %v1305
  %v1314 = vrsqrt.pop %v1306
  %v1315 = vld [vmem:[%s3] sm:$0xff]
  %v1316 = vld [vmem:[%s3 + $0x8] sm:$0xff]
  %v1317 = vld [vmem:[%s3 + $0x10] sm:$0xff]
  %v1318 = vld [vmem:[%s3 + $0x18] sm:$0xff]
  %v1319 = vld [vmem:[%s3 + $0x20] sm:$0xff]
  %v1320 = vld [vmem:[%s3 + $0x28] sm:$0xff]
  %v1321 = vld [vmem:[%s3 + $0x30] sm:$0xff]
  %v1322 = vld [vmem:[%s3 + $0x38] sm:$0xff]
  %v1323 = vmul.f32 %v1315, %v1307
  %v1324 = vmul.f32 %v1316, %v1308
  %v1325 = vmul.f32 %v1317, %v1309
  %v1326 = vmul.f32 %v1318, %v1310
  %v1327 = vmul.f32 %v1319, %v1311
  %v1328 = vmul.f32 %v1320, %v1312
  %v1329 = vmul.f32 %v1321, %v1313
  %v1330 = vmul.f32 %v1322, %v1314
  %v1331 = vld [vmem:[%s4] sm:$0xff]
  %v1332 = vld [vmem:[%s4 + $0x8] sm:$0xff]
  %v1333 = vld [vmem:[%s4 + $0x10] sm:$0xff]
  %v1334 = vld [vmem:[%s4 + $0x18] sm:$0xff]
  %v1335 = vld [vmem:[%s4 + $0x20] sm:$0xff]
  %v1336 = vld [vmem:[%s4 + $0x28] sm:$0xff]
  %v1337 = vld [vmem:[%s4 + $0x30] sm:$0xff]
  %v1338 = vld [vmem:[%s4 + $0x38] sm:$0xff]
  %v1339 = vmul.f32 %v1171, %v1323
  %v1340 = vmul.f32 %v1172, %v1324
  %v1341 = vmul.f32 %v1173, %v1325
  %v1342 = vmul.f32 %v1174, %v1326
  %v1343 = vmul.f32 %v1175, %v1327
  %v1344 = vmul.f32 %v1176, %v1328
  %v1345 = vmul.f32 %v1177, %v1329
  %v1346 = vmul.f32 %v1178, %v1330
  %v1347 = vsub.f32 %v1331, %v1339
  %v1348 = vsub.f32 %v1332, %v1340
  %v1349 = vsub.f32 %v1333, %v1341
  %v1350 = vsub.f32 %v1334, %v1342
  %v1351 = vsub.f32 %v1335, %v1343
  %v1352 = vsub.f32 %v1336, %v1344
  %v1353 = vsub.f32 %v1337, %v1345
  %v1354 = vsub.f32 %v1338, %v1346
  %1356 = vset.pattern.permute.xlu0 0
  %1357 = vperm.xlu0 %1356, %v1323
  %v1358 = vpop.permute.xlu0 %1357
  %1361 = vset.pattern.permute.xlu0 0
  %1362 = vperm.xlu0 %1361, %v1324
  %v1363 = vpop.permute.xlu0 %1362
  %1366 = vset.pattern.permute.xlu0 0
  %1367 = vperm.xlu0 %1366, %v1325
  %v1368 = vpop.permute.xlu0 %1367
  %1371 = vset.pattern.permute.xlu0 0
  %1372 = vperm.xlu0 %1371, %v1326
  %v1373 = vpop.permute.xlu0 %1372
  %1376 = vset.pattern.permute.xlu0 0
  %1377 = vperm.xlu0 %1376, %v1327
  %v1378 = vpop.permute.xlu0 %1377
  %1381 = vset.pattern.permute.xlu0 0
  %1382 = vperm.xlu0 %1381, %v1328
  %v1383 = vpop.permute.xlu0 %1382
  %1386 = vset.pattern.permute.xlu0 0
  %1387 = vperm.xlu0 %1386, %v1329
  %v1388 = vpop.permute.xlu0 %1387
  %1391 = vset.pattern.permute.xlu0 0
  %1392 = vperm.xlu0 %1391, %v1330
  %v1393 = vpop.permute.xlu0 %1392
  %v1395 = vmul.f32 %v800, %v1358
  %v1396 = vmul.f32 %v802, %v1358
  %v1397 = vmul.f32 %v946, %v1358
  %v1398 = vmul.f32 %v948, %v1358
  %v1399 = vmul.f32 %v1084, %v1358
  %v1400 = vmul.f32 %v804, %v1363
  %v1401 = vmul.f32 %v806, %v1363
  %v1402 = vmul.f32 %v950, %v1363
  %v1403 = vmul.f32 %v952, %v1363
  %v1404 = vmul.f32 %v1087, %v1363
  %v1405 = vmul.f32 %v810, %v1368
  %v1406 = vmul.f32 %v812, %v1368
  %v1407 = vmul.f32 %v956, %v1368
  %v1408 = vmul.f32 %v958, %v1368
  %v1409 = vmul.f32 %v1092, %v1368
  %v1410 = vmul.f32 %v814, %v1373
  %v1411 = vmul.f32 %v816, %v1373
  %v1412 = vmul.f32 %v960, %v1373
  %v1413 = vmul.f32 %v962, %v1373
  %v1414 = vmul.f32 %v1095, %v1373
  %v1415 = vmul.f32 %v820, %v1378
  %v1416 = vmul.f32 %v822, %v1378
  %v1417 = vmul.f32 %v966, %v1378
  %v1418 = vmul.f32 %v968, %v1378
  %v1419 = vmul.f32 %v1100, %v1378
  %v1420 = vmul.f32 %v824, %v1383
  %v1421 = vmul.f32 %v826, %v1383
  %v1422 = vmul.f32 %v970, %v1383
  %v1423 = vmul.f32 %v972, %v1383
  %v1424 = vmul.f32 %v1103, %v1383
  %v1425 = vmul.f32 %v830, %v1388
  %v1426 = vmul.f32 %v832, %v1388
  %v1427 = vmul.f32 %v976, %v1388
  %v1428 = vmul.f32 %v978, %v1388
  %v1429 = vmul.f32 %v1108, %v1388
  %v1430 = vmul.f32 %v834, %v1393
  %v1431 = vmul.f32 %v836, %v1393
  %v1432 = vmul.f32 %v980, %v1393
  %v1433 = vmul.f32 %v982, %v1393
  %v1434 = vmul.f32 %v1111, %v1393
  %1436 = vset.pattern.permute.xlu0 0
  %1437 = vperm.xlu0 %1436, %v1347
  %v1438 = vpop.permute.xlu0 %1437
  %1441 = vset.pattern.permute.xlu0 0
  %1442 = vperm.xlu0 %1441, %v1348
  %v1443 = vpop.permute.xlu0 %1442
  %1446 = vset.pattern.permute.xlu0 0
  %1447 = vperm.xlu0 %1446, %v1349
  %v1448 = vpop.permute.xlu0 %1447
  %1451 = vset.pattern.permute.xlu0 0
  %1452 = vperm.xlu0 %1451, %v1350
  %v1453 = vpop.permute.xlu0 %1452
  %1456 = vset.pattern.permute.xlu0 0
  %1457 = vperm.xlu0 %1456, %v1351
  %v1458 = vpop.permute.xlu0 %1457
  %1461 = vset.pattern.permute.xlu0 0
  %1462 = vperm.xlu0 %1461, %v1352
  %v1463 = vpop.permute.xlu0 %1462
  %1466 = vset.pattern.permute.xlu0 0
  %1467 = vperm.xlu0 %1466, %v1353
  %v1468 = vpop.permute.xlu0 %1467
  %1471 = vset.pattern.permute.xlu0 0
  %1472 = vperm.xlu0 %1471, %v1354
  %v1473 = vpop.permute.xlu0 %1472
  %v1475 = vadd.f32 %v1395, %v1438
  %v1476 = vadd.f32 %v1396, %v1438
  %v1477 = vadd.f32 %v1397, %v1438
  %v1478 = vadd.f32 %v1398, %v1438
  %v1479 = vadd.f32 %v1399, %v1438
  %v1480 = vadd.f32 %v1400, %v1443
  %v1481 = vadd.f32 %v1401, %v1443
  %v1482 = vadd.f32 %v1402, %v1443
  %v1483 = vadd.f32 %v1403, %v1443
  %v1484 = vadd.f32 %v1404, %v1443
  %v1485 = vadd.f32 %v1405, %v1448
  %v1486 = vadd.f32 %v1406, %v1448
  %v1487 = vadd.f32 %v1407, %v1448
  %v1488 = vadd.f32 %v1408, %v1448
  %v1489 = vadd.f32 %v1409, %v1448
  %v1490 = vadd.f32 %v1410, %v1453
  %v1491 = vadd.f32 %v1411, %v1453
  %v1492 = vadd.f32 %v1412, %v1453
  %v1493 = vadd.f32 %v1413, %v1453
  %v1494 = vadd.f32 %v1414, %v1453
  %v1495 = vadd.f32 %v1415, %v1458
  %v1496 = vadd.f32 %v1416, %v1458
  %v1497 = vadd.f32 %v1417, %v1458
  %v1498 = vadd.f32 %v1418, %v1458
  %v1499 = vadd.f32 %v1419, %v1458
  %v1500 = vadd.f32 %v1420, %v1463
  %v1501 = vadd.f32 %v1421, %v1463
  %v1502 = vadd.f32 %v1422, %v1463
  %v1503 = vadd.f32 %v1423, %v1463
  %v1504 = vadd.f32 %v1424, %v1463
  %v1505 = vadd.f32 %v1425, %v1468
  %v1506 = vadd.f32 %v1426, %v1468
  %v1507 = vadd.f32 %v1427, %v1468
  %v1508 = vadd.f32 %v1428, %v1468
  %v1509 = vadd.f32 %v1429, %v1468
  %v1510 = vadd.f32 %v1430, %v1473
  %v1511 = vadd.f32 %v1431, %v1473
  %v1512 = vadd.f32 %v1432, %v1473
  %v1513 = vadd.f32 %v1433, %v1473
  %v1514 = vadd.f32 %v1434, %v1473
  %v1515 = vmax.f32 %v1475, 0.0
  %v1516 = vmax.f32 %v1476, 0.0
  %v1517 = vmax.f32 %v1477, 0.0
  %v1518 = vmax.f32 %v1478, 0.0
  %v1519 = vmax.f32 %v1479, 0.0
  %v1520 = vmax.f32 %v1480, 0.0
  %v1521 = vmax.f32 %v1481, 0.0
  %v1522 = vmax.f32 %v1482, 0.0
  %v1523 = vmax.f32 %v1483, 0.0
  %v1524 = vmax.f32 %v1484, 0.0
  %v1525 = vmax.f32 %v1485, 0.0
  %v1526 = vmax.f32 %v1486, 0.0
  %v1527 = vmax.f32 %v1487, 0.0
  %v1528 = vmax.f32 %v1488, 0.0
  %v1529 = vmax.f32 %v1489, 0.0
  %v1530 = vmax.f32 %v1490, 0.0
  %v1531 = vmax.f32 %v1491, 0.0
  %v1532 = vmax.f32 %v1492, 0.0
  %v1533 = vmax.f32 %v1493, 0.0
  %v1534 = vmax.f32 %v1494, 0.0
  %v1535 = vmax.f32 %v1495, 0.0
  %v1536 = vmax.f32 %v1496, 0.0
  %v1537 = vmax.f32 %v1497, 0.0
  %v1538 = vmax.f32 %v1498, 0.0
  %v1539 = vmax.f32 %v1499, 0.0
  %v1540 = vmax.f32 %v1500, 0.0
  %v1541 = vmax.f32 %v1501, 0.0
  %v1542 = vmax.f32 %v1502, 0.0
  %v1543 = vmax.f32 %v1503, 0.0
  %v1544 = vmax.f32 %v1504, 0.0
  %v1545 = vmax.f32 %v1505, 0.0
  %v1546 = vmax.f32 %v1506, 0.0
  %v1547 = vmax.f32 %v1507, 0.0
  %v1548 = vmax.f32 %v1508, 0.0
  %v1549 = vmax.f32 %v1509, 0.0
  %v1550 = vmax.f32 %v1510, 0.0
  %v1551 = vmax.f32 %v1511, 0.0
  %v1552 = vmax.f32 %v1512, 0.0
  %v1553 = vmax.f32 %v1513, 0.0
  %v1554 = vmax.f32 %v1514, 0.0
  %v1555 = vpack.c.bf16 %v1520, %v1515
  %v1556 = vpack.c.bf16 %v1521, %v1516
  %v1557 = vpack.c.bf16 %v1522, %v1517
  %v1558 = vpack.c.bf16 %v1523, %v1518
  %v1559 = vpack.c.bf16 %v1524, %v1519
  %v1560 = vpack.c.bf16 %v1530, %v1525
  %v1561 = vpack.c.bf16 %v1531, %v1526
  %v1562 = vpack.c.bf16 %v1532, %v1527
  %v1563 = vpack.c.bf16 %v1533, %v1528
  %v1564 = vpack.c.bf16 %v1534, %v1529
  %v1565 = vpack.c.bf16 %v1540, %v1535
  %v1566 = vpack.c.bf16 %v1541, %v1536
  %v1567 = vpack.c.bf16 %v1542, %v1537
  %v1568 = vpack.c.bf16 %v1543, %v1538
  %v1569 = vpack.c.bf16 %v1544, %v1539
  %v1570 = vpack.c.bf16 %v1550, %v1545
  %v1571 = vpack.c.bf16 %v1551, %v1546
  %v1572 = vpack.c.bf16 %v1552, %v1547
  %v1573 = vpack.c.bf16 %v1553, %v1548
  %v1574 = vpack.c.bf16 %v1554, %v1549
  %1575 = vst [vmem:[#allocation2] sm:$0xff] 0
  %1576 = vst [vmem:[#allocation2 + $0x8] sm:$0xff] 0
  %1577 = vst [vmem:[#allocation2 + $0x10] sm:$0xff] 0
  %1578 = vst [vmem:[#allocation2 + $0x18] sm:$0xff] 0
  %1579 = vst [vmem:[#allocation2 + $0x20] sm:$0xff] 0
  %1580 = vst [vmem:[#allocation2 + $0x28] sm:$0xff] 0
  %1581 = vst [vmem:[#allocation2 + $0x30] sm:$0xff] 0
  %1582 = vst [vmem:[#allocation2 + $0x38] sm:$0xff] 0
  %1583 = vst [vmem:[#allocation2 + $0x40] sm:$0xff] 0
  %1584 = vst [vmem:[#allocation2 + $0x48] sm:$0xff] 0
  %1585 = vst [vmem:[#allocation2 + $0x50] sm:$0xff] 0
  %1586 = vst [vmem:[#allocation2 + $0x58] sm:$0xff] 0
  %1587 = vst [vmem:[#allocation2 + $0x60] sm:$0xff] 0
  %1588 = vst [vmem:[#allocation2 + $0x68] sm:$0xff] 0
  %1589 = vst [vmem:[#allocation2 + $0x70] sm:$0xff] 0
  %1590 = vst [vmem:[#allocation2 + $0x78] sm:$0xff] 0
  %1591 = vst [vmem:[#allocation2 + $0x80] sm:$0xff] 0
  %1592 = vst [vmem:[#allocation2 + $0x88] sm:$0xff] 0
  %1593 = vst [vmem:[#allocation2 + $0x90] sm:$0xff] 0
  %1594 = vst [vmem:[#allocation2 + $0x98] sm:$0xff] 0
  %1595 = vst [vmem:[#allocation2 + $0xa0] sm:$0xff] 0
  %1596 = vst [vmem:[#allocation2 + $0xa8] sm:$0xff] 0
  %1597 = vst [vmem:[#allocation2 + $0xb0] sm:$0xff] 0
  %1598 = vst [vmem:[#allocation2 + $0xb8] sm:$0xff] 0
  %1599 = vst [vmem:[#allocation2 + $0xc0] sm:$0xff] 0
  %1600 = vst [vmem:[#allocation2 + $0xc8] sm:$0xff] 0
  %1601 = vst [vmem:[#allocation2 + $0xd0] sm:$0xff] 0
  %1602 = vst [vmem:[#allocation2 + $0xd8] sm:$0xff] 0
  %1603 = vst [vmem:[#allocation2 + $0x8] sm:$0xff] %v1555
  %1604 = vst [vmem:[#allocation2 + $0x10] sm:$0xff] %v1556
  %1605 = vst [vmem:[#allocation2 + $0x18] sm:$0xff] %v1557
  %1606 = vst [vmem:[#allocation2 + $0x20] sm:$0xff] %v1558
  %1607 = vst.msk [vmem:[#allocation2 + $0x28] sm:$0xff] %vm1117, %v1559
  %1608 = vst [vmem:[#allocation2 + $0x40] sm:$0xff] %v1560
  %1609 = vst [vmem:[#allocation2 + $0x48] sm:$0xff] %v1561
  %1610 = vst [vmem:[#allocation2 + $0x50] sm:$0xff] %v1562
  %1611 = vst [vmem:[#allocation2 + $0x58] sm:$0xff] %v1563
  %1612 = vst.msk [vmem:[#allocation2 + $0x60] sm:$0xff] %vm1117, %v1564
  %1613 = vst [vmem:[#allocation2 + $0x78] sm:$0xff] %v1565
  %1614 = vst [vmem:[#allocation2 + $0x80] sm:$0xff] %v1566
  %1615 = vst [vmem:[#allocation2 + $0x88] sm:$0xff] %v1567
  %1616 = vst [vmem:[#allocation2 + $0x90] sm:$0xff] %v1568
  %1617 = vst.msk [vmem:[#allocation2 + $0x98] sm:$0xff] %vm1117, %v1569
  %1618 = vst [vmem:[#allocation2 + $0xb0] sm:$0xff] %v1570
  %1619 = vst [vmem:[#allocation2 + $0xb8] sm:$0xff] %v1571
  %1620 = vst [vmem:[#allocation2 + $0xc0] sm:$0xff] %v1572
  %1621 = vst [vmem:[#allocation2 + $0xc8] sm:$0xff] %v1573
  %1622 = vst.msk [vmem:[#allocation2 + $0xd0] sm:$0xff] %vm1117, %v1574
  %v1623 = vld [vmem:[#allocation2] sm:$0xff]
  %v1624 = vld [vmem:[#allocation2 + $0x8] sm:$0xff]
  %v1625 = vld [vmem:[#allocation2 + $0x10] sm:$0xff]
  %v1626 = vld [vmem:[#allocation2 + $0x18] sm:$0xff]
  %v1627 = vld [vmem:[#allocation2 + $0x20] sm:$0xff]
  %v1628 = vld [vmem:[#allocation2 + $0x28] sm:$0xff]
  %v1629 = vld [vmem:[#allocation2 + $0x38] sm:$0xff]
  %v1630 = vld [vmem:[#allocation2 + $0x40] sm:$0xff]
  %v1631 = vld [vmem:[#allocation2 + $0x48] sm:$0xff]
  %v1632 = vld [vmem:[#allocation2 + $0x50] sm:$0xff]
  %v1633 = vld [vmem:[#allocation2 + $0x58] sm:$0xff]
  %v1634 = vld [vmem:[#allocation2 + $0x60] sm:$0xff]
  %v1635 = vld [vmem:[#allocation2 + $0x70] sm:$0xff]
  %v1636 = vld [vmem:[#allocation2 + $0x78] sm:$0xff]
  %v1637 = vld [vmem:[#allocation2 + $0x80] sm:$0xff]
  %v1638 = vld [vmem:[#allocation2 + $0x88] sm:$0xff]
  %v1639 = vld [vmem:[#allocation2 + $0x90] sm:$0xff]
  %v1640 = vld [vmem:[#allocation2 + $0x98] sm:$0xff]
  %v1641 = vld [vmem:[#allocation2 + $0xa8] sm:$0xff]
  %v1642 = vld [vmem:[#allocation2 + $0xb0] sm:$0xff]
  %v1643 = vld [vmem:[#allocation2 + $0xb8] sm:$0xff]
  %v1644 = vld [vmem:[#allocation2 + $0xc0] sm:$0xff]
  %v1645 = vld [vmem:[#allocation2 + $0xc8] sm:$0xff]
  %v1646 = vld [vmem:[#allocation2 + $0xd0] sm:$0xff]
  %v1647 = vld [vmem:[%s5] sm:$0x1f]
  %v1649 = vcombine.high %v1647, %v1647
  %v1651 = vunpack.c.l.s4 1966171168
  %v1652 = vunpack.c.0.s8 %v1651
  %v1653 = vlaneseq
  %v1654 = vshrl.u32 %v1653, 7
  %v1655 = vsub.s32 %v1652, %v1654
  %v1656 = vrot.slane %v1647, %v1655
  %v1658 = vunpack.c.l.s4 1966171168
  %v1659 = vunpack.c.0.s8 %v1658
  %v1660 = vlaneseq
  %v1661 = vshrl.u32 %v1660, 7
  %v1662 = vsub.s32 %v1659, %v1661
  %v1663 = vrot.slane %v1649, %v1662
  %v1664 = vcombine.high %v1656, %v1656
  %v1666 = vunpack.c.l.s4 1966171168
  %v1667 = vunpack.c.0.s8 %v1666
  %v1668 = vlaneseq
  %v1669 = vshrl.u32 %v1668, 7
  %v1670 = vsub.s32 %v1667, %v1669
  %v1671 = vrot.slane %v1656, %v1670
  %v1673 = vunpack.c.l.s4 1966171168
  %v1674 = vunpack.c.0.s8 %v1673
  %v1675 = vlaneseq
  %v1676 = vshrl.u32 %v1675, 7
  %v1677 = vsub.s32 %v1674, %v1676
  %v1678 = vrot.slane %v1663, %v1677
  %v1680 = vunpack.c.l.s4 1966171168
  %v1681 = vunpack.c.0.s8 %v1680
  %v1682 = vlaneseq
  %v1683 = vshrl.u32 %v1682, 7
  %v1684 = vsub.s32 %v1681, %v1683
  %v1685 = vrot.slane %v1664, %v1684
  %v1686 = vcombine.high %v1671, %v1671
  %v1687 = vcombine.high %v1685, %v1685
  %v1689 = vpack.i.b16 %v1671, %v1671
  %v1691 = vlaneseq
  %v1692 = vshrl.u32 %v1691, 7
  %v1693 = vsub.s32 0, %v1692
  %v1694 = vrot.slane %v1689, %v1693
  %v1696 = vpack.i.b16 %v1685, %v1685
  %v1698 = vlaneseq
  %v1699 = vshrl.u32 %v1698, 7
  %v1700 = vsub.s32 0, %v1699
  %v1701 = vrot.slane %v1696, %v1700
  %v1703 = vpack.i.b16 %v1686, %v1686
  %v1705 = vlaneseq
  %v1706 = vshrl.u32 %v1705, 7
  %v1707 = vsub.s32 0, %v1706
  %v1708 = vrot.slane %v1703, %v1707
  %v1710 = vpack.i.b16 %v1687, %v1687
  %v1712 = vlaneseq
  %v1713 = vshrl.u32 %v1712, 7
  %v1714 = vsub.s32 0, %v1713
  %v1715 = vrot.slane %v1710, %v1714
  %v1717 = vpack.i.b16 %v1678, %v1678
  %v1719 = vlaneseq
  %v1720 = vshrl.u32 %v1719, 7
  %v1721 = vsub.s32 0, %v1720
  %v1722 = vrot.slane %v1717, %v1721
  %1728 = vrot.lane.b32.xlu0 %v1694, 102
  %v1729 = vpop.permute.xlu0 %1728
  %1730 = vrot.lane.b32.xlu0 %v1701, 102
  %v1731 = vpop.permute.xlu0 %1730
  %1732 = vrot.lane.b32.xlu0 %v1708, 102
  %v1733 = vpop.permute.xlu0 %1732
  %1734 = vrot.lane.b32.xlu0 %v1715, 102
  %v1735 = vpop.permute.xlu0 %1734
  %1736 = vrot.lane.b32.xlu0 %v1722, 102
  %v1737 = vpop.permute.xlu0 %1736
  %vm1738 = vcmask 834560
  %v1739 = vsel %vm1738, %v1729, %v1731
  %v1740 = vsel %vm1738, %v1731, %v1733
  %v1741 = vsel %vm1738, %v1733, %v1735
  %v1742 = vsel %vm1738, %v1735, %v1737
  %v1749 = vmul.bf16 %v1623, %v1729
  %v1750 = vmul.bf16 %v1624, %v1739
  %v1751 = vmul.bf16 %v1625, %v1740
  %v1752 = vmul.bf16 %v1626, %v1741
  %v1753 = vmul.bf16 %v1627, %v1742
  %v1754 = vmul.bf16 %v1628, %v1737
  %v1755 = vmul.bf16 %v1629, %v1729
  %v1756 = vmul.bf16 %v1630, %v1739
  %v1757 = vmul.bf16 %v1631, %v1740
  %v1758 = vmul.bf16 %v1632, %v1741
  %v1759 = vmul.bf16 %v1633, %v1742
  %v1760 = vmul.bf16 %v1634, %v1737
  %v1761 = vmul.bf16 %v1635, %v1729
  %v1762 = vmul.bf16 %v1636, %v1739
  %v1763 = vmul.bf16 %v1637, %v1740
  %v1764 = vmul.bf16 %v1638, %v1741
  %v1765 = vmul.bf16 %v1639, %v1742
  %v1766 = vmul.bf16 %v1640, %v1737
  %v1767 = vmul.bf16 %v1641, %v1729
  %v1768 = vmul.bf16 %v1642, %v1739
  %v1769 = vmul.bf16 %v1643, %v1740
  %v1770 = vmul.bf16 %v1644, %v1741
  %v1771 = vmul.bf16 %v1645, %v1742
  %v1772 = vmul.bf16 %v1646, %v1737
  %v1773 = vld [vmem:[%s2] sm:$0xf]
  %v1774 = vld [vmem:[%s2 + $0x4] sm:$0xf]
  %v1775 = vld [vmem:[%s2 + $0x8] sm:$0xf]
  %v1776 = vld [vmem:[%s2 + $0xc] sm:$0xf]
  %v1777 = vld [vmem:[%s2 + $0x10] sm:$0xf]
  %v1778 = vld [vmem:[%s2 + $0x14] sm:$0xf]
  %v1779 = vld [vmem:[%s2 + $0x18] sm:$0xf]
  %v1780 = vld [vmem:[%s2 + $0x1c] sm:$0xf]
  %v1781 = vld [vmem:[%s2 + $0x20] sm:$0xf]
  %v1782 = vld [vmem:[%s2 + $0x24] sm:$0xf]
  %v1783 = vld [vmem:[%s2 + $0x28] sm:$0xf]
  %v1784 = vld [vmem:[%s2 + $0x2c] sm:$0xf]
  %s1785 = scalar_lea.vmem %s2, 48
  %v1786 = vld [vmem:[%s1785] sm:$0xf]
  %v1787 = vld [vmem:[%s1785 + $0x4] sm:$0xf]
  %v1788 = vld [vmem:[%s1785 + $0x8] sm:$0xf]
  %v1789 = vld [vmem:[%s1785 + $0xc] sm:$0xf]
  %v1790 = vld [vmem:[%s1785 + $0x10] sm:$0xf]
  %v1791 = vld [vmem:[%s1785 + $0x14] sm:$0xf]
  %v1792 = vld [vmem:[%s1785 + $0x18] sm:$0xf]
  %v1793 = vld [vmem:[%s1785 + $0x1c] sm:$0xf]
  %v1794 = vld [vmem:[%s1785 + $0x20] sm:$0xf]
  %v1795 = vld [vmem:[%s1785 + $0x24] sm:$0xf]
  %v1796 = vld [vmem:[%s1785 + $0x28] sm:$0xf]
  %v1797 = vld [vmem:[%s1785 + $0x2c] sm:$0xf]
  %v1810 = vunpack.c.l.b16 %v1786
  %v1811 = vunpack.c.l.b16 %v1787
  %v1812 = vunpack.c.l.b16 %v1788
  %v1813 = vunpack.c.l.b16 %v1789
  %v1814 = vunpack.c.l.b16 %v1790
  %v1815 = vunpack.c.l.b16 %v1791
  %v1816 = vunpack.c.l.b16 %v1792
  %v1817 = vunpack.c.l.b16 %v1793
  %v1818 = vunpack.c.l.b16 %v1794
  %v1819 = vunpack.c.l.b16 %v1795
  %v1820 = vunpack.c.l.b16 %v1796
  %v1821 = vunpack.c.l.b16 %v1797
  %v1822 = vpack.c.b16 %v1811, %v1810
  %v1823 = vpack.c.b16 %v1813, %v1812
  %v1824 = vpack.c.b16 %v1815, %v1814
  %v1825 = vpack.c.b16 %v1817, %v1816
  %v1826 = vpack.c.b16 %v1819, %v1818
  %v1827 = vpack.c.b16 %v1821, %v1820
  %1852 = vrot.lane.b32.xlu0 %v1623, 25
  %v1853 = vpop.permute.xlu0 %1852
  %1854 = vrot.lane.b32.xlu0 %v1624, 25
  %v1855 = vpop.permute.xlu0 %1854
  %1856 = vrot.lane.b32.xlu0 %v1625, 25
  %v1857 = vpop.permute.xlu0 %1856
  %1858 = vrot.lane.b32.xlu0 %v1626, 25
  %v1859 = vpop.permute.xlu0 %1858
  %1860 = vrot.lane.b32.xlu0 %v1627, 25
  %v1861 = vpop.permute.xlu0 %1860
  %1862 = vrot.lane.b32.xlu0 %v1628, 25
  %v1863 = vpop.permute.xlu0 %1862
  %1864 = vrot.lane.b32.xlu0 %v1629, 25
  %v1865 = vpop.permute.xlu0 %1864
  %1866 = vrot.lane.b32.xlu0 %v1630, 25
  %v1867 = vpop.permute.xlu0 %1866
  %1868 = vrot.lane.b32.xlu0 %v1631, 25
  %v1869 = vpop.permute.xlu0 %1868
  %1870 = vrot.lane.b32.xlu0 %v1632, 25
  %v1871 = vpop.permute.xlu0 %1870
  %1872 = vrot.lane.b32.xlu0 %v1633, 25
  %v1873 = vpop.permute.xlu0 %1872
  %1874 = vrot.lane.b32.xlu0 %v1634, 25
  %v1875 = vpop.permute.xlu0 %1874
  %1876 = vrot.lane.b32.xlu0 %v1635, 25
  %v1877 = vpop.permute.xlu0 %1876
  %1878 = vrot.lane.b32.xlu0 %v1636, 25
  %v1879 = vpop.permute.xlu0 %1878
  %1880 = vrot.lane.b32.xlu0 %v1637, 25
  %v1881 = vpop.permute.xlu0 %1880
  %1882 = vrot.lane.b32.xlu0 %v1638, 25
  %v1883 = vpop.permute.xlu0 %1882
  %1884 = vrot.lane.b32.xlu0 %v1639, 25
  %v1885 = vpop.permute.xlu0 %1884
  %1886 = vrot.lane.b32.xlu0 %v1640, 25
  %v1887 = vpop.permute.xlu0 %1886
  %1888 = vrot.lane.b32.xlu0 %v1641, 25
  %v1889 = vpop.permute.xlu0 %1888
  %1890 = vrot.lane.b32.xlu0 %v1642, 25
  %v1891 = vpop.permute.xlu0 %1890
  %1892 = vrot.lane.b32.xlu0 %v1643, 25
  %v1893 = vpop.permute.xlu0 %1892
  %1894 = vrot.lane.b32.xlu0 %v1644, 25
  %v1895 = vpop.permute.xlu0 %1894
  %1896 = vrot.lane.b32.xlu0 %v1645, 25
  %v1897 = vpop.permute.xlu0 %1896
  %1898 = vrot.lane.b32.xlu0 %v1646, 25
  %v1899 = vpop.permute.xlu0 %1898
  %vm1900 = vcmask 203776
  %v1901 = vsel %vm1900, %v1853, %v1855
  %v1902 = vsel %vm1900, %v1855, %v1857
  %v1903 = vsel %vm1900, %v1857, %v1859
  %v1904 = vsel %vm1900, %v1859, %v1861
  %v1905 = vsel %vm1900, %v1861, %v1863
  %v1906 = vsel %vm1900, %v1865, %v1867
  %v1907 = vsel %vm1900, %v1867, %v1869
  %v1908 = vsel %vm1900, %v1869, %v1871
  %v1909 = vsel %vm1900, %v1871, %v1873
  %v1910 = vsel %vm1900, %v1873, %v1875
  %v1911 = vsel %vm1900, %v1877, %v1879
  %v1912 = vsel %vm1900, %v1879, %v1881
  %v1913 = vsel %vm1900, %v1881, %v1883
  %v1914 = vsel %vm1900, %v1883, %v1885
  %v1915 = vsel %vm1900, %v1885, %v1887
  %v1916 = vsel %vm1900, %v1889, %v1891
  %v1917 = vsel %vm1900, %v1891, %v1893
  %v1918 = vsel %vm1900, %v1893, %v1895
  %v1919 = vsel %vm1900, %v1895, %v1897
  %v1920 = vsel %vm1900, %v1897, %v1899
  %vm1941 = vcmask 523264
  %v1943 = vsel %vm1941, %v1822, 0
  %v1946 = vsel %vm1941, %v1823, 0
  %v1949 = vsel %vm1941, %v1824, 0
  %v1952 = vsel %vm1941, %v1825, 0
  %v1955 = vsel %vm1941, %v1826, 0
  %v1958 = vsel %vm1941, %v1827, 0
  %1960 = vmatprep.subr.bf16.mxu0 %v1902
  %1961 = vmatpush1.bf16.msra.mxu0 %v1901
  %1962 = vmatprep.subr.bf16.mxu0 %v1907
  %1963 = vmatpush1.bf16.msra.mxu0 %v1906
  %1964 = vmatprep.subr.bf16.mxu0 %v1912
  %1965 = vmatpush1.bf16.msra.mxu0 %v1911
  %1966 = vmatprep.subr.bf16.mxu0 %v1917
  %1967 = vmatpush1.bf16.msra.mxu0 %v1916
  %1968 = vmatprep.subr.bf16.mxu0 0
  %1969 = vmatpush1.bf16.msra.mxu0 0
  %1970 = vmatprep.subr.bf16.mxu0 0
  %1971 = vmatpush1.bf16.msra.mxu0 0
  %1972 = vmatprep.subr.bf16.mxu0 0
  %1973 = vmatpush1.bf16.msra.mxu0 0
  %1974 = vmatprep.subr.bf16.mxu0 0
  %1975 = vmatpush1.bf16.msra.mxu0 0
  %1976 = vmatprep.subr.bf16.mxu0 0
  %1977 = vmatpush1.bf16.msra.mxu0 0
  %1978 = vmatprep.subr.bf16.mxu0 0
  %1979 = vmatpush1.bf16.msra.mxu0 0
  %1980 = vmatprep.subr.bf16.mxu0 0
  %1981 = vmatpush1.bf16.msra.mxu0 0
  %1982 = vmatprep.subr.bf16.mxu0 0
  %1983 = vmatpush1.bf16.msra.mxu0 0
  %1984 = vmatprep.subr.bf16.mxu0 0
  %1985 = vmatpush1.bf16.msra.mxu0 0
  %1986 = vmatprep.subr.bf16.mxu0 0
  %1987 = vmatpush1.bf16.msra.mxu0 0
  %1988 = vmatprep.subr.bf16.mxu0 0
  %1989 = vmatpush1.bf16.msra.mxu0 0
  %1990 = vmatprep.subr.bf16.mxu0 0
  %1991 = vmatpush1.bf16.msra.mxu0 0
  %1992 = vmatprep.mubr.bf16.mxu0 0
  %1993 = vmatmul.mubr.bf16.gmra.mrb[0].mxu0 %v1943
  %v1994 = vpop.f32.mrb[0].mxu0
  %v1995 = vadd.f32 0.0, %v1994
  %v1996 = vpop.f32.mrb[0].mxu0
  %v1997 = vadd.f32 0.0, %v1996
  %v1998 = vpop.f32.mrb[0].mxu0
  %v1999 = vadd.f32 0.0, %v1998
  %v2000 = vpop.f32.mrb[0].mxu0
  %v2001 = vadd.f32 0.0, %v2000
  %2002 = vmatprep.mubr.bf16.mxu0 0
  %2003 = vmatmul.mubr.bf16.gmra.mrb[0].mxu0 %v1946
  %v2004 = vpop.f32.mrb[0].mxu0
  %v2005 = vadd.f32 0.0, %v2004
  %v2006 = vpop.f32.mrb[0].mxu0
  %v2007 = vadd.f32 0.0, %v2006
  %v2008 = vpop.f32.mrb[0].mxu0
  %v2009 = vadd.f32 0.0, %v2008
  %v2010 = vpop.f32.mrb[0].mxu0
  %v2011 = vadd.f32 0.0, %v2010
  %2012 = vmatprep.mubr.bf16.mxu0 0
  %2013 = vmatmul.mubr.bf16.gmra.mrb[0].mxu0 %v1949
  %v2014 = vpop.f32.mrb[0].mxu0
  %v2015 = vadd.f32 0.0, %v2014
  %v2016 = vpop.f32.mrb[0].mxu0
  %v2017 = vadd.f32 0.0, %v2016
  %v2018 = vpop.f32.mrb[0].mxu0
  %v2019 = vadd.f32 0.0, %v2018
  %v2020 = vpop.f32.mrb[0].mxu0
  %v2021 = vadd.f32 0.0, %v2020
  %2022 = vmatprep.mubr.bf16.mxu0 0
  %2023 = vmatmul.mubr.bf16.gmra.mrb[0].mxu0 %v1952
  %v2024 = vpop.f32.mrb[0].mxu0
  %v2025 = vadd.f32 0.0, %v2024
  %v2026 = vpop.f32.mrb[0].mxu0
  %v2027 = vadd.f32 0.0, %v2026
  %v2028 = vpop.f32.mrb[0].mxu0
  %v2029 = vadd.f32 0.0, %v2028
  %v2030 = vpop.f32.mrb[0].mxu0
  %v2031 = vadd.f32 0.0, %v2030
  %2032 = vmatprep.mubr.bf16.mxu0 0
  %2033 = vmatmul.mubr.bf16.gmra.mrb[0].mxu0 %v1955
  %v2034 = vpop.f32.mrb[0].mxu0
  %v2035 = vadd.f32 0.0, %v2034
  %v2036 = vpop.f32.mrb[0].mxu0
  %v2037 = vadd.f32 0.0, %v2036
  %v2038 = vpop.f32.mrb[0].mxu0
  %v2039 = vadd.f32 0.0, %v2038
  %v2040 = vpop.f32.mrb[0].mxu0
  %v2041 = vadd.f32 0.0, %v2040
  %2042 = vmatprep.mubr.bf16.mxu0 0
  %2043 = vmatmul.mubr.bf16.gmra.mrb[0].mxu0 %v1958
  %v2044 = vpop.f32.mrb[0].mxu0
  %v2045 = vadd.f32 0.0, %v2044
  %v2046 = vpop.f32.mrb[0].mxu0
  %v2047 = vadd.f32 0.0, %v2046
  %v2048 = vpop.f32.mrb[0].mxu0
  %v2049 = vadd.f32 0.0, %v2048
  %v2050 = vpop.f32.mrb[0].mxu0
  %v2051 = vadd.f32 0.0, %v2050
  %2052 = vdwg.mxu0
  %2053 = vmatprep.subr.bf16.mxu0 %v1904
  %2054 = vmatpush1.bf16.msra.mxu0 %v1903
  %2055 = vmatprep.subr.bf16.mxu0 %v1909
  %2056 = vmatpush1.bf16.msra.mxu0 %v1908
  %2057 = vmatprep.subr.bf16.mxu0 %v1914
  %2058 = vmatpush1.bf16.msra.mxu0 %v1913
  %2059 = vmatprep.subr.bf16.mxu0 %v1919
  %2060 = vmatpush1.bf16.msra.mxu0 %v1918
  %2061 = vmatprep.subr.bf16.mxu0 0
  %2062 = vmatpush1.bf16.msra.mxu0 0
  %2063 = vmatprep.subr.bf16.mxu0 0
  %2064 = vmatpush1.bf16.msra.mxu0 0
  %2065 = vmatprep.subr.bf16.mxu0 0
  %2066 = vmatpush1.bf16.msra.mxu0 0
  %2067 = vmatprep.subr.bf16.mxu0 0
  %2068 = vmatpush1.bf16.msra.mxu0 0
  %2069 = vmatprep.subr.bf16.mxu0 0
  %2070 = vmatpush1.bf16.msra.mxu0 0
  %2071 = vmatprep.subr.bf16.mxu0 0
  %2072 = vmatpush1.bf16.msra.mxu0 0
  %2073 = vmatprep.subr.bf16.mxu0 0
  %2074 = vmatpush1.bf16.msra.mxu0 0
  %2075 = vmatprep.subr.bf16.mxu0 0
  %2076 = vmatpush1.bf16.msra.mxu0 0
  %2077 = vmatprep.subr.bf16.mxu0 0
  %2078 = vmatpush1.bf16.msra.mxu0 0
  %2079 = vmatprep.subr.bf16.mxu0 0
  %2080 = vmatpush1.bf16.msra.mxu0 0
  %2081 = vmatprep.subr.bf16.mxu0 0
  %2082 = vmatpush1.bf16.msra.mxu0 0
  %2083 = vmatprep.subr.bf16.mxu0 0
  %2084 = vmatpush1.bf16.msra.mxu0 0
  %2085 = vmatprep.mubr.bf16.mxu0 0
  %2086 = vmatmul.mubr.bf16.gmra.mrb[0].mxu0 %v1943
  %v2087 = vpop.f32.mrb[0].mxu0
  %v2088 = vadd.f32 0.0, %v2087
  %v2089 = vpop.f32.mrb[0].mxu0
  %v2090 = vadd.f32 0.0, %v2089
  %v2091 = vpop.f32.mrb[0].mxu0
  %v2092 = vadd.f32 0.0, %v2091
  %v2093 = vpop.f32.mrb[0].mxu0
  %v2094 = vadd.f32 0.0, %v2093
  %2095 = vmatprep.mubr.bf16.mxu0 0
  %2096 = vmatmul.mubr.bf16.gmra.mrb[0].mxu0 %v1946
  %v2097 = vpop.f32.mrb[0].mxu0
  %v2098 = vadd.f32 0.0, %v2097
  %v2099 = vpop.f32.mrb[0].mxu0
  %v2100 = vadd.f32 0.0, %v2099
  %v2101 = vpop.f32.mrb[0].mxu0
  %v2102 = vadd.f32 0.0, %v2101
  %v2103 = vpop.f32.mrb[0].mxu0
  %v2104 = vadd.f32 0.0, %v2103
  %2105 = vmatprep.mubr.bf16.mxu0 0
  %2106 = vmatmul.mubr.bf16.gmra.mrb[0].mxu0 %v1949
  %v2107 = vpop.f32.mrb[0].mxu0
  %v2108 = vadd.f32 0.0, %v2107
  %v2109 = vpop.f32.mrb[0].mxu0
  %v2110 = vadd.f32 0.0, %v2109
  %v2111 = vpop.f32.mrb[0].mxu0
  %v2112 = vadd.f32 0.0, %v2111
  %v2113 = vpop.f32.mrb[0].mxu0
  %v2114 = vadd.f32 0.0, %v2113
  %2115 = vmatprep.mubr.bf16.mxu0 0
  %2116 = vmatmul.mubr.bf16.gmra.mrb[0].mxu0 %v1952
  %v2117 = vpop.f32.mrb[0].mxu0
  %v2118 = vadd.f32 0.0, %v2117
  %v2119 = vpop.f32.mrb[0].mxu0
  %v2120 = vadd.f32 0.0, %v2119
  %v2121 = vpop.f32.mrb[0].mxu0
  %v2122 = vadd.f32 0.0, %v2121
  %v2123 = vpop.f32.mrb[0].mxu0
  %v2124 = vadd.f32 0.0, %v2123
  %2125 = vmatprep.mubr.bf16.mxu0 0
  %2126 = vmatmul.mubr.bf16.gmra.mrb[0].mxu0 %v1955
  %v2127 = vpop.f32.mrb[0].mxu0
  %v2128 = vadd.f32 0.0, %v2127
  %v2129 = vpop.f32.mrb[0].mxu0
  %v2130 = vadd.f32 0.0, %v2129
  %v2131 = vpop.f32.mrb[0].mxu0
  %v2132 = vadd.f32 0.0, %v2131
  %v2133 = vpop.f32.mrb[0].mxu0
  %v2134 = vadd.f32 0.0, %v2133
  %2135 = vmatprep.mubr.bf16.mxu0 0
  %2136 = vmatmul.mubr.bf16.gmra.mrb[0].mxu0 %v1958
  %v2137 = vpop.f32.mrb[0].mxu0
  %v2138 = vadd.f32 0.0, %v2137
  %v2139 = vpop.f32.mrb[0].mxu0
  %v2140 = vadd.f32 0.0, %v2139
  %v2141 = vpop.f32.mrb[0].mxu0
  %v2142 = vadd.f32 0.0, %v2141
  %v2143 = vpop.f32.mrb[0].mxu0
  %v2144 = vadd.f32 0.0, %v2143
  %2145 = vdwg.mxu0
  %2146 = vmatprep.subr.bf16.mxu0 0
  %2147 = vmatpush1.bf16.msra.mxu0 %v1905
  %2148 = vmatprep.subr.bf16.mxu0 0
  %2149 = vmatpush1.bf16.msra.mxu0 %v1910
  %2150 = vmatprep.subr.bf16.mxu0 0
  %2151 = vmatpush1.bf16.msra.mxu0 %v1915
  %2152 = vmatprep.subr.bf16.mxu0 0
  %2153 = vmatpush1.bf16.msra.mxu0 %v1920
  %2154 = vmatprep.subr.bf16.mxu0 0
  %2155 = vmatpush1.bf16.msra.mxu0 0
  %2156 = vmatprep.subr.bf16.mxu0 0
  %2157 = vmatpush1.bf16.msra.mxu0 0
  %2158 = vmatprep.subr.bf16.mxu0 0
  %2159 = vmatpush1.bf16.msra.mxu0 0
  %2160 = vmatprep.subr.bf16.mxu0 0
  %2161 = vmatpush1.bf16.msra.mxu0 0
  %2162 = vmatprep.subr.bf16.mxu0 0
  %2163 = vmatpush1.bf16.msra.mxu0 0
  %2164 = vmatprep.subr.bf16.mxu0 0
  %2165 = vmatpush1.bf16.msra.mxu0 0
  %2166 = vmatprep.subr.bf16.mxu0 0
  %2167 = vmatpush1.bf16.msra.mxu0 0
  %2168 = vmatprep.subr.bf16.mxu0 0
  %2169 = vmatpush1.bf16.msra.mxu0 0
  %2170 = vmatprep.subr.bf16.mxu0 0
  %2171 = vmatpush1.bf16.msra.mxu0 0
  %2172 = vmatprep.subr.bf16.mxu0 0
  %2173 = vmatpush1.bf16.msra.mxu0 0
  %2174 = vmatprep.subr.bf16.mxu0 0
  %2175 = vmatpush1.bf16.msra.mxu0 0
  %2176 = vmatprep.subr.bf16.mxu0 0
  %2177 = vmatpush1.bf16.msra.mxu0 0
  %2178 = vmatprep.mubr.bf16.mxu0 0
  %2179 = vmatmul.mubr.bf16.gmra.mrb[0].mxu0 %v1943
  %v2180 = vpop.f32.mrb[0].mxu0
  %v2181 = vadd.f32 0.0, %v2180
  %v2182 = vpop.f32.mrb[0].mxu0
  %v2183 = vpop.f32.mrb[0].mxu0
  %v2184 = vadd.f32 0.0, %v2183
  %v2185 = vpop.f32.mrb[0].mxu0
  %2186 = vmatprep.mubr.bf16.mxu0 0
  %2187 = vmatmul.mubr.bf16.gmra.mrb[0].mxu0 %v1946
  %v2188 = vpop.f32.mrb[0].mxu0
  %v2189 = vadd.f32 0.0, %v2188
  %v2190 = vpop.f32.mrb[0].mxu0
  %v2191 = vpop.f32.mrb[0].mxu0
  %v2192 = vadd.f32 0.0, %v2191
  %v2193 = vpop.f32.mrb[0].mxu0
  %2194 = vmatprep.mubr.bf16.mxu0 0
  %2195 = vmatmul.mubr.bf16.gmra.mrb[0].mxu0 %v1949
  %v2196 = vpop.f32.mrb[0].mxu0
  %v2197 = vadd.f32 0.0, %v2196
  %v2198 = vpop.f32.mrb[0].mxu0
  %v2199 = vpop.f32.mrb[0].mxu0
  %v2200 = vadd.f32 0.0, %v2199
  %v2201 = vpop.f32.mrb[0].mxu0
  %2202 = vmatprep.mubr.bf16.mxu0 0
  %2203 = vmatmul.mubr.bf16.gmra.mrb[0].mxu0 %v1952
  %v2204 = vpop.f32.mrb[0].mxu0
  %v2205 = vadd.f32 0.0, %v2204
  %v2206 = vpop.f32.mrb[0].mxu0
  %v2207 = vpop.f32.mrb[0].mxu0
  %v2208 = vadd.f32 0.0, %v2207
  %v2209 = vpop.f32.mrb[0].mxu0
  %2210 = vmatprep.mubr.bf16.mxu0 0
  %2211 = vmatmul.mubr.bf16.gmra.mrb[0].mxu0 %v1955
  %v2212 = vpop.f32.mrb[0].mxu0
  %v2213 = vadd.f32 0.0, %v2212
  %v2214 = vpop.f32.mrb[0].mxu0
  %v2215 = vpop.f32.mrb[0].mxu0
  %v2216 = vadd.f32 0.0, %v2215
  %v2217 = vpop.f32.mrb[0].mxu0
  %2218 = vmatprep.mubr.bf16.mxu0 0
  %2219 = vmatmul.mubr.bf16.gmra.mrb[0].mxu0 %v1958
  %v2220 = vpop.f32.mrb[0].mxu0
  %v2221 = vadd.f32 0.0, %v2220
  %v2222 = vpop.f32.mrb[0].mxu0
  %v2223 = vpop.f32.mrb[0].mxu0
  %v2224 = vadd.f32 0.0, %v2223
  %v2225 = vpop.f32.mrb[0].mxu0
  %2226 = vdwg.mxu0
  %v2239 = vunpack.c.l.b16 %v1773
  %v2240 = vunpack.c.l.b16 %v1774
  %v2241 = vunpack.c.l.b16 %v1775
  %v2242 = vunpack.c.l.b16 %v1776
  %v2243 = vunpack.c.l.b16 %v1777
  %v2244 = vunpack.c.l.b16 %v1778
  %v2245 = vunpack.c.l.b16 %v1779
  %v2246 = vunpack.c.l.b16 %v1780
  %v2247 = vunpack.c.l.b16 %v1781
  %v2248 = vunpack.c.l.b16 %v1782
  %v2249 = vunpack.c.l.b16 %v1783
  %v2250 = vunpack.c.l.b16 %v1784
  %v2251 = vpack.c.b16 %v2240, %v2239
  %v2252 = vpack.c.b16 %v2242, %v2241
  %v2253 = vpack.c.b16 %v2244, %v2243
  %v2254 = vpack.c.b16 %v2246, %v2245
  %v2255 = vpack.c.b16 %v2248, %v2247
  %v2256 = vpack.c.b16 %v2250, %v2249
  %2281 = vrot.lane.b32.xlu0 %v1749, 26
  %v2282 = vpop.permute.xlu0 %2281
  %2283 = vrot.lane.b32.xlu0 %v1750, 26
  %v2284 = vpop.permute.xlu0 %2283
  %2285 = vrot.lane.b32.xlu0 %v1751, 26
  %v2286 = vpop.permute.xlu0 %2285
  %2287 = vrot.lane.b32.xlu0 %v1752, 26
  %v2288 = vpop.permute.xlu0 %2287
  %2289 = vrot.lane.b32.xlu0 %v1753, 26
  %v2290 = vpop.permute.xlu0 %2289
  %2291 = vrot.lane.b32.xlu0 %v1754, 26
  %v2292 = vpop.permute.xlu0 %2291
  %2293 = vrot.lane.b32.xlu0 %v1755, 26
  %v2294 = vpop.permute.xlu0 %2293
  %2295 = vrot.lane.b32.xlu0 %v1756, 26
  %v2296 = vpop.permute.xlu0 %2295
  %2297 = vrot.lane.b32.xlu0 %v1757, 26
  %v2298 = vpop.permute.xlu0 %2297
  %2299 = vrot.lane.b32.xlu0 %v1758, 26
  %v2300 = vpop.permute.xlu0 %2299
  %2301 = vrot.lane.b32.xlu0 %v1759, 26
  %v2302 = vpop.permute.xlu0 %2301
  %2303 = vrot.lane.b32.xlu0 %v1760, 26
  %v2304 = vpop.permute.xlu0 %2303
  %2305 = vrot.lane.b32.xlu0 %v1761, 26
  %v2306 = vpop.permute.xlu0 %2305
  %2307 = vrot.lane.b32.xlu0 %v1762, 26
  %v2308 = vpop.permute.xlu0 %2307
  %2309 = vrot.lane.b32.xlu0 %v1763, 26
  %v2310 = vpop.permute.xlu0 %2309
  %2311 = vrot.lane.b32.xlu0 %v1764, 26
  %v2312 = vpop.permute.xlu0 %2311
  %2313 = vrot.lane.b32.xlu0 %v1765, 26
  %v2314 = vpop.permute.xlu0 %2313
  %2315 = vrot.lane.b32.xlu0 %v1766, 26
  %v2316 = vpop.permute.xlu0 %2315
  %2317 = vrot.lane.b32.xlu0 %v1767, 26
  %v2318 = vpop.permute.xlu0 %2317
  %2319 = vrot.lane.b32.xlu0 %v1768, 26
  %v2320 = vpop.permute.xlu0 %2319
  %2321 = vrot.lane.b32.xlu0 %v1769, 26
  %v2322 = vpop.permute.xlu0 %2321
  %2323 = vrot.lane.b32.xlu0 %v1770, 26
  %v2324 = vpop.permute.xlu0 %2323
  %2325 = vrot.lane.b32.xlu0 %v1771, 26
  %v2326 = vpop.permute.xlu0 %2325
  %2327 = vrot.lane.b32.xlu0 %v1772, 26
  %v2328 = vpop.permute.xlu0 %2327
  %vm2329 = vcmask 211968
  %v2330 = vsel %vm2329, %v2282, %v2284
  %v2331 = vsel %vm2329, %v2284, %v2286
  %v2332 = vsel %vm2329, %v2286, %v2288
  %v2333 = vsel %vm2329, %v2288, %v2290
  %v2334 = vsel %vm2329, %v2290, %v2292
  %v2335 = vsel %vm2329, %v2294, %v2296
  %v2336 = vsel %vm2329, %v2296, %v2298
  %v2337 = vsel %vm2329, %v2298, %v2300
  %v2338 = vsel %vm2329, %v2300, %v2302
  %v2339 = vsel %vm2329, %v2302, %v2304
  %v2340 = vsel %vm2329, %v2306, %v2308
  %v2341 = vsel %vm2329, %v2308, %v2310
  %v2342 = vsel %vm2329, %v2310, %v2312
  %v2343 = vsel %vm2329, %v2312, %v2314
  %v2344 = vsel %vm2329, %v2314, %v2316
  %v2345 = vsel %vm2329, %v2318, %v2320
  %v2346 = vsel %vm2329, %v2320, %v2322
  %v2347 = vsel %vm2329, %v2322, %v2324
  %v2348 = vsel %vm2329, %v2324, %v2326
  %v2349 = vsel %vm2329, %v2326, %v2328
  %v2371 = vsel %vm1941, %v2251, 0
  %v2374 = vsel %vm1941, %v2252, 0
  %v2377 = vsel %vm1941, %v2253, 0
  %v2380 = vsel %vm1941, %v2254, 0
  %v2383 = vsel %vm1941, %v2255, 0
  %v2386 = vsel %vm1941, %v2256, 0
  %2388 = vmatprep.subr.bf16.mxu0 %v2331
  %2389 = vmatpush1.bf16.msra.mxu0 %v2330
  %2390 = vmatprep.subr.bf16.mxu0 %v2336
  %2391 = vmatpush1.bf16.msra.mxu0 %v2335
  %2392 = vmatprep.subr.bf16.mxu0 %v2341
  %2393 = vmatpush1.bf16.msra.mxu0 %v2340
  %2394 = vmatprep.subr.bf16.mxu0 %v2346
  %2395 = vmatpush1.bf16.msra.mxu0 %v2345
  %2396 = vmatprep.subr.bf16.mxu0 0
  %2397 = vmatpush1.bf16.msra.mxu0 0
  %2398 = vmatprep.subr.bf16.mxu0 0
  %2399 = vmatpush1.bf16.msra.mxu0 0
  %2400 = vmatprep.subr.bf16.mxu0 0
  %2401 = vmatpush1.bf16.msra.mxu0 0
  %2402 = vmatprep.subr.bf16.mxu0 0
  %2403 = vmatpush1.bf16.msra.mxu0 0
  %2404 = vmatprep.subr.bf16.mxu0 0
  %2405 = vmatpush1.bf16.msra.mxu0 0
  %2406 = vmatprep.subr.bf16.mxu0 0
  %2407 = vmatpush1.bf16.msra.mxu0 0
  %2408 = vmatprep.subr.bf16.mxu0 0
  %2409 = vmatpush1.bf16.msra.mxu0 0
  %2410 = vmatprep.subr.bf16.mxu0 0
  %2411 = vmatpush1.bf16.msra.mxu0 0
  %2412 = vmatprep.subr.bf16.mxu0 0
  %2413 = vmatpush1.bf16.msra.mxu0 0
  %2414 = vmatprep.subr.bf16.mxu0 0
  %2415 = vmatpush1.bf16.msra.mxu0 0
  %2416 = vmatprep.subr.bf16.mxu0 0
  %2417 = vmatpush1.bf16.msra.mxu0 0
  %2418 = vmatprep.subr.bf16.mxu0 0
  %2419 = vmatpush1.bf16.msra.mxu0 0
  %2420 = vmatprep.mubr.bf16.mxu0 0
  %2421 = vmatmul.mubr.bf16.gmra.mrb[0].mxu0 %v2371
  %v2422 = vpop.f32.mrb[0].mxu0
  %v2423 = vadd.f32 %v1995, %v2422
  %v2424 = vpop.f32.mrb[0].mxu0
  %v2425 = vadd.f32 %v1997, %v2424
  %v2426 = vpop.f32.mrb[0].mxu0
  %v2427 = vadd.f32 %v1999, %v2426
  %v2428 = vpop.f32.mrb[0].mxu0
  %v2429 = vadd.f32 %v2001, %v2428
  %2430 = vmatprep.mubr.bf16.mxu0 0
  %2431 = vmatmul.mubr.bf16.gmra.mrb[0].mxu0 %v2374
  %v2432 = vpop.f32.mrb[0].mxu0
  %v2433 = vadd.f32 %v2005, %v2432
  %v2434 = vpop.f32.mrb[0].mxu0
  %v2435 = vadd.f32 %v2007, %v2434
  %v2436 = vpop.f32.mrb[0].mxu0
  %v2437 = vadd.f32 %v2009, %v2436
  %v2438 = vpop.f32.mrb[0].mxu0
  %v2439 = vadd.f32 %v2011, %v2438
  %2440 = vmatprep.mubr.bf16.mxu0 0
  %2441 = vmatmul.mubr.bf16.gmra.mrb[0].mxu0 %v2377
  %v2442 = vpop.f32.mrb[0].mxu0
  %v2443 = vadd.f32 %v2015, %v2442
  %v2444 = vpop.f32.mrb[0].mxu0
  %v2445 = vadd.f32 %v2017, %v2444
  %v2446 = vpop.f32.mrb[0].mxu0
  %v2447 = vadd.f32 %v2019, %v2446
  %v2448 = vpop.f32.mrb[0].mxu0
  %v2449 = vadd.f32 %v2021, %v2448
  %2450 = vmatprep.mubr.bf16.mxu0 0
  %2451 = vmatmul.mubr.bf16.gmra.mrb[0].mxu0 %v2380
  %v2452 = vpop.f32.mrb[0].mxu0
  %v2453 = vadd.f32 %v2025, %v2452
  %v2454 = vpop.f32.mrb[0].mxu0
  %v2455 = vadd.f32 %v2027, %v2454
  %v2456 = vpop.f32.mrb[0].mxu0
  %v2457 = vadd.f32 %v2029, %v2456
  %v2458 = vpop.f32.mrb[0].mxu0
  %v2459 = vadd.f32 %v2031, %v2458
  %2460 = vmatprep.mubr.bf16.mxu0 0
  %2461 = vmatmul.mubr.bf16.gmra.mrb[0].mxu0 %v2383
  %v2462 = vpop.f32.mrb[0].mxu0
  %v2463 = vadd.f32 %v2035, %v2462
  %v2464 = vpop.f32.mrb[0].mxu0
  %v2465 = vadd.f32 %v2037, %v2464
  %v2466 = vpop.f32.mrb[0].mxu0
  %v2467 = vadd.f32 %v2039, %v2466
  %v2468 = vpop.f32.mrb[0].mxu0
  %v2469 = vadd.f32 %v2041, %v2468
  %2470 = vmatprep.mubr.bf16.mxu0 0
  %2471 = vmatmul.mubr.bf16.gmra.mrb[0].mxu0 %v2386
  %v2472 = vpop.f32.mrb[0].mxu0
  %v2473 = vadd.f32 %v2045, %v2472
  %v2474 = vpop.f32.mrb[0].mxu0
  %v2475 = vadd.f32 %v2047, %v2474
  %v2476 = vpop.f32.mrb[0].mxu0
  %v2477 = vadd.f32 %v2049, %v2476
  %v2478 = vpop.f32.mrb[0].mxu0
  %v2479 = vadd.f32 %v2051, %v2478
  %2480 = vdwg.mxu0
  %2481 = vmatprep.subr.bf16.mxu0 %v2333
  %2482 = vmatpush1.bf16.msra.mxu0 %v2332
  %2483 = vmatprep.subr.bf16.mxu0 %v2338
  %2484 = vmatpush1.bf16.msra.mxu0 %v2337
  %2485 = vmatprep.subr.bf16.mxu0 %v2343
  %2486 = vmatpush1.bf16.msra.mxu0 %v2342
  %2487 = vmatprep.subr.bf16.mxu0 %v2348
  %2488 = vmatpush1.bf16.msra.mxu0 %v2347
  %2489 = vmatprep.subr.bf16.mxu0 0
  %2490 = vmatpush1.bf16.msra.mxu0 0
  %2491 = vmatprep.subr.bf16.mxu0 0
  %2492 = vmatpush1.bf16.msra.mxu0 0
  %2493 = vmatprep.subr.bf16.mxu0 0
  %2494 = vmatpush1.bf16.msra.mxu0 0
  %2495 = vmatprep.subr.bf16.mxu0 0
  %2496 = vmatpush1.bf16.msra.mxu0 0
  %2497 = vmatprep.subr.bf16.mxu0 0
  %2498 = vmatpush1.bf16.msra.mxu0 0
  %2499 = vmatprep.subr.bf16.mxu0 0
  %2500 = vmatpush1.bf16.msra.mxu0 0
  %2501 = vmatprep.subr.bf16.mxu0 0
  %2502 = vmatpush1.bf16.msra.mxu0 0
  %2503 = vmatprep.subr.bf16.mxu0 0
  %2504 = vmatpush1.bf16.msra.mxu0 0
  %2505 = vmatprep.subr.bf16.mxu0 0
  %2506 = vmatpush1.bf16.msra.mxu0 0
  %2507 = vmatprep.subr.bf16.mxu0 0
  %2508 = vmatpush1.bf16.msra.mxu0 0
  %2509 = vmatprep.subr.bf16.mxu0 0
  %2510 = vmatpush1.bf16.msra.mxu0 0
  %2511 = vmatprep.subr.bf16.mxu0 0
  %2512 = vmatpush1.bf16.msra.mxu0 0
  %2513 = vmatprep.mubr.bf16.mxu0 0
  %2514 = vmatmul.mubr.bf16.gmra.mrb[0].mxu0 %v2371
  %v2515 = vpop.f32.mrb[0].mxu0
  %v2516 = vadd.f32 %v2088, %v2515
  %v2517 = vpop.f32.mrb[0].mxu0
  %v2518 = vadd.f32 %v2090, %v2517
  %v2519 = vpop.f32.mrb[0].mxu0
  %v2520 = vadd.f32 %v2092, %v2519
  %v2521 = vpop.f32.mrb[0].mxu0
  %v2522 = vadd.f32 %v2094, %v2521
  %2523 = vmatprep.mubr.bf16.mxu0 0
  %2524 = vmatmul.mubr.bf16.gmra.mrb[0].mxu0 %v2374
  %v2525 = vpop.f32.mrb[0].mxu0
  %v2526 = vadd.f32 %v2098, %v2525
  %v2527 = vpop.f32.mrb[0].mxu0
  %v2528 = vadd.f32 %v2100, %v2527
  %v2529 = vpop.f32.mrb[0].mxu0
  %v2530 = vadd.f32 %v2102, %v2529
  %v2531 = vpop.f32.mrb[0].mxu0
  %v2532 = vadd.f32 %v2104, %v2531
  %2533 = vmatprep.mubr.bf16.mxu0 0
  %2534 = vmatmul.mubr.bf16.gmra.mrb[0].mxu0 %v2377
  %v2535 = vpop.f32.mrb[0].mxu0
  %v2536 = vadd.f32 %v2108, %v2535
  %v2537 = vpop.f32.mrb[0].mxu0
  %v2538 = vadd.f32 %v2110, %v2537
  %v2539 = vpop.f32.mrb[0].mxu0
  %v2540 = vadd.f32 %v2112, %v2539
  %v2541 = vpop.f32.mrb[0].mxu0
  %v2542 = vadd.f32 %v2114, %v2541
  %2543 = vmatprep.mubr.bf16.mxu0 0
  %2544 = vmatmul.mubr.bf16.gmra.mrb[0].mxu0 %v2380
  %v2545 = vpop.f32.mrb[0].mxu0
  %v2546 = vadd.f32 %v2118, %v2545
  %v2547 = vpop.f32.mrb[0].mxu0
  %v2548 = vadd.f32 %v2120, %v2547
  %v2549 = vpop.f32.mrb[0].mxu0
  %v2550 = vadd.f32 %v2122, %v2549
  %v2551 = vpop.f32.mrb[0].mxu0
  %v2552 = vadd.f32 %v2124, %v2551
  %2553 = vmatprep.mubr.bf16.mxu0 0
  %2554 = vmatmul.mubr.bf16.gmra.mrb[0].mxu0 %v2383
  %v2555 = vpop.f32.mrb[0].mxu0
  %v2556 = vadd.f32 %v2128, %v2555
  %v2557 = vpop.f32.mrb[0].mxu0
  %v2558 = vadd.f32 %v2130, %v2557
  %v2559 = vpop.f32.mrb[0].mxu0
  %v2560 = vadd.f32 %v2132, %v2559
  %v2561 = vpop.f32.mrb[0].mxu0
  %v2562 = vadd.f32 %v2134, %v2561
  %2563 = vmatprep.mubr.bf16.mxu0 0
  %2564 = vmatmul.mubr.bf16.gmra.mrb[0].mxu0 %v2386
  %v2565 = vpop.f32.mrb[0].mxu0
  %v2566 = vadd.f32 %v2138, %v2565
  %v2567 = vpop.f32.mrb[0].mxu0
  %v2568 = vadd.f32 %v2140, %v2567
  %v2569 = vpop.f32.mrb[0].mxu0
  %v2570 = vadd.f32 %v2142, %v2569
  %v2571 = vpop.f32.mrb[0].mxu0
  %v2572 = vadd.f32 %v2144, %v2571
  %2573 = vdwg.mxu0
  %2574 = vmatprep.subr.bf16.mxu0 0
  %2575 = vmatpush1.bf16.msra.mxu0 %v2334
  %2576 = vmatprep.subr.bf16.mxu0 0
  %2577 = vmatpush1.bf16.msra.mxu0 %v2339
  %2578 = vmatprep.subr.bf16.mxu0 0
  %2579 = vmatpush1.bf16.msra.mxu0 %v2344
  %2580 = vmatprep.subr.bf16.mxu0 0
  %2581 = vmatpush1.bf16.msra.mxu0 %v2349
  %2582 = vmatprep.subr.bf16.mxu0 0
  %2583 = vmatpush1.bf16.msra.mxu0 0
  %2584 = vmatprep.subr.bf16.mxu0 0
  %2585 = vmatpush1.bf16.msra.mxu0 0
  %2586 = vmatprep.subr.bf16.mxu0 0
  %2587 = vmatpush1.bf16.msra.mxu0 0
  %2588 = vmatprep.subr.bf16.mxu0 0
  %2589 = vmatpush1.bf16.msra.mxu0 0
  %2590 = vmatprep.subr.bf16.mxu0 0
  %2591 = vmatpush1.bf16.msra.mxu0 0
  %2592 = vmatprep.subr.bf16.mxu0 0
  %2593 = vmatpush1.bf16.msra.mxu0 0
  %2594 = vmatprep.subr.bf16.mxu0 0
  %2595 = vmatpush1.bf16.msra.mxu0 0
  %2596 = vmatprep.subr.bf16.mxu0 0
  %2597 = vmatpush1.bf16.msra.mxu0 0
  %2598 = vmatprep.subr.bf16.mxu0 0
  %2599 = vmatpush1.bf16.msra.mxu0 0
  %2600 = vmatprep.subr.bf16.mxu0 0
  %2601 = vmatpush1.bf16.msra.mxu0 0
  %2602 = vmatprep.subr.bf16.mxu0 0
  %2603 = vmatpush1.bf16.msra.mxu0 0
  %2604 = vmatprep.subr.bf16.mxu0 0
  %2605 = vmatpush1.bf16.msra.mxu0 0
  %2606 = vmatprep.mubr.bf16.mxu0 0
  %2607 = vmatmul.mubr.bf16.gmra.mrb[0].mxu0 %v2371
  %v2608 = vpop.f32.mrb[0].mxu0
  %v2609 = vadd.f32 %v2181, %v2608
  %v2610 = vpop.f32.mrb[0].mxu0
  %v2611 = vpop.f32.mrb[0].mxu0
  %v2612 = vadd.f32 %v2184, %v2611
  %v2613 = vpop.f32.mrb[0].mxu0
  %2614 = vmatprep.mubr.bf16.mxu0 0
  %2615 = vmatmul.mubr.bf16.gmra.mrb[0].mxu0 %v2374
  %v2616 = vpop.f32.mrb[0].mxu0
  %v2617 = vadd.f32 %v2189, %v2616
  %v2618 = vpop.f32.mrb[0].mxu0
  %v2619 = vpop.f32.mrb[0].mxu0
  %v2620 = vadd.f32 %v2192, %v2619
  %v2621 = vpop.f32.mrb[0].mxu0
  %2622 = vmatprep.mubr.bf16.mxu0 0
  %2623 = vmatmul.mubr.bf16.gmra.mrb[0].mxu0 %v2377
  %v2624 = vpop.f32.mrb[0].mxu0
  %v2625 = vadd.f32 %v2197, %v2624
  %v2626 = vpop.f32.mrb[0].mxu0
  %v2627 = vpop.f32.mrb[0].mxu0
  %v2628 = vadd.f32 %v2200, %v2627
  %v2629 = vpop.f32.mrb[0].mxu0
  %2630 = vmatprep.mubr.bf16.mxu0 0
  %2631 = vmatmul.mubr.bf16.gmra.mrb[0].mxu0 %v2380
  %v2632 = vpop.f32.mrb[0].mxu0
  %v2633 = vadd.f32 %v2205, %v2632
  %v2634 = vpop.f32.mrb[0].mxu0
  %v2635 = vpop.f32.mrb[0].mxu0
  %v2636 = vadd.f32 %v2208, %v2635
  %v2637 = vpop.f32.mrb[0].mxu0
  %2638 = vmatprep.mubr.bf16.mxu0 0
  %2639 = vmatmul.mubr.bf16.gmra.mrb[0].mxu0 %v2383
  %v2640 = vpop.f32.mrb[0].mxu0
  %v2641 = vadd.f32 %v2213, %v2640
  %v2642 = vpop.f32.mrb[0].mxu0
  %v2643 = vpop.f32.mrb[0].mxu0
  %v2644 = vadd.f32 %v2216, %v2643
  %v2645 = vpop.f32.mrb[0].mxu0
  %2646 = vmatprep.mubr.bf16.mxu0 0
  %2647 = vmatmul.mubr.bf16.gmra.mrb[0].mxu0 %v2386
  %v2648 = vpop.f32.mrb[0].mxu0
  %v2649 = vadd.f32 %v2221, %v2648
  %v2650 = vpop.f32.mrb[0].mxu0
  %v2651 = vpop.f32.mrb[0].mxu0
  %v2652 = vadd.f32 %v2224, %v2651
  %v2653 = vpop.f32.mrb[0].mxu0
  %2654 = vdwg.mxu0
  %v2655 = vld [vmem:[%s6] sm:$0x1f]
  %v2657 = vcombine.high %v2655, %v2655
  %v2659 = vunpack.c.l.s4 1966171168
  %v2660 = vunpack.c.0.s8 %v2659
  %v2661 = vlaneseq
  %v2662 = vshrl.u32 %v2661, 7
  %v2663 = vsub.s32 %v2660, %v2662
  %v2664 = vrot.slane %v2655, %v2663
  %v2666 = vunpack.c.l.s4 1966171168
  %v2667 = vunpack.c.0.s8 %v2666
  %v2668 = vlaneseq
  %v2669 = vshrl.u32 %v2668, 7
  %v2670 = vsub.s32 %v2667, %v2669
  %v2671 = vrot.slane %v2657, %v2670
  %v2672 = vcombine.high %v2664, %v2664
  %v2674 = vunpack.c.l.s4 1966171168
  %v2675 = vunpack.c.0.s8 %v2674
  %v2676 = vlaneseq
  %v2677 = vshrl.u32 %v2676, 7
  %v2678 = vsub.s32 %v2675, %v2677
  %v2679 = vrot.slane %v2664, %v2678
  %v2681 = vunpack.c.l.s4 1966171168
  %v2682 = vunpack.c.0.s8 %v2681
  %v2683 = vlaneseq
  %v2684 = vshrl.u32 %v2683, 7
  %v2685 = vsub.s32 %v2682, %v2684
  %v2686 = vrot.slane %v2671, %v2685
  %v2688 = vunpack.c.l.s4 1966171168
  %v2689 = vunpack.c.0.s8 %v2688
  %v2690 = vlaneseq
  %v2691 = vshrl.u32 %v2690, 7
  %v2692 = vsub.s32 %v2689, %v2691
  %v2693 = vrot.slane %v2672, %v2692
  %v2694 = vcombine.high %v2679, %v2679
  %v2695 = vcombine.high %v2693, %v2693
  %v2697 = vpack.i.b16 %v2679, %v2679
  %v2699 = vlaneseq
  %v2700 = vshrl.u32 %v2699, 7
  %v2701 = vsub.s32 0, %v2700
  %v2702 = vrot.slane %v2697, %v2701
  %v2704 = vpack.i.b16 %v2693, %v2693
  %v2706 = vlaneseq
  %v2707 = vshrl.u32 %v2706, 7
  %v2708 = vsub.s32 0, %v2707
  %v2709 = vrot.slane %v2704, %v2708
  %v2711 = vpack.i.b16 %v2694, %v2694
  %v2713 = vlaneseq
  %v2714 = vshrl.u32 %v2713, 7
  %v2715 = vsub.s32 0, %v2714
  %v2716 = vrot.slane %v2711, %v2715
  %v2718 = vpack.i.b16 %v2695, %v2695
  %v2720 = vlaneseq
  %v2721 = vshrl.u32 %v2720, 7
  %v2722 = vsub.s32 0, %v2721
  %v2723 = vrot.slane %v2718, %v2722
  %v2725 = vpack.i.b16 %v2686, %v2686
  %v2727 = vlaneseq
  %v2728 = vshrl.u32 %v2727, 7
  %v2729 = vsub.s32 0, %v2728
  %v2730 = vrot.slane %v2725, %v2729
  %2736 = vrot.lane.b32.xlu0 %v2702, 104
  %v2737 = vpop.permute.xlu0 %2736
  %2738 = vrot.lane.b32.xlu0 %v2709, 104
  %v2739 = vpop.permute.xlu0 %2738
  %2740 = vrot.lane.b32.xlu0 %v2716, 104
  %v2741 = vpop.permute.xlu0 %2740
  %2742 = vrot.lane.b32.xlu0 %v2723, 104
  %v2743 = vpop.permute.xlu0 %2742
  %2744 = vrot.lane.b32.xlu0 %v2730, 104
  %v2745 = vpop.permute.xlu0 %2744
  %vm2746 = vcmask 850944
  %v2747 = vsel %vm2746, %v2737, %v2739
  %v2748 = vsel %vm2746, %v2739, %v2741
  %v2749 = vsel %vm2746, %v2741, %v2743
  %v2750 = vsel %vm2746, %v2743, %v2745
  %v2757 = vmul.bf16 %v1623, %v2737
  %v2758 = vmul.bf16 %v1624, %v2747
  %v2759 = vmul.bf16 %v1625, %v2748
  %v2760 = vmul.bf16 %v1626, %v2749
  %v2761 = vmul.bf16 %v1627, %v2750
  %v2762 = vmul.bf16 %v1628, %v2745
  %v2763 = vmul.bf16 %v1629, %v2737
  %v2764 = vmul.bf16 %v1630, %v2747
  %v2765 = vmul.bf16 %v1631, %v2748
  %v2766 = vmul.bf16 %v1632, %v2749
  %v2767 = vmul.bf16 %v1633, %v2750
  %v2768 = vmul.bf16 %v1634, %v2745
  %v2769 = vmul.bf16 %v1635, %v2737
  %v2770 = vmul.bf16 %v1636, %v2747
  %v2771 = vmul.bf16 %v1637, %v2748
  %v2772 = vmul.bf16 %v1638, %v2749
  %v2773 = vmul.bf16 %v1639, %v2750
  %v2774 = vmul.bf16 %v1640, %v2745
  %v2775 = vmul.bf16 %v1641, %v2737
  %v2776 = vmul.bf16 %v1642, %v2747
  %v2777 = vmul.bf16 %v1643, %v2748
  %v2778 = vmul.bf16 %v1644, %v2749
  %v2779 = vmul.bf16 %v1645, %v2750
  %v2780 = vmul.bf16 %v1646, %v2745
  %s2781 = scalar_lea.vmem %s2, 96
  %v2782 = vld [vmem:[%s2781] sm:$0xf]
  %v2783 = vld [vmem:[%s2781 + $0x4] sm:$0xf]
  %v2784 = vld [vmem:[%s2781 + $0x8] sm:$0xf]
  %v2785 = vld [vmem:[%s2781 + $0xc] sm:$0xf]
  %v2786 = vld [vmem:[%s2781 + $0x10] sm:$0xf]
  %v2787 = vld [vmem:[%s2781 + $0x14] sm:$0xf]
  %v2788 = vld [vmem:[%s2781 + $0x18] sm:$0xf]
  %v2789 = vld [vmem:[%s2781 + $0x1c] sm:$0xf]
  %v2790 = vld [vmem:[%s2781 + $0x20] sm:$0xf]
  %v2791 = vld [vmem:[%s2781 + $0x24] sm:$0xf]
  %v2792 = vld [vmem:[%s2781 + $0x28] sm:$0xf]
  %v2793 = vld [vmem:[%s2781 + $0x2c] sm:$0xf]
  %v2806 = vunpack.c.l.b16 %v2782
  %v2807 = vunpack.c.l.b16 %v2783
  %v2808 = vunpack.c.l.b16 %v2784
  %v2809 = vunpack.c.l.b16 %v2785
  %v2810 = vunpack.c.l.b16 %v2786
  %v2811 = vunpack.c.l.b16 %v2787
  %v2812 = vunpack.c.l.b16 %v2788
  %v2813 = vunpack.c.l.b16 %v2789
  %v2814 = vunpack.c.l.b16 %v2790
  %v2815 = vunpack.c.l.b16 %v2791
  %v2816 = vunpack.c.l.b16 %v2792
  %v2817 = vunpack.c.l.b16 %v2793
  %v2818 = vpack.c.b16 %v2807, %v2806
  %v2819 = vpack.c.b16 %v2809, %v2808
  %v2820 = vpack.c.b16 %v2811, %v2810
  %v2821 = vpack.c.b16 %v2813, %v2812
  %v2822 = vpack.c.b16 %v2815, %v2814
  %v2823 = vpack.c.b16 %v2817, %v2816
  %2848 = vrot.lane.b32.xlu0 %v2757, 24
  %v2849 = vpop.permute.xlu0 %2848
  %2850 = vrot.lane.b32.xlu0 %v2758, 24
  %v2851 = vpop.permute.xlu0 %2850
  %2852 = vrot.lane.b32.xlu0 %v2759, 24
  %v2853 = vpop.permute.xlu0 %2852
  %2854 = vrot.lane.b32.xlu0 %v2760, 24
  %v2855 = vpop.permute.xlu0 %2854
  %2856 = vrot.lane.b32.xlu0 %v2761, 24
  %v2857 = vpop.permute.xlu0 %2856
  %2858 = vrot.lane.b32.xlu0 %v2762, 24
  %v2859 = vpop.permute.xlu0 %2858
  %2860 = vrot.lane.b32.xlu0 %v2763, 24
  %v2861 = vpop.permute.xlu0 %2860
  %2862 = vrot.lane.b32.xlu0 %v2764, 24
  %v2863 = vpop.permute.xlu0 %2862
  %2864 = vrot.lane.b32.xlu0 %v2765, 24
  %v2865 = vpop.permute.xlu0 %2864
  %2866 = vrot.lane.b32.xlu0 %v2766, 24
  %v2867 = vpop.permute.xlu0 %2866
  %2868 = vrot.lane.b32.xlu0 %v2767, 24
  %v2869 = vpop.permute.xlu0 %2868
  %2870 = vrot.lane.b32.xlu0 %v2768, 24
  %v2871 = vpop.permute.xlu0 %2870
  %2872 = vrot.lane.b32.xlu0 %v2769, 24
  %v2873 = vpop.permute.xlu0 %2872
  %2874 = vrot.lane.b32.xlu0 %v2770, 24
  %v2875 = vpop.permute.xlu0 %2874
  %2876 = vrot.lane.b32.xlu0 %v2771, 24
  %v2877 = vpop.permute.xlu0 %2876
  %2878 = vrot.lane.b32.xlu0 %v2772, 24
  %v2879 = vpop.permute.xlu0 %2878
  %2880 = vrot.lane.b32.xlu0 %v2773, 24
  %v2881 = vpop.permute.xlu0 %2880
  %2882 = vrot.lane.b32.xlu0 %v2774, 24
  %v2883 = vpop.permute.xlu0 %2882
  %2884 = vrot.lane.b32.xlu0 %v2775, 24
  %v2885 = vpop.permute.xlu0 %2884
  %2886 = vrot.lane.b32.xlu0 %v2776, 24
  %v2887 = vpop.permute.xlu0 %2886
  %2888 = vrot.lane.b32.xlu0 %v2777, 24
  %v2889 = vpop.permute.xlu0 %2888
  %2890 = vrot.lane.b32.xlu0 %v2778, 24
  %v2891 = vpop.permute.xlu0 %2890
  %2892 = vrot.lane.b32.xlu0 %v2779, 24
  %v2893 = vpop.permute.xlu0 %2892
  %2894 = vrot.lane.b32.xlu0 %v2780, 24
  %v2895 = vpop.permute.xlu0 %2894
  %vm2896 = vcmask 195584
  %v2897 = vsel %vm2896, %v2849, %v2851
  %v2898 = vsel %vm2896, %v2851, %v2853
  %v2899 = vsel %vm2896, %v2853, %v2855
  %v2900 = vsel %vm2896, %v2855, %v2857
  %v2901 = vsel %vm2896, %v2857, %v2859
  %v2902 = vsel %vm2896, %v2861, %v2863
  %v2903 = vsel %vm2896, %v2863, %v2865
  %v2904 = vsel %vm2896, %v2865, %v2867
  %v2905 = vsel %vm2896, %v2867, %v2869
  %v2906 = vsel %vm2896, %v2869, %v2871
  %v2907 = vsel %vm2896, %v2873, %v2875
  %v2908 = vsel %vm2896, %v2875, %v2877
  %v2909 = vsel %vm2896, %v2877, %v2879
  %v2910 = vsel %vm2896, %v2879, %v2881
  %v2911 = vsel %vm2896, %v2881, %v2883
  %v2912 = vsel %vm2896, %v2885, %v2887
  %v2913 = vsel %vm2896, %v2887, %v2889
  %v2914 = vsel %vm2896, %v2889, %v2891
  %v2915 = vsel %vm2896, %v2891, %v2893
  %v2916 = vsel %vm2896, %v2893, %v2895
  %v2938 = vsel %vm1941, %v2818, 0
  %v2941 = vsel %vm1941, %v2819, 0
  %v2944 = vsel %vm1941, %v2820, 0
  %v2947 = vsel %vm1941, %v2821, 0
  %v2950 = vsel %vm1941, %v2822, 0
  %v2953 = vsel %vm1941, %v2823, 0
  %2955 = vmatprep.subr.bf16.mxu0 %v2898
  %2956 = vmatpush1.bf16.msra.mxu0 %v2897
  %2957 = vmatprep.subr.bf16.mxu0 %v2903
  %2958 = vmatpush1.bf16.msra.mxu0 %v2902
  %2959 = vmatprep.subr.bf16.mxu0 %v2908
  %2960 = vmatpush1.bf16.msra.mxu0 %v2907
  %2961 = vmatprep.subr.bf16.mxu0 %v2913
  %2962 = vmatpush1.bf16.msra.mxu0 %v2912
  %2963 = vmatprep.subr.bf16.mxu0 0
  %2964 = vmatpush1.bf16.msra.mxu0 0
  %2965 = vmatprep.subr.bf16.mxu0 0
  %2966 = vmatpush1.bf16.msra.mxu0 0
  %2967 = vmatprep.subr.bf16.mxu0 0
  %2968 = vmatpush1.bf16.msra.mxu0 0
  %2969 = vmatprep.subr.bf16.mxu0 0
  %2970 = vmatpush1.bf16.msra.mxu0 0
  %2971 = vmatprep.subr.bf16.mxu0 0
  %2972 = vmatpush1.bf16.msra.mxu0 0
  %2973 = vmatprep.subr.bf16.mxu0 0
  %2974 = vmatpush1.bf16.msra.mxu0 0
  %2975 = vmatprep.subr.bf16.mxu0 0
  %2976 = vmatpush1.bf16.msra.mxu0 0
  %2977 = vmatprep.subr.bf16.mxu0 0
  %2978 = vmatpush1.bf16.msra.mxu0 0
  %2979 = vmatprep.subr.bf16.mxu0 0
  %2980 = vmatpush1.bf16.msra.mxu0 0
  %2981 = vmatprep.subr.bf16.mxu0 0
  %2982 = vmatpush1.bf16.msra.mxu0 0
  %2983 = vmatprep.subr.bf16.mxu0 0
  %2984 = vmatpush1.bf16.msra.mxu0 0
  %2985 = vmatprep.subr.bf16.mxu0 0
  %2986 = vmatpush1.bf16.msra.mxu0 0
  %2987 = vmatprep.mubr.bf16.mxu0 0
  %2988 = vmatmul.mubr.bf16.gmra.mrb[0].mxu0 %v2938
  %v2989 = vpop.f32.mrb[0].mxu0
  %v2990 = vadd.f32 0.0, %v2989
  %v2991 = vpop.f32.mrb[0].mxu0
  %v2992 = vadd.f32 0.0, %v2991
  %v2993 = vpop.f32.mrb[0].mxu0
  %v2994 = vadd.f32 0.0, %v2993
  %v2995 = vpop.f32.mrb[0].mxu0
  %v2996 = vadd.f32 0.0, %v2995
  %2997 = vmatprep.mubr.bf16.mxu0 0
  %2998 = vmatmul.mubr.bf16.gmra.mrb[0].mxu0 %v2941
  %v2999 = vpop.f32.mrb[0].mxu0
  %v3000 = vadd.f32 0.0, %v2999
  %v3001 = vpop.f32.mrb[0].mxu0
  %v3002 = vadd.f32 0.0, %v3001
  %v3003 = vpop.f32.mrb[0].mxu0
  %v3004 = vadd.f32 0.0, %v3003
  %v3005 = vpop.f32.mrb[0].mxu0
  %v3006 = vadd.f32 0.0, %v3005
  %3007 = vmatprep.mubr.bf16.mxu0 0
  %3008 = vmatmul.mubr.bf16.gmra.mrb[0].mxu0 %v2944
  %v3009 = vpop.f32.mrb[0].mxu0
  %v3010 = vadd.f32 0.0, %v3009
  %v3011 = vpop.f32.mrb[0].mxu0
  %v3012 = vadd.f32 0.0, %v3011
  %v3013 = vpop.f32.mrb[0].mxu0
  %v3014 = vadd.f32 0.0, %v3013
  %v3015 = vpop.f32.mrb[0].mxu0
  %v3016 = vadd.f32 0.0, %v3015
  %3017 = vmatprep.mubr.bf16.mxu0 0
  %3018 = vmatmul.mubr.bf16.gmra.mrb[0].mxu0 %v2947
  %v3019 = vpop.f32.mrb[0].mxu0
  %v3020 = vadd.f32 0.0, %v3019
  %v3021 = vpop.f32.mrb[0].mxu0
  %v3022 = vadd.f32 0.0, %v3021
  %v3023 = vpop.f32.mrb[0].mxu0
  %v3024 = vadd.f32 0.0, %v3023
  %v3025 = vpop.f32.mrb[0].mxu0
  %v3026 = vadd.f32 0.0, %v3025
  %3027 = vmatprep.mubr.bf16.mxu0 0
  %3028 = vmatmul.mubr.bf16.gmra.mrb[0].mxu0 %v2950
  %v3029 = vpop.f32.mrb[0].mxu0
  %v3030 = vadd.f32 0.0, %v3029
  %v3031 = vpop.f32.mrb[0].mxu0
  %v3032 = vadd.f32 0.0, %v3031
  %v3033 = vpop.f32.mrb[0].mxu0
  %v3034 = vadd.f32 0.0, %v3033
  %v3035 = vpop.f32.mrb[0].mxu0
  %v3036 = vadd.f32 0.0, %v3035
  %3037 = vmatprep.mubr.bf16.mxu0 0
  %3038 = vmatmul.mubr.bf16.gmra.mrb[0].mxu0 %v2953
  %v3039 = vpop.f32.mrb[0].mxu0
  %v3040 = vadd.f32 0.0, %v3039
  %v3041 = vpop.f32.mrb[0].mxu0
  %v3042 = vadd.f32 0.0, %v3041
  %v3043 = vpop.f32.mrb[0].mxu0
  %v3044 = vadd.f32 0.0, %v3043
  %v3045 = vpop.f32.mrb[0].mxu0
  %v3046 = vadd.f32 0.0, %v3045
  %3047 = vdwg.mxu0
  %3048 = vmatprep.subr.bf16.mxu0 %v2900
  %3049 = vmatpush1.bf16.msra.mxu0 %v2899
  %3050 = vmatprep.subr.bf16.mxu0 %v2905
  %3051 = vmatpush1.bf16.msra.mxu0 %v2904
  %3052 = vmatprep.subr.bf16.mxu0 %v2910
  %3053 = vmatpush1.bf16.msra.mxu0 %v2909
  %3054 = vmatprep.subr.bf16.mxu0 %v2915
  %3055 = vmatpush1.bf16.msra.mxu0 %v2914
  %3056 = vmatprep.subr.bf16.mxu0 0
  %3057 = vmatpush1.bf16.msra.mxu0 0
  %3058 = vmatprep.subr.bf16.mxu0 0
  %3059 = vmatpush1.bf16.msra.mxu0 0
  %3060 = vmatprep.subr.bf16.mxu0 0
  %3061 = vmatpush1.bf16.msra.mxu0 0
  %3062 = vmatprep.subr.bf16.mxu0 0
  %3063 = vmatpush1.bf16.msra.mxu0 0
  %3064 = vmatprep.subr.bf16.mxu0 0
  %3065 = vmatpush1.bf16.msra.mxu0 0
  %3066 = vmatprep.subr.bf16.mxu0 0
  %3067 = vmatpush1.bf16.msra.mxu0 0
  %3068 = vmatprep.subr.bf16.mxu0 0
  %3069 = vmatpush1.bf16.msra.mxu0 0
  %3070 = vmatprep.subr.bf16.mxu0 0
  %3071 = vmatpush1.bf16.msra.mxu0 0
  %3072 = vmatprep.subr.bf16.mxu0 0
  %3073 = vmatpush1.bf16.msra.mxu0 0
  %3074 = vmatprep.subr.bf16.mxu0 0
  %3075 = vmatpush1.bf16.msra.mxu0 0
  %3076 = vmatprep.subr.bf16.mxu0 0
  %3077 = vmatpush1.bf16.msra.mxu0 0
  %3078 = vmatprep.subr.bf16.mxu0 0
  %3079 = vmatpush1.bf16.msra.mxu0 0
  %3080 = vmatprep.mubr.bf16.mxu0 0
  %3081 = vmatmul.mubr.bf16.gmra.mrb[0].mxu0 %v2938
  %v3082 = vpop.f32.mrb[0].mxu0
  %v3083 = vadd.f32 0.0, %v3082
  %v3084 = vpop.f32.mrb[0].mxu0
  %v3085 = vadd.f32 0.0, %v3084
  %v3086 = vpop.f32.mrb[0].mxu0
  %v3087 = vadd.f32 0.0, %v3086
  %v3088 = vpop.f32.mrb[0].mxu0
  %v3089 = vadd.f32 0.0, %v3088
  %3090 = vmatprep.mubr.bf16.mxu0 0
  %3091 = vmatmul.mubr.bf16.gmra.mrb[0].mxu0 %v2941
  %v3092 = vpop.f32.mrb[0].mxu0
  %v3093 = vadd.f32 0.0, %v3092
  %v3094 = vpop.f32.mrb[0].mxu0
  %v3095 = vadd.f32 0.0, %v3094
  %v3096 = vpop.f32.mrb[0].mxu0
  %v3097 = vadd.f32 0.0, %v3096
  %v3098 = vpop.f32.mrb[0].mxu0
  %v3099 = vadd.f32 0.0, %v3098
  %3100 = vmatprep.mubr.bf16.mxu0 0
  %3101 = vmatmul.mubr.bf16.gmra.mrb[0].mxu0 %v2944
  %v3102 = vpop.f32.mrb[0].mxu0
  %v3103 = vadd.f32 0.0, %v3102
  %v3104 = vpop.f32.mrb[0].mxu0
  %v3105 = vadd.f32 0.0, %v3104
  %v3106 = vpop.f32.mrb[0].mxu0
  %v3107 = vadd.f32 0.0, %v3106
  %v3108 = vpop.f32.mrb[0].mxu0
  %v3109 = vadd.f32 0.0, %v3108
  %3110 = vmatprep.mubr.bf16.mxu0 0
  %3111 = vmatmul.mubr.bf16.gmra.mrb[0].mxu0 %v2947
  %v3112 = vpop.f32.mrb[0].mxu0
  %v3113 = vadd.f32 0.0, %v3112
  %v3114 = vpop.f32.mrb[0].mxu0
  %v3115 = vadd.f32 0.0, %v3114
  %v3116 = vpop.f32.mrb[0].mxu0
  %v3117 = vadd.f32 0.0, %v3116
  %v3118 = vpop.f32.mrb[0].mxu0
  %v3119 = vadd.f32 0.0, %v3118
  %3120 = vmatprep.mubr.bf16.mxu0 0
  %3121 = vmatmul.mubr.bf16.gmra.mrb[0].mxu0 %v2950
  %v3122 = vpop.f32.mrb[0].mxu0
  %v3123 = vadd.f32 0.0, %v3122
  %v3124 = vpop.f32.mrb[0].mxu0
  %v3125 = vadd.f32 0.0, %v3124
  %v3126 = vpop.f32.mrb[0].mxu0
  %v3127 = vadd.f32 0.0, %v3126
  %v3128 = vpop.f32.mrb[0].mxu0
  %v3129 = vadd.f32 0.0, %v3128
  %3130 = vmatprep.mubr.bf16.mxu0 0
  %3131 = vmatmul.mubr.bf16.gmra.mrb[0].mxu0 %v2953
  %v3132 = vpop.f32.mrb[0].mxu0
  %v3133 = vadd.f32 0.0, %v3132
  %v3134 = vpop.f32.mrb[0].mxu0
  %v3135 = vadd.f32 0.0, %v3134
  %v3136 = vpop.f32.mrb[0].mxu0
  %v3137 = vadd.f32 0.0, %v3136
  %v3138 = vpop.f32.mrb[0].mxu0
  %v3139 = vadd.f32 0.0, %v3138
  %3140 = vdwg.mxu0
  %3141 = vmatprep.subr.bf16.mxu0 0
  %3142 = vmatpush1.bf16.msra.mxu0 %v2901
  %3143 = vmatprep.subr.bf16.mxu0 0
  %3144 = vmatpush1.bf16.msra.mxu0 %v2906
  %3145 = vmatprep.subr.bf16.mxu0 0
  %3146 = vmatpush1.bf16.msra.mxu0 %v2911
  %3147 = vmatprep.subr.bf16.mxu0 0
  %3148 = vmatpush1.bf16.msra.mxu0 %v2916
  %3149 = vmatprep.subr.bf16.mxu0 0
  %3150 = vmatpush1.bf16.msra.mxu0 0
  %3151 = vmatprep.subr.bf16.mxu0 0
  %3152 = vmatpush1.bf16.msra.mxu0 0
  %3153 = vmatprep.subr.bf16.mxu0 0
  %3154 = vmatpush1.bf16.msra.mxu0 0
  %3155 = vmatprep.subr.bf16.mxu0 0
  %3156 = vmatpush1.bf16.msra.mxu0 0
  %3157 = vmatprep.subr.bf16.mxu0 0
  %3158 = vmatpush1.bf16.msra.mxu0 0
  %3159 = vmatprep.subr.bf16.mxu0 0
  %3160 = vmatpush1.bf16.msra.mxu0 0
  %3161 = vmatprep.subr.bf16.mxu0 0
  %3162 = vmatpush1.bf16.msra.mxu0 0
  %3163 = vmatprep.subr.bf16.mxu0 0
  %3164 = vmatpush1.bf16.msra.mxu0 0
  %3165 = vmatprep.subr.bf16.mxu0 0
  %3166 = vmatpush1.bf16.msra.mxu0 0
  %3167 = vmatprep.subr.bf16.mxu0 0
  %3168 = vmatpush1.bf16.msra.mxu0 0
  %3169 = vmatprep.subr.bf16.mxu0 0
  %3170 = vmatpush1.bf16.msra.mxu0 0
  %3171 = vmatprep.subr.bf16.mxu0 0
  %3172 = vmatpush1.bf16.msra.mxu0 0
  %3173 = vmatprep.mubr.bf16.mxu0 0
  %3174 = vmatmul.mubr.bf16.gmra.mrb[0].mxu0 %v2938
  %v3175 = vpop.f32.mrb[0].mxu0
  %v3176 = vadd.f32 0.0, %v3175
  %v3177 = vpop.f32.mrb[0].mxu0
  %v3178 = vpop.f32.mrb[0].mxu0
  %v3179 = vadd.f32 0.0, %v3178
  %v3180 = vpop.f32.mrb[0].mxu0
  %3181 = vmatprep.mubr.bf16.mxu0 0
  %3182 = vmatmul.mubr.bf16.gmra.mrb[0].mxu0 %v2941
  %v3183 = vpop.f32.mrb[0].mxu0
  %v3184 = vadd.f32 0.0, %v3183
  %v3185 = vpop.f32.mrb[0].mxu0
  %v3186 = vpop.f32.mrb[0].mxu0
  %v3187 = vadd.f32 0.0, %v3186
  %v3188 = vpop.f32.mrb[0].mxu0
  %3189 = vmatprep.mubr.bf16.mxu0 0
  %3190 = vmatmul.mubr.bf16.gmra.mrb[0].mxu0 %v2944
  %v3191 = vpop.f32.mrb[0].mxu0
  %v3192 = vadd.f32 0.0, %v3191
  %v3193 = vpop.f32.mrb[0].mxu0
  %v3194 = vpop.f32.mrb[0].mxu0
  %v3195 = vadd.f32 0.0, %v3194
  %v3196 = vpop.f32.mrb[0].mxu0
  %3197 = vmatprep.mubr.bf16.mxu0 0
  %3198 = vmatmul.mubr.bf16.gmra.mrb[0].mxu0 %v2947
  %v3199 = vpop.f32.mrb[0].mxu0
  %v3200 = vadd.f32 0.0, %v3199
  %v3201 = vpop.f32.mrb[0].mxu0
  %v3202 = vpop.f32.mrb[0].mxu0
  %v3203 = vadd.f32 0.0, %v3202
  %v3204 = vpop.f32.mrb[0].mxu0
  %3205 = vmatprep.mubr.bf16.mxu0 0
  %3206 = vmatmul.mubr.bf16.gmra.mrb[0].mxu0 %v2950
  %v3207 = vpop.f32.mrb[0].mxu0
  %v3208 = vadd.f32 0.0, %v3207
  %v3209 = vpop.f32.mrb[0].mxu0
  %v3210 = vpop.f32.mrb[0].mxu0
  %v3211 = vadd.f32 0.0, %v3210
  %v3212 = vpop.f32.mrb[0].mxu0
  %3213 = vmatprep.mubr.bf16.mxu0 0
  %3214 = vmatmul.mubr.bf16.gmra.mrb[0].mxu0 %v2953
  %v3215 = vpop.f32.mrb[0].mxu0
  %v3216 = vadd.f32 0.0, %v3215
  %v3217 = vpop.f32.mrb[0].mxu0
  %v3218 = vpop.f32.mrb[0].mxu0
  %v3219 = vadd.f32 0.0, %v3218
  %v3220 = vpop.f32.mrb[0].mxu0
  %3221 = vdwg.mxu0
  %v3222 = vadd.f32 %v2423, %v2990
  %v3223 = vadd.f32 %v2425, %v2992
  %v3224 = vadd.f32 %v2516, %v3083
  %v3225 = vadd.f32 %v2518, %v3085
  %v3226 = vadd.f32 %v2609, %v3176
  %v3227 = vadd.f32 %v2427, %v2994
  %v3228 = vadd.f32 %v2429, %v2996
  %v3229 = vadd.f32 %v2520, %v3087
  %v3230 = vadd.f32 %v2522, %v3089
  %v3231 = vadd.f32 %v2612, %v3179
  %v3232 = vadd.f32 %v2433, %v3000
  %v3233 = vadd.f32 %v2435, %v3002
  %v3234 = vadd.f32 %v2526, %v3093
  %v3235 = vadd.f32 %v2528, %v3095
  %v3236 = vadd.f32 %v2617, %v3184
  %v3237 = vadd.f32 %v2437, %v3004
  %v3238 = vadd.f32 %v2439, %v3006
  %v3239 = vadd.f32 %v2530, %v3097
  %v3240 = vadd.f32 %v2532, %v3099
  %v3241 = vadd.f32 %v2620, %v3187
  %v3242 = vadd.f32 %v2443, %v3010
  %v3243 = vadd.f32 %v2445, %v3012
  %v3244 = vadd.f32 %v2536, %v3103
  %v3245 = vadd.f32 %v2538, %v3105
  %v3246 = vadd.f32 %v2625, %v3192
  %v3247 = vadd.f32 %v2447, %v3014
  %v3248 = vadd.f32 %v2449, %v3016
  %v3249 = vadd.f32 %v2540, %v3107
  %v3250 = vadd.f32 %v2542, %v3109
  %v3251 = vadd.f32 %v2628, %v3195
  %v3252 = vadd.f32 %v2453, %v3020
  %v3253 = vadd.f32 %v2455, %v3022
  %v3254 = vadd.f32 %v2546, %v3113
  %v3255 = vadd.f32 %v2548, %v3115
  %v3256 = vadd.f32 %v2633, %v3200
  %v3257 = vadd.f32 %v2457, %v3024
  %v3258 = vadd.f32 %v2459, %v3026
  %v3259 = vadd.f32 %v2550, %v3117
  %v3260 = vadd.f32 %v2552, %v3119
  %v3261 = vadd.f32 %v2636, %v3203
  %v3262 = vadd.f32 %v2463, %v3030
  %v3263 = vadd.f32 %v2465, %v3032
  %v3264 = vadd.f32 %v2556, %v3123
  %v3265 = vadd.f32 %v2558, %v3125
  %v3266 = vadd.f32 %v2641, %v3208
  %v3267 = vadd.f32 %v2467, %v3034
  %v3268 = vadd.f32 %v2469, %v3036
  %v3269 = vadd.f32 %v2560, %v3127
  %v3270 = vadd.f32 %v2562, %v3129
  %v3271 = vadd.f32 %v2644, %v3211
  %v3272 = vadd.f32 %v2473, %v3040
  %v3273 = vadd.f32 %v2475, %v3042
  %v3274 = vadd.f32 %v2566, %v3133
  %v3275 = vadd.f32 %v2568, %v3135
  %v3276 = vadd.f32 %v2649, %v3216
  %v3277 = vadd.f32 %v2477, %v3044
  %v3278 = vadd.f32 %v2479, %v3046
  %v3279 = vadd.f32 %v2570, %v3137
  %v3280 = vadd.f32 %v2572, %v3139
  %v3281 = vadd.f32 %v2652, %v3219
  %v3282 = vld [vmem:[#allocation2] sm:$0xff]
  %v3283 = vld [vmem:[#allocation2 + $0x8] sm:$0xff]
  %v3284 = vld [vmem:[#allocation2 + $0x10] sm:$0xff]
  %v3285 = vld [vmem:[#allocation2 + $0x18] sm:$0xff]
  %v3286 = vld [vmem:[#allocation2 + $0x20] sm:$0xff]
  %v3287 = vld [vmem:[#allocation2 + $0x28] sm:$0xff]
  %v3288 = vld [vmem:[#allocation2 + $0x38] sm:$0xff]
  %v3289 = vld [vmem:[#allocation2 + $0x40] sm:$0xff]
  %v3290 = vld [vmem:[#allocation2 + $0x48] sm:$0xff]
  %v3291 = vld [vmem:[#allocation2 + $0x50] sm:$0xff]
  %v3292 = vld [vmem:[#allocation2 + $0x58] sm:$0xff]
  %v3293 = vld [vmem:[#allocation2 + $0x60] sm:$0xff]
  %v3294 = vld [vmem:[#allocation2 + $0x70] sm:$0xff]
  %v3295 = vld [vmem:[#allocation2 + $0x78] sm:$0xff]
  %v3296 = vld [vmem:[#allocation2 + $0x80] sm:$0xff]
  %v3297 = vld [vmem:[#allocation2 + $0x88] sm:$0xff]
  %v3298 = vld [vmem:[#allocation2 + $0x90] sm:$0xff]
  %v3299 = vld [vmem:[#allocation2 + $0x98] sm:$0xff]
  %v3300 = vld [vmem:[#allocation2 + $0xa8] sm:$0xff]
  %v3301 = vld [vmem:[#allocation2 + $0xb0] sm:$0xff]
  %v3302 = vld [vmem:[#allocation2 + $0xb8] sm:$0xff]
  %v3303 = vld [vmem:[#allocation2 + $0xc0] sm:$0xff]
  %v3304 = vld [vmem:[#allocation2 + $0xc8] sm:$0xff]
  %v3305 = vld [vmem:[#allocation2 + $0xd0] sm:$0xff]
  %3306 = vrot.lane.b32.xlu0 %v1694, 127
  %v3307 = vpop.permute.xlu0 %3306
  %3308 = vrot.lane.b32.xlu0 %v1701, 127
  %v3309 = vpop.permute.xlu0 %3308
  %3310 = vrot.lane.b32.xlu0 %v1708, 127
  %v3311 = vpop.permute.xlu0 %3310
  %3312 = vrot.lane.b32.xlu0 %v1715, 127
  %v3313 = vpop.permute.xlu0 %3312
  %3314 = vrot.lane.b32.xlu0 %v1722, 127
  %v3315 = vpop.permute.xlu0 %3314
  %vm3316 = vcmask 1039360
  %v3317 = vsel %vm3316, %v3307, %v3309
  %v3318 = vsel %vm3316, %v3309, %v3311
  %v3319 = vsel %vm3316, %v3311, %v3313
  %v3320 = vsel %vm3316, %v3313, %v3315
  %v3327 = vmul.bf16 %v3282, %v3307
  %v3328 = vmul.bf16 %v3283, %v3317
  %v3329 = vmul.bf16 %v3284, %v3318
  %v3330 = vmul.bf16 %v3285, %v3319
  %v3331 = vmul.bf16 %v3286, %v3320
  %v3332 = vmul.bf16 %v3287, %v3315
  %v3333 = vmul.bf16 %v3288, %v3307
  %v3334 = vmul.bf16 %v3289, %v3317
  %v3335 = vmul.bf16 %v3290, %v3318
  %v3336 = vmul.bf16 %v3291, %v3319
  %v3337 = vmul.bf16 %v3292, %v3320
  %v3338 = vmul.bf16 %v3293, %v3315
  %v3339 = vmul.bf16 %v3294, %v3307
  %v3340 = vmul.bf16 %v3295, %v3317
  %v3341 = vmul.bf16 %v3296, %v3318
  %v3342 = vmul.bf16 %v3297, %v3319
  %v3343 = vmul.bf16 %v3298, %v3320
  %v3344 = vmul.bf16 %v3299, %v3315
  %v3345 = vmul.bf16 %v3300, %v3307
  %v3346 = vmul.bf16 %v3301, %v3317
  %v3347 = vmul.bf16 %v3302, %v3318
  %v3348 = vmul.bf16 %v3303, %v3319
  %v3349 = vmul.bf16 %v3304, %v3320
  %v3350 = vmul.bf16 %v3305, %v3315
  %s3351 = scalar_lea.vmem %s2, 144
  %v3352 = vld [vmem:[%s3351] sm:$0xf]
  %v3353 = vld [vmem:[%s3351 + $0x4] sm:$0xf]
  %v3354 = vld [vmem:[%s3351 + $0x8] sm:$0xf]
  %v3355 = vld [vmem:[%s3351 + $0xc] sm:$0xf]
  %v3356 = vld [vmem:[%s3351 + $0x10] sm:$0xf]
  %v3357 = vld [vmem:[%s3351 + $0x14] sm:$0xf]
  %v3358 = vld [vmem:[%s3351 + $0x18] sm:$0xf]
  %v3359 = vld [vmem:[%s3351 + $0x1c] sm:$0xf]
  %v3360 = vld [vmem:[%s3351 + $0x20] sm:$0xf]
  %v3361 = vld [vmem:[%s3351 + $0x24] sm:$0xf]
  %v3362 = vld [vmem:[%s3351 + $0x28] sm:$0xf]
  %v3363 = vld [vmem:[%s3351 + $0x2c] sm:$0xf]
  %v3376 = vunpack.c.l.b16 %v3352
  %v3377 = vunpack.c.l.b16 %v3353
  %v3378 = vunpack.c.l.b16 %v3354
  %v3379 = vunpack.c.l.b16 %v3355
  %v3380 = vunpack.c.l.b16 %v3356
  %v3381 = vunpack.c.l.b16 %v3357
  %v3382 = vunpack.c.l.b16 %v3358
  %v3383 = vunpack.c.l.b16 %v3359
  %v3384 = vunpack.c.l.b16 %v3360
  %v3385 = vunpack.c.l.b16 %v3361
  %v3386 = vunpack.c.l.b16 %v3362
  %v3387 = vunpack.c.l.b16 %v3363
  %v3388 = vpack.c.b16 %v3377, %v3376
  %v3389 = vpack.c.b16 %v3379, %v3378
  %v3390 = vpack.c.b16 %v3381, %v3380
  %v3391 = vpack.c.b16 %v3383, %v3382
  %v3392 = vpack.c.b16 %v3385, %v3384
  %v3393 = vpack.c.b16 %v3387, %v3386
  %3418 = vrot.lane.b32.xlu0 %v3327, 1
  %v3419 = vpop.permute.xlu0 %3418
  %3420 = vrot.lane.b32.xlu0 %v3328, 1
  %v3421 = vpop.permute.xlu0 %3420
  %3422 = vrot.lane.b32.xlu0 %v3329, 1
  %v3423 = vpop.permute.xlu0 %3422
  %3424 = vrot.lane.b32.xlu0 %v3330, 1
  %v3425 = vpop.permute.xlu0 %3424
  %3426 = vrot.lane.b32.xlu0 %v3331, 1
  %v3427 = vpop.permute.xlu0 %3426
  %3428 = vrot.lane.b32.xlu0 %v3332, 1
  %v3429 = vpop.permute.xlu0 %3428
  %3430 = vrot.lane.b32.xlu0 %v3333, 1
  %v3431 = vpop.permute.xlu0 %3430
  %3432 = vrot.lane.b32.xlu0 %v3334, 1
  %v3433 = vpop.permute.xlu0 %3432
  %3434 = vrot.lane.b32.xlu0 %v3335, 1
  %v3435 = vpop.permute.xlu0 %3434
  %3436 = vrot.lane.b32.xlu0 %v3336, 1
  %v3437 = vpop.permute.xlu0 %3436
  %3438 = vrot.lane.b32.xlu0 %v3337, 1
  %v3439 = vpop.permute.xlu0 %3438
  %3440 = vrot.lane.b32.xlu0 %v3338, 1
  %v3441 = vpop.permute.xlu0 %3440
  %3442 = vrot.lane.b32.xlu0 %v3339, 1
  %v3443 = vpop.permute.xlu0 %3442
  %3444 = vrot.lane.b32.xlu0 %v3340, 1
  %v3445 = vpop.permute.xlu0 %3444
  %3446 = vrot.lane.b32.xlu0 %v3341, 1
  %v3447 = vpop.permute.xlu0 %3446
  %3448 = vrot.lane.b32.xlu0 %v3342, 1
  %v3449 = vpop.permute.xlu0 %3448
  %3450 = vrot.lane.b32.xlu0 %v3343, 1
  %v3451 = vpop.permute.xlu0 %3450
  %3452 = vrot.lane.b32.xlu0 %v3344, 1
  %v3453 = vpop.permute.xlu0 %3452
  %3454 = vrot.lane.b32.xlu0 %v3345, 1
  %v3455 = vpop.permute.xlu0 %3454
  %3456 = vrot.lane.b32.xlu0 %v3346, 1
  %v3457 = vpop.permute.xlu0 %3456
  %3458 = vrot.lane.b32.xlu0 %v3347, 1
  %v3459 = vpop.permute.xlu0 %3458
  %3460 = vrot.lane.b32.xlu0 %v3348, 1
  %v3461 = vpop.permute.xlu0 %3460
  %3462 = vrot.lane.b32.xlu0 %v3349, 1
  %v3463 = vpop.permute.xlu0 %3462
  %3464 = vrot.lane.b32.xlu0 %v3350, 1
  %v3465 = vpop.permute.xlu0 %3464
  %vm3466 = vcmask 7168
  %v3467 = vsel %vm3466, %v3419, %v3421
  %v3468 = vsel %vm3466, %v3421, %v3423
  %v3469 = vsel %vm3466, %v3423, %v3425
  %v3470 = vsel %vm3466, %v3425, %v3427
  %v3471 = vsel %vm3466, %v3427, %v3429
  %v3472 = vsel %vm3466, %v3431, %v3433
  %v3473 = vsel %vm3466, %v3433, %v3435
  %v3474 = vsel %vm3466, %v3435, %v3437
  %v3475 = vsel %vm3466, %v3437, %v3439
  %v3476 = vsel %vm3466, %v3439, %v3441
  %v3477 = vsel %vm3466, %v3443, %v3445
  %v3478 = vsel %vm3466, %v3445, %v3447
  %v3479 = vsel %vm3466, %v3447, %v3449
  %v3480 = vsel %vm3466, %v3449, %v3451
  %v3481 = vsel %vm3466, %v3451, %v3453
  %v3482 = vsel %vm3466, %v3455, %v3457
  %v3483 = vsel %vm3466, %v3457, %v3459
  %v3484 = vsel %vm3466, %v3459, %v3461
  %v3485 = vsel %vm3466, %v3461, %v3463
  %v3486 = vsel %vm3466, %v3463, %v3465
  %v3508 = vsel %vm1941, %v3388, 0
  %v3511 = vsel %vm1941, %v3389, 0
  %v3514 = vsel %vm1941, %v3390, 0
  %v3517 = vsel %vm1941, %v3391, 0
  %v3520 = vsel %vm1941, %v3392, 0
  %v3523 = vsel %vm1941, %v3393, 0
  %3525 = vmatprep.subr.bf16.mxu0 %v3468
  %3526 = vmatpush1.bf16.msra.mxu0 %v3467
  %3527 = vmatprep.subr.bf16.mxu0 %v3473
  %3528 = vmatpush1.bf16.msra.mxu0 %v3472
  %3529 = vmatprep.subr.bf16.mxu0 %v3478
  %3530 = vmatpush1.bf16.msra.mxu0 %v3477
  %3531 = vmatprep.subr.bf16.mxu0 %v3483
  %3532 = vmatpush1.bf16.msra.mxu0 %v3482
  %3533 = vmatprep.subr.bf16.mxu0 0
  %3534 = vmatpush1.bf16.msra.mxu0 0
  %3535 = vmatprep.subr.bf16.mxu0 0
  %3536 = vmatpush1.bf16.msra.mxu0 0
  %3537 = vmatprep.subr.bf16.mxu0 0
  %3538 = vmatpush1.bf16.msra.mxu0 0
  %3539 = vmatprep.subr.bf16.mxu0 0
  %3540 = vmatpush1.bf16.msra.mxu0 0
  %3541 = vmatprep.subr.bf16.mxu0 0
  %3542 = vmatpush1.bf16.msra.mxu0 0
  %3543 = vmatprep.subr.bf16.mxu0 0
  %3544 = vmatpush1.bf16.msra.mxu0 0
  %3545 = vmatprep.subr.bf16.mxu0 0
  %3546 = vmatpush1.bf16.msra.mxu0 0
  %3547 = vmatprep.subr.bf16.mxu0 0
  %3548 = vmatpush1.bf16.msra.mxu0 0
  %3549 = vmatprep.subr.bf16.mxu0 0
  %3550 = vmatpush1.bf16.msra.mxu0 0
  %3551 = vmatprep.subr.bf16.mxu0 0
  %3552 = vmatpush1.bf16.msra.mxu0 0
  %3553 = vmatprep.subr.bf16.mxu0 0
  %3554 = vmatpush1.bf16.msra.mxu0 0
  %3555 = vmatprep.subr.bf16.mxu0 0
  %3556 = vmatpush1.bf16.msra.mxu0 0
  %3557 = vmatprep.mubr.bf16.mxu0 0
  %3558 = vmatmul.mubr.bf16.gmra.mrb[0].mxu0 %v3508
  %v3559 = vpop.f32.mrb[0].mxu0
  %v3560 = vadd.f32 0.0, %v3559
  %v3561 = vpop.f32.mrb[0].mxu0
  %v3562 = vadd.f32 0.0, %v3561
  %v3563 = vpop.f32.mrb[0].mxu0
  %v3564 = vadd.f32 0.0, %v3563
  %v3565 = vpop.f32.mrb[0].mxu0
  %v3566 = vadd.f32 0.0, %v3565
  %3567 = vmatprep.mubr.bf16.mxu0 0
  %3568 = vmatmul.mubr.bf16.gmra.mrb[0].mxu0 %v3511
  %v3569 = vpop.f32.mrb[0].mxu0
  %v3570 = vadd.f32 0.0, %v3569
  %v3571 = vpop.f32.mrb[0].mxu0
  %v3572 = vadd.f32 0.0, %v3571
  %v3573 = vpop.f32.mrb[0].mxu0
  %v3574 = vadd.f32 0.0, %v3573
  %v3575 = vpop.f32.mrb[0].mxu0
  %v3576 = vadd.f32 0.0, %v3575
  %3577 = vmatprep.mubr.bf16.mxu0 0
  %3578 = vmatmul.mubr.bf16.gmra.mrb[0].mxu0 %v3514
  %v3579 = vpop.f32.mrb[0].mxu0
  %v3580 = vadd.f32 0.0, %v3579
  %v3581 = vpop.f32.mrb[0].mxu0
  %v3582 = vadd.f32 0.0, %v3581
  %v3583 = vpop.f32.mrb[0].mxu0
  %v3584 = vadd.f32 0.0, %v3583
  %v3585 = vpop.f32.mrb[0].mxu0
  %v3586 = vadd.f32 0.0, %v3585
  %3587 = vmatprep.mubr.bf16.mxu0 0
  %3588 = vmatmul.mubr.bf16.gmra.mrb[0].mxu0 %v3517
  %v3589 = vpop.f32.mrb[0].mxu0
  %v3590 = vadd.f32 0.0, %v3589
  %v3591 = vpop.f32.mrb[0].mxu0
  %v3592 = vadd.f32 0.0, %v3591
  %v3593 = vpop.f32.mrb[0].mxu0
  %v3594 = vadd.f32 0.0, %v3593
  %v3595 = vpop.f32.mrb[0].mxu0
  %v3596 = vadd.f32 0.0, %v3595
  %3597 = vmatprep.mubr.bf16.mxu0 0
  %3598 = vmatmul.mubr.bf16.gmra.mrb[0].mxu0 %v3520
  %v3599 = vpop.f32.mrb[0].mxu0
  %v3600 = vadd.f32 0.0, %v3599
  %v3601 = vpop.f32.mrb[0].mxu0
  %v3602 = vadd.f32 0.0, %v3601
  %v3603 = vpop.f32.mrb[0].mxu0
  %v3604 = vadd.f32 0.0, %v3603
  %v3605 = vpop.f32.mrb[0].mxu0
  %v3606 = vadd.f32 0.0, %v3605
  %3607 = vmatprep.mubr.bf16.mxu0 0
  %3608 = vmatmul.mubr.bf16.gmra.mrb[0].mxu0 %v3523
  %v3609 = vpop.f32.mrb[0].mxu0
  %v3610 = vadd.f32 0.0, %v3609
  %v3611 = vpop.f32.mrb[0].mxu0
  %v3612 = vadd.f32 0.0, %v3611
  %v3613 = vpop.f32.mrb[0].mxu0
  %v3614 = vadd.f32 0.0, %v3613
  %v3615 = vpop.f32.mrb[0].mxu0
  %v3616 = vadd.f32 0.0, %v3615
  %3617 = vdwg.mxu0
  %3618 = vmatprep.subr.bf16.mxu0 %v3470
  %3619 = vmatpush1.bf16.msra.mxu0 %v3469
  %3620 = vmatprep.subr.bf16.mxu0 %v3475
  %3621 = vmatpush1.bf16.msra.mxu0 %v3474
  %3622 = vmatprep.subr.bf16.mxu0 %v3480
  %3623 = vmatpush1.bf16.msra.mxu0 %v3479
  %3624 = vmatprep.subr.bf16.mxu0 %v3485
  %3625 = vmatpush1.bf16.msra.mxu0 %v3484
  %3626 = vmatprep.subr.bf16.mxu0 0
  %3627 = vmatpush1.bf16.msra.mxu0 0
  %3628 = vmatprep.subr.bf16.mxu0 0
  %3629 = vmatpush1.bf16.msra.mxu0 0
  %3630 = vmatprep.subr.bf16.mxu0 0
  %3631 = vmatpush1.bf16.msra.mxu0 0
  %3632 = vmatprep.subr.bf16.mxu0 0
  %3633 = vmatpush1.bf16.msra.mxu0 0
  %3634 = vmatprep.subr.bf16.mxu0 0
  %3635 = vmatpush1.bf16.msra.mxu0 0
  %3636 = vmatprep.subr.bf16.mxu0 0
  %3637 = vmatpush1.bf16.msra.mxu0 0
  %3638 = vmatprep.subr.bf16.mxu0 0
  %3639 = vmatpush1.bf16.msra.mxu0 0
  %3640 = vmatprep.subr.bf16.mxu0 0
  %3641 = vmatpush1.bf16.msra.mxu0 0
  %3642 = vmatprep.subr.bf16.mxu0 0
  %3643 = vmatpush1.bf16.msra.mxu0 0
  %3644 = vmatprep.subr.bf16.mxu0 0
  %3645 = vmatpush1.bf16.msra.mxu0 0
  %3646 = vmatprep.subr.bf16.mxu0 0
  %3647 = vmatpush1.bf16.msra.mxu0 0
  %3648 = vmatprep.subr.bf16.mxu0 0
  %3649 = vmatpush1.bf16.msra.mxu0 0
  %3650 = vmatprep.mubr.bf16.mxu0 0
  %3651 = vmatmul.mubr.bf16.gmra.mrb[0].mxu0 %v3508
  %v3652 = vpop.f32.mrb[0].mxu0
  %v3653 = vadd.f32 0.0, %v3652
  %v3654 = vpop.f32.mrb[0].mxu0
  %v3655 = vadd.f32 0.0, %v3654
  %v3656 = vpop.f32.mrb[0].mxu0
  %v3657 = vadd.f32 0.0, %v3656
  %v3658 = vpop.f32.mrb[0].mxu0
  %v3659 = vadd.f32 0.0, %v3658
  %3660 = vmatprep.mubr.bf16.mxu0 0
  %3661 = vmatmul.mubr.bf16.gmra.mrb[0].mxu0 %v3511
  %v3662 = vpop.f32.mrb[0].mxu0
  %v3663 = vadd.f32 0.0, %v3662
  %v3664 = vpop.f32.mrb[0].mxu0
  %v3665 = vadd.f32 0.0, %v3664
  %v3666 = vpop.f32.mrb[0].mxu0
  %v3667 = vadd.f32 0.0, %v3666
  %v3668 = vpop.f32.mrb[0].mxu0
  %v3669 = vadd.f32 0.0, %v3668
  %3670 = vmatprep.mubr.bf16.mxu0 0
  %3671 = vmatmul.mubr.bf16.gmra.mrb[0].mxu0 %v3514
  %v3672 = vpop.f32.mrb[0].mxu0
  %v3673 = vadd.f32 0.0, %v3672
  %v3674 = vpop.f32.mrb[0].mxu0
  %v3675 = vadd.f32 0.0, %v3674
  %v3676 = vpop.f32.mrb[0].mxu0
  %v3677 = vadd.f32 0.0, %v3676
  %v3678 = vpop.f32.mrb[0].mxu0
  %v3679 = vadd.f32 0.0, %v3678
  %3680 = vmatprep.mubr.bf16.mxu0 0
  %3681 = vmatmul.mubr.bf16.gmra.mrb[0].mxu0 %v3517
  %v3682 = vpop.f32.mrb[0].mxu0
  %v3683 = vadd.f32 0.0, %v3682
  %v3684 = vpop.f32.mrb[0].mxu0
  %v3685 = vadd.f32 0.0, %v3684
  %v3686 = vpop.f32.mrb[0].mxu0
  %v3687 = vadd.f32 0.0, %v3686
  %v3688 = vpop.f32.mrb[0].mxu0
  %v3689 = vadd.f32 0.0, %v3688
  %3690 = vmatprep.mubr.bf16.mxu0 0
  %3691 = vmatmul.mubr.bf16.gmra.mrb[0].mxu0 %v3520
  %v3692 = vpop.f32.mrb[0].mxu0
  %v3693 = vadd.f32 0.0, %v3692
  %v3694 = vpop.f32.mrb[0].mxu0
  %v3695 = vadd.f32 0.0, %v3694
  %v3696 = vpop.f32.mrb[0].mxu0
  %v3697 = vadd.f32 0.0, %v3696
  %v3698 = vpop.f32.mrb[0].mxu0
  %v3699 = vadd.f32 0.0, %v3698
  %3700 = vmatprep.mubr.bf16.mxu0 0
  %3701 = vmatmul.mubr.bf16.gmra.mrb[0].mxu0 %v3523
  %v3702 = vpop.f32.mrb[0].mxu0
  %v3703 = vadd.f32 0.0, %v3702
  %v3704 = vpop.f32.mrb[0].mxu0
  %v3705 = vadd.f32 0.0, %v3704
  %v3706 = vpop.f32.mrb[0].mxu0
  %v3707 = vadd.f32 0.0, %v3706
  %v3708 = vpop.f32.mrb[0].mxu0
  %v3709 = vadd.f32 0.0, %v3708
  %3710 = vdwg.mxu0
  %3711 = vmatprep.subr.bf16.mxu0 0
  %3712 = vmatpush1.bf16.msra.mxu0 %v3471
  %3713 = vmatprep.subr.bf16.mxu0 0
  %3714 = vmatpush1.bf16.msra.mxu0 %v3476
  %3715 = vmatprep.subr.bf16.mxu0 0
  %3716 = vmatpush1.bf16.msra.mxu0 %v3481
  %3717 = vmatprep.subr.bf16.mxu0 0
  %3718 = vmatpush1.bf16.msra.mxu0 %v3486
  %3719 = vmatprep.subr.bf16.mxu0 0
  %3720 = vmatpush1.bf16.msra.mxu0 0
  %3721 = vmatprep.subr.bf16.mxu0 0
  %3722 = vmatpush1.bf16.msra.mxu0 0
  %3723 = vmatprep.subr.bf16.mxu0 0
  %3724 = vmatpush1.bf16.msra.mxu0 0
  %3725 = vmatprep.subr.bf16.mxu0 0
  %3726 = vmatpush1.bf16.msra.mxu0 0
  %3727 = vmatprep.subr.bf16.mxu0 0
  %3728 = vmatpush1.bf16.msra.mxu0 0
  %3729 = vmatprep.subr.bf16.mxu0 0
  %3730 = vmatpush1.bf16.msra.mxu0 0
  %3731 = vmatprep.subr.bf16.mxu0 0
  %3732 = vmatpush1.bf16.msra.mxu0 0
  %3733 = vmatprep.subr.bf16.mxu0 0
  %3734 = vmatpush1.bf16.msra.mxu0 0
  %3735 = vmatprep.subr.bf16.mxu0 0
  %3736 = vmatpush1.bf16.msra.mxu0 0
  %3737 = vmatprep.subr.bf16.mxu0 0
  %3738 = vmatpush1.bf16.msra.mxu0 0
  %3739 = vmatprep.subr.bf16.mxu0 0
  %3740 = vmatpush1.bf16.msra.mxu0 0
  %3741 = vmatprep.subr.bf16.mxu0 0
  %3742 = vmatpush1.bf16.msra.mxu0 0
  %3743 = vmatprep.mubr.bf16.mxu0 0
  %3744 = vmatmul.mubr.bf16.gmra.mrb[0].mxu0 %v3508
  %v3745 = vpop.f32.mrb[0].mxu0
  %v3746 = vadd.f32 0.0, %v3745
  %v3747 = vpop.f32.mrb[0].mxu0
  %v3748 = vpop.f32.mrb[0].mxu0
  %v3749 = vadd.f32 0.0, %v3748
  %v3750 = vpop.f32.mrb[0].mxu0
  %3751 = vmatprep.mubr.bf16.mxu0 0
  %3752 = vmatmul.mubr.bf16.gmra.mrb[0].mxu0 %v3511
  %v3753 = vpop.f32.mrb[0].mxu0
  %v3754 = vadd.f32 0.0, %v3753
  %v3755 = vpop.f32.mrb[0].mxu0
  %v3756 = vpop.f32.mrb[0].mxu0
  %v3757 = vadd.f32 0.0, %v3756
  %v3758 = vpop.f32.mrb[0].mxu0
  %3759 = vmatprep.mubr.bf16.mxu0 0
  %3760 = vmatmul.mubr.bf16.gmra.mrb[0].mxu0 %v3514
  %v3761 = vpop.f32.mrb[0].mxu0
  %v3762 = vadd.f32 0.0, %v3761
  %v3763 = vpop.f32.mrb[0].mxu0
  %v3764 = vpop.f32.mrb[0].mxu0
  %v3765 = vadd.f32 0.0, %v3764
  %v3766 = vpop.f32.mrb[0].mxu0
  %3767 = vmatprep.mubr.bf16.mxu0 0
  %3768 = vmatmul.mubr.bf16.gmra.mrb[0].mxu0 %v3517
  %v3769 = vpop.f32.mrb[0].mxu0
  %v3770 = vadd.f32 0.0, %v3769
  %v3771 = vpop.f32.mrb[0].mxu0
  %v3772 = vpop.f32.mrb[0].mxu0
  %v3773 = vadd.f32 0.0, %v3772
  %v3774 = vpop.f32.mrb[0].mxu0
  %3775 = vmatprep.mubr.bf16.mxu0 0
  %3776 = vmatmul.mubr.bf16.gmra.mrb[0].mxu0 %v3520
  %v3777 = vpop.f32.mrb[0].mxu0
  %v3778 = vadd.f32 0.0, %v3777
  %v3779 = vpop.f32.mrb[0].mxu0
  %v3780 = vpop.f32.mrb[0].mxu0
  %v3781 = vadd.f32 0.0, %v3780
  %v3782 = vpop.f32.mrb[0].mxu0
  %3783 = vmatprep.mubr.bf16.mxu0 0
  %3784 = vmatmul.mubr.bf16.gmra.mrb[0].mxu0 %v3523
  %v3785 = vpop.f32.mrb[0].mxu0
  %v3786 = vadd.f32 0.0, %v3785
  %v3787 = vpop.f32.mrb[0].mxu0
  %v3788 = vpop.f32.mrb[0].mxu0
  %v3789 = vadd.f32 0.0, %v3788
  %v3790 = vpop.f32.mrb[0].mxu0
  %3791 = vdwg.mxu0
  %v3792 = vadd.f32 %v3222, %v3560
  %v3793 = vadd.f32 %v3223, %v3562
  %v3794 = vadd.f32 %v3224, %v3653
  %v3795 = vadd.f32 %v3225, %v3655
  %v3796 = vadd.f32 %v3226, %v3746
  %v3797 = vadd.f32 %v3227, %v3564
  %v3798 = vadd.f32 %v3228, %v3566
  %v3799 = vadd.f32 %v3229, %v3657
  %v3800 = vadd.f32 %v3230, %v3659
  %v3801 = vadd.f32 %v3231, %v3749
  %v3802 = vadd.f32 %v3232, %v3570
  %v3803 = vadd.f32 %v3233, %v3572
  %v3804 = vadd.f32 %v3234, %v3663
  %v3805 = vadd.f32 %v3235, %v3665
  %v3806 = vadd.f32 %v3236, %v3754
  %v3807 = vadd.f32 %v3237, %v3574
  %v3808 = vadd.f32 %v3238, %v3576
  %v3809 = vadd.f32 %v3239, %v3667
  %v3810 = vadd.f32 %v3240, %v3669
  %v3811 = vadd.f32 %v3241, %v3757
  %v3812 = vadd.f32 %v3242, %v3580
  %v3813 = vadd.f32 %v3243, %v3582
  %v3814 = vadd.f32 %v3244, %v3673
  %v3815 = vadd.f32 %v3245, %v3675
  %v3816 = vadd.f32 %v3246, %v3762
  %v3817 = vadd.f32 %v3247, %v3584
  %v3818 = vadd.f32 %v3248, %v3586
  %v3819 = vadd.f32 %v3249, %v3677
  %v3820 = vadd.f32 %v3250, %v3679
  %v3821 = vadd.f32 %v3251, %v3765
  %v3822 = vadd.f32 %v3252, %v3590
  %v3823 = vadd.f32 %v3253, %v3592
  %v3824 = vadd.f32 %v3254, %v3683
  %v3825 = vadd.f32 %v3255, %v3685
  %v3826 = vadd.f32 %v3256, %v3770
  %v3827 = vadd.f32 %v3257, %v3594
  %v3828 = vadd.f32 %v3258, %v3596
  %v3829 = vadd.f32 %v3259, %v3687
  %v3830 = vadd.f32 %v3260, %v3689
  %v3831 = vadd.f32 %v3261, %v3773
  %v3832 = vadd.f32 %v3262, %v3600
  %v3833 = vadd.f32 %v3263, %v3602
  %v3834 = vadd.f32 %v3264, %v3693
  %v3835 = vadd.f32 %v3265, %v3695
  %v3836 = vadd.f32 %v3266, %v3778
  %v3837 = vadd.f32 %v3267, %v3604
  %v3838 = vadd.f32 %v3268, %v3606
  %v3839 = vadd.f32 %v3269, %v3697
  %v3840 = vadd.f32 %v3270, %v3699
  %v3841 = vadd.f32 %v3271, %v3781
  %v3842 = vadd.f32 %v3272, %v3610
  %v3843 = vadd.f32 %v3273, %v3612
  %v3844 = vadd.f32 %v3274, %v3703
  %v3845 = vadd.f32 %v3275, %v3705
  %v3846 = vadd.f32 %v3276, %v3786
  %v3847 = vadd.f32 %v3277, %v3614
  %v3848 = vadd.f32 %v3278, %v3616
  %v3849 = vadd.f32 %v3279, %v3707
  %v3850 = vadd.f32 %v3280, %v3709
  %v3851 = vadd.f32 %v3281, %v3789
  %s3852 = scalar_lea.vmem %s2, 192
  %v3853 = vld [vmem:[%s3852] sm:$0xf]
  %v3854 = vld [vmem:[%s3852 + $0x4] sm:$0xf]
  %v3855 = vld [vmem:[%s3852 + $0x8] sm:$0xf]
  %v3856 = vld [vmem:[%s3852 + $0xc] sm:$0xf]
  %v3857 = vld [vmem:[%s3852 + $0x10] sm:$0xf]
  %v3858 = vld [vmem:[%s3852 + $0x14] sm:$0xf]
  %v3859 = vld [vmem:[%s3852 + $0x18] sm:$0xf]
  %v3860 = vld [vmem:[%s3852 + $0x1c] sm:$0xf]
  %v3861 = vld [vmem:[%s3852 + $0x20] sm:$0xf]
  %v3862 = vld [vmem:[%s3852 + $0x24] sm:$0xf]
  %v3863 = vld [vmem:[%s3852 + $0x28] sm:$0xf]
  %v3864 = vld [vmem:[%s3852 + $0x2c] sm:$0xf]
  %v3877 = vunpack.c.l.b16 %v3853
  %v3878 = vunpack.c.l.b16 %v3854
  %v3879 = vunpack.c.l.b16 %v3855
  %v3880 = vunpack.c.l.b16 %v3856
  %v3881 = vunpack.c.l.b16 %v3857
  %v3882 = vunpack.c.l.b16 %v3858
  %v3883 = vunpack.c.l.b16 %v3859
  %v3884 = vunpack.c.l.b16 %v3860
  %v3885 = vunpack.c.l.b16 %v3861
  %v3886 = vunpack.c.l.b16 %v3862
  %v3887 = vunpack.c.l.b16 %v3863
  %v3888 = vunpack.c.l.b16 %v3864
  %v3889 = vpack.c.b16 %v3878, %v3877
  %v3890 = vpack.c.b16 %v3880, %v3879
  %v3891 = vpack.c.b16 %v3882, %v3881
  %v3892 = vpack.c.b16 %v3884, %v3883
  %v3893 = vpack.c.b16 %v3886, %v3885
  %v3894 = vpack.c.b16 %v3888, %v3887
  %v3896 = vsel %vm1941, %v3889, 0
  %v3899 = vsel %vm1941, %v3890, 0
  %v3902 = vsel %vm1941, %v3891, 0
  %v3905 = vsel %vm1941, %v3892, 0
  %v3908 = vsel %vm1941, %v3893, 0
  %v3911 = vsel %vm1941, %v3894, 0
  %3913 = vmatprep.subr.bf16.mxu0 %v3284
  %3914 = vmatpush1.bf16.msra.mxu0 %v3283
  %3915 = vmatprep.subr.bf16.mxu0 %v3290
  %3916 = vmatpush1.bf16.msra.mxu0 %v3289
  %3917 = vmatprep.subr.bf16.mxu0 %v3296
  %3918 = vmatpush1.bf16.msra.mxu0 %v3295
  %3919 = vmatprep.subr.bf16.mxu0 %v3302
  %3920 = vmatpush1.bf16.msra.mxu0 %v3301
  %3921 = vmatprep.subr.bf16.mxu0 0
  %3922 = vmatpush1.bf16.msra.mxu0 0
  %3923 = vmatprep.subr.bf16.mxu0 0
  %3924 = vmatpush1.bf16.msra.mxu0 0
  %3925 = vmatprep.subr.bf16.mxu0 0
  %3926 = vmatpush1.bf16.msra.mxu0 0
  %3927 = vmatprep.subr.bf16.mxu0 0
  %3928 = vmatpush1.bf16.msra.mxu0 0
  %3929 = vmatprep.subr.bf16.mxu0 0
  %3930 = vmatpush1.bf16.msra.mxu0 0
  %3931 = vmatprep.subr.bf16.mxu0 0
  %3932 = vmatpush1.bf16.msra.mxu0 0
  %3933 = vmatprep.subr.bf16.mxu0 0
  %3934 = vmatpush1.bf16.msra.mxu0 0
  %3935 = vmatprep.subr.bf16.mxu0 0
  %3936 = vmatpush1.bf16.msra.mxu0 0
  %3937 = vmatprep.subr.bf16.mxu0 0
  %3938 = vmatpush1.bf16.msra.mxu0 0
  %3939 = vmatprep.subr.bf16.mxu0 0
  %3940 = vmatpush1.bf16.msra.mxu0 0
  %3941 = vmatprep.subr.bf16.mxu0 0
  %3942 = vmatpush1.bf16.msra.mxu0 0
  %3943 = vmatprep.subr.bf16.mxu0 0
  %3944 = vmatpush1.bf16.msra.mxu0 0
  %3945 = vmatprep.mubr.bf16.mxu0 0
  %3946 = vmatmul.mubr.bf16.gmra.mrb[0].mxu0 %v3896
  %v3947 = vpop.f32.mrb[0].mxu0
  %v3948 = vadd.f32 0.0, %v3947
  %v3949 = vpop.f32.mrb[0].mxu0
  %v3950 = vadd.f32 0.0, %v3949
  %v3951 = vpop.f32.mrb[0].mxu0
  %v3952 = vadd.f32 0.0, %v3951
  %v3953 = vpop.f32.mrb[0].mxu0
  %v3954 = vadd.f32 0.0, %v3953
  %3955 = vmatprep.mubr.bf16.mxu0 0
  %3956 = vmatmul.mubr.bf16.gmra.mrb[0].mxu0 %v3899
  %v3957 = vpop.f32.mrb[0].mxu0
  %v3958 = vadd.f32 0.0, %v3957
  %v3959 = vpop.f32.mrb[0].mxu0
  %v3960 = vadd.f32 0.0, %v3959
  %v3961 = vpop.f32.mrb[0].mxu0
  %v3962 = vadd.f32 0.0, %v3961
  %v3963 = vpop.f32.mrb[0].mxu0
  %v3964 = vadd.f32 0.0, %v3963
  %3965 = vmatprep.mubr.bf16.mxu0 0
  %3966 = vmatmul.mubr.bf16.gmra.mrb[0].mxu0 %v3902
  %v3967 = vpop.f32.mrb[0].mxu0
  %v3968 = vadd.f32 0.0, %v3967
  %v3969 = vpop.f32.mrb[0].mxu0
  %v3970 = vadd.f32 0.0, %v3969
  %v3971 = vpop.f32.mrb[0].mxu0
  %v3972 = vadd.f32 0.0, %v3971
  %v3973 = vpop.f32.mrb[0].mxu0
  %v3974 = vadd.f32 0.0, %v3973
  %3975 = vmatprep.mubr.bf16.mxu0 0
  %3976 = vmatmul.mubr.bf16.gmra.mrb[0].mxu0 %v3905
  %v3977 = vpop.f32.mrb[0].mxu0
  %v3978 = vadd.f32 0.0, %v3977
  %v3979 = vpop.f32.mrb[0].mxu0
  %v3980 = vadd.f32 0.0, %v3979
  %v3981 = vpop.f32.mrb[0].mxu0
  %v3982 = vadd.f32 0.0, %v3981
  %v3983 = vpop.f32.mrb[0].mxu0
  %v3984 = vadd.f32 0.0, %v3983
  %3985 = vmatprep.mubr.bf16.mxu0 0
  %3986 = vmatmul.mubr.bf16.gmra.mrb[0].mxu0 %v3908
  %v3987 = vpop.f32.mrb[0].mxu0
  %v3988 = vadd.f32 0.0, %v3987
  %v3989 = vpop.f32.mrb[0].mxu0
  %v3990 = vadd.f32 0.0, %v3989
  %v3991 = vpop.f32.mrb[0].mxu0
  %v3992 = vadd.f32 0.0, %v3991
  %v3993 = vpop.f32.mrb[0].mxu0
  %v3994 = vadd.f32 0.0, %v3993
  %3995 = vmatprep.mubr.bf16.mxu0 0
  %3996 = vmatmul.mubr.bf16.gmra.mrb[0].mxu0 %v3911
  %v3997 = vpop.f32.mrb[0].mxu0
  %v3998 = vadd.f32 0.0, %v3997
  %v3999 = vpop.f32.mrb[0].mxu0
  %v4000 = vadd.f32 0.0, %v3999
  %v4001 = vpop.f32.mrb[0].mxu0
  %v4002 = vadd.f32 0.0, %v4001
  %v4003 = vpop.f32.mrb[0].mxu0
  %v4004 = vadd.f32 0.0, %v4003
  %4005 = vdwg.mxu0
  %4006 = vmatprep.subr.bf16.mxu0 %v3286
  %4007 = vmatpush1.bf16.msra.mxu0 %v3285
  %4008 = vmatprep.subr.bf16.mxu0 %v3292
  %4009 = vmatpush1.bf16.msra.mxu0 %v3291
  %4010 = vmatprep.subr.bf16.mxu0 %v3298
  %4011 = vmatpush1.bf16.msra.mxu0 %v3297
  %4012 = vmatprep.subr.bf16.mxu0 %v3304
  %4013 = vmatpush1.bf16.msra.mxu0 %v3303
  %4014 = vmatprep.subr.bf16.mxu0 0
  %4015 = vmatpush1.bf16.msra.mxu0 0
  %4016 = vmatprep.subr.bf16.mxu0 0
  %4017 = vmatpush1.bf16.msra.mxu0 0
  %4018 = vmatprep.subr.bf16.mxu0 0
  %4019 = vmatpush1.bf16.msra.mxu0 0
  %4020 = vmatprep.subr.bf16.mxu0 0
  %4021 = vmatpush1.bf16.msra.mxu0 0
  %4022 = vmatprep.subr.bf16.mxu0 0
  %4023 = vmatpush1.bf16.msra.mxu0 0
  %4024 = vmatprep.subr.bf16.mxu0 0
  %4025 = vmatpush1.bf16.msra.mxu0 0
  %4026 = vmatprep.subr.bf16.mxu0 0
  %4027 = vmatpush1.bf16.msra.mxu0 0
  %4028 = vmatprep.subr.bf16.mxu0 0
  %4029 = vmatpush1.bf16.msra.mxu0 0
  %4030 = vmatprep.subr.bf16.mxu0 0
  %4031 = vmatpush1.bf16.msra.mxu0 0
  %4032 = vmatprep.subr.bf16.mxu0 0
  %4033 = vmatpush1.bf16.msra.mxu0 0
  %4034 = vmatprep.subr.bf16.mxu0 0
  %4035 = vmatpush1.bf16.msra.mxu0 0
  %4036 = vmatprep.subr.bf16.mxu0 0
  %4037 = vmatpush1.bf16.msra.mxu0 0
  %4038 = vmatprep.mubr.bf16.mxu0 0
  %4039 = vmatmul.mubr.bf16.gmra.mrb[0].mxu0 %v3896
  %v4040 = vpop.f32.mrb[0].mxu0
  %v4041 = vadd.f32 0.0, %v4040
  %v4042 = vpop.f32.mrb[0].mxu0
  %v4043 = vadd.f32 0.0, %v4042
  %v4044 = vpop.f32.mrb[0].mxu0
  %v4045 = vadd.f32 0.0, %v4044
  %v4046 = vpop.f32.mrb[0].mxu0
  %v4047 = vadd.f32 0.0, %v4046
  %4048 = vmatprep.mubr.bf16.mxu0 0
  %4049 = vmatmul.mubr.bf16.gmra.mrb[0].mxu0 %v3899
  %v4050 = vpop.f32.mrb[0].mxu0
  %v4051 = vadd.f32 0.0, %v4050
  %v4052 = vpop.f32.mrb[0].mxu0
  %v4053 = vadd.f32 0.0, %v4052
  %v4054 = vpop.f32.mrb[0].mxu0
  %v4055 = vadd.f32 0.0, %v4054
  %v4056 = vpop.f32.mrb[0].mxu0
  %v4057 = vadd.f32 0.0, %v4056
  %4058 = vmatprep.mubr.bf16.mxu0 0
  %4059 = vmatmul.mubr.bf16.gmra.mrb[0].mxu0 %v3902
  %v4060 = vpop.f32.mrb[0].mxu0
  %v4061 = vadd.f32 0.0, %v4060
  %v4062 = vpop.f32.mrb[0].mxu0
  %v4063 = vadd.f32 0.0, %v4062
  %v4064 = vpop.f32.mrb[0].mxu0
  %v4065 = vadd.f32 0.0, %v4064
  %v4066 = vpop.f32.mrb[0].mxu0
  %v4067 = vadd.f32 0.0, %v4066
  %4068 = vmatprep.mubr.bf16.mxu0 0
  %4069 = vmatmul.mubr.bf16.gmra.mrb[0].mxu0 %v3905
  %v4070 = vpop.f32.mrb[0].mxu0
  %v4071 = vadd.f32 0.0, %v4070
  %v4072 = vpop.f32.mrb[0].mxu0
  %v4073 = vadd.f32 0.0, %v4072
  %v4074 = vpop.f32.mrb[0].mxu0
  %v4075 = vadd.f32 0.0, %v4074
  %v4076 = vpop.f32.mrb[0].mxu0
  %v4077 = vadd.f32 0.0, %v4076
  %4078 = vmatprep.mubr.bf16.mxu0 0
  %4079 = vmatmul.mubr.bf16.gmra.mrb[0].mxu0 %v3908
  %v4080 = vpop.f32.mrb[0].mxu0
  %v4081 = vadd.f32 0.0, %v4080
  %v4082 = vpop.f32.mrb[0].mxu0
  %v4083 = vadd.f32 0.0, %v4082
  %v4084 = vpop.f32.mrb[0].mxu0
  %v4085 = vadd.f32 0.0, %v4084
  %v4086 = vpop.f32.mrb[0].mxu0
  %v4087 = vadd.f32 0.0, %v4086
  %4088 = vmatprep.mubr.bf16.mxu0 0
  %4089 = vmatmul.mubr.bf16.gmra.mrb[0].mxu0 %v3911
  %v4090 = vpop.f32.mrb[0].mxu0
  %v4091 = vadd.f32 0.0, %v4090
  %v4092 = vpop.f32.mrb[0].mxu0
  %v4093 = vadd.f32 0.0, %v4092
  %v4094 = vpop.f32.mrb[0].mxu0
  %v4095 = vadd.f32 0.0, %v4094
  %v4096 = vpop.f32.mrb[0].mxu0
  %v4097 = vadd.f32 0.0, %v4096
  %4098 = vdwg.mxu0
  %4099 = vmatprep.subr.bf16.mxu0 0
  %4100 = vmatpush1.bf16.msra.mxu0 %v3287
  %4101 = vmatprep.subr.bf16.mxu0 0
  %4102 = vmatpush1.bf16.msra.mxu0 %v3293
  %4103 = vmatprep.subr.bf16.mxu0 0
  %4104 = vmatpush1.bf16.msra.mxu0 %v3299
  %4105 = vmatprep.subr.bf16.mxu0 0
  %4106 = vmatpush1.bf16.msra.mxu0 %v3305
  %4107 = vmatprep.subr.bf16.mxu0 0
  %4108 = vmatpush1.bf16.msra.mxu0 0
  %4109 = vmatprep.subr.bf16.mxu0 0
  %4110 = vmatpush1.bf16.msra.mxu0 0
  %4111 = vmatprep.subr.bf16.mxu0 0
  %4112 = vmatpush1.bf16.msra.mxu0 0
  %4113 = vmatprep.subr.bf16.mxu0 0
  %4114 = vmatpush1.bf16.msra.mxu0 0
  %4115 = vmatprep.subr.bf16.mxu0 0
  %4116 = vmatpush1.bf16.msra.mxu0 0
  %4117 = vmatprep.subr.bf16.mxu0 0
  %4118 = vmatpush1.bf16.msra.mxu0 0
  %4119 = vmatprep.subr.bf16.mxu0 0
  %4120 = vmatpush1.bf16.msra.mxu0 0
  %4121 = vmatprep.subr.bf16.mxu0 0
  %4122 = vmatpush1.bf16.msra.mxu0 0
  %4123 = vmatprep.subr.bf16.mxu0 0
  %4124 = vmatpush1.bf16.msra.mxu0 0
  %4125 = vmatprep.subr.bf16.mxu0 0
  %4126 = vmatpush1.bf16.msra.mxu0 0
  %4127 = vmatprep.subr.bf16.mxu0 0
  %4128 = vmatpush1.bf16.msra.mxu0 0
  %4129 = vmatprep.subr.bf16.mxu0 0
  %4130 = vmatpush1.bf16.msra.mxu0 0
  %4131 = vmatprep.mubr.bf16.mxu0 0
  %4132 = vmatmul.mubr.bf16.gmra.mrb[0].mxu0 %v3896
  %v4133 = vpop.f32.mrb[0].mxu0
  %v4134 = vadd.f32 0.0, %v4133
  %v4135 = vpop.f32.mrb[0].mxu0
  %v4136 = vpop.f32.mrb[0].mxu0
  %v4137 = vadd.f32 0.0, %v4136
  %v4138 = vpop.f32.mrb[0].mxu0
  %4139 = vmatprep.mubr.bf16.mxu0 0
  %4140 = vmatmul.mubr.bf16.gmra.mrb[0].mxu0 %v3899
  %v4141 = vpop.f32.mrb[0].mxu0
  %v4142 = vadd.f32 0.0, %v4141
  %v4143 = vpop.f32.mrb[0].mxu0
  %v4144 = vpop.f32.mrb[0].mxu0
  %v4145 = vadd.f32 0.0, %v4144
  %v4146 = vpop.f32.mrb[0].mxu0
  %4147 = vmatprep.mubr.bf16.mxu0 0
  %4148 = vmatmul.mubr.bf16.gmra.mrb[0].mxu0 %v3902
  %v4149 = vpop.f32.mrb[0].mxu0
  %v4150 = vadd.f32 0.0, %v4149
  %v4151 = vpop.f32.mrb[0].mxu0
  %v4152 = vpop.f32.mrb[0].mxu0
  %v4153 = vadd.f32 0.0, %v4152
  %v4154 = vpop.f32.mrb[0].mxu0
  %4155 = vmatprep.mubr.bf16.mxu0 0
  %4156 = vmatmul.mubr.bf16.gmra.mrb[0].mxu0 %v3905
  %v4157 = vpop.f32.mrb[0].mxu0
  %v4158 = vadd.f32 0.0, %v4157
  %v4159 = vpop.f32.mrb[0].mxu0
  %v4160 = vpop.f32.mrb[0].mxu0
  %v4161 = vadd.f32 0.0, %v4160
  %v4162 = vpop.f32.mrb[0].mxu0
  %4163 = vmatprep.mubr.bf16.mxu0 0
  %4164 = vmatmul.mubr.bf16.gmra.mrb[0].mxu0 %v3908
  %v4165 = vpop.f32.mrb[0].mxu0
  %v4166 = vadd.f32 0.0, %v4165
  %v4167 = vpop.f32.mrb[0].mxu0
  %v4168 = vpop.f32.mrb[0].mxu0
  %v4169 = vadd.f32 0.0, %v4168
  %v4170 = vpop.f32.mrb[0].mxu0
  %4171 = vmatprep.mubr.bf16.mxu0 0
  %4172 = vmatmul.mubr.bf16.gmra.mrb[0].mxu0 %v3911
  %v4173 = vpop.f32.mrb[0].mxu0
  %v4174 = vadd.f32 0.0, %v4173
  %v4175 = vpop.f32.mrb[0].mxu0
  %v4176 = vpop.f32.mrb[0].mxu0
  %v4177 = vadd.f32 0.0, %v4176
  %v4178 = vpop.f32.mrb[0].mxu0
  %4179 = vdwg.mxu0
  %v4180 = vadd.f32 %v3792, %v3948
  %v4181 = vadd.f32 %v3793, %v3950
  %v4182 = vadd.f32 %v3794, %v4041
  %v4183 = vadd.f32 %v3795, %v4043
  %v4184 = vadd.f32 %v3796, %v4134
  %v4185 = vadd.f32 %v3797, %v3952
  %v4186 = vadd.f32 %v3798, %v3954
  %v4187 = vadd.f32 %v3799, %v4045
  %v4188 = vadd.f32 %v3800, %v4047
  %v4189 = vadd.f32 %v3801, %v4137
  %v4190 = vadd.f32 %v3802, %v3958
  %v4191 = vadd.f32 %v3803, %v3960
  %v4192 = vadd.f32 %v3804, %v4051
  %v4193 = vadd.f32 %v3805, %v4053
  %v4194 = vadd.f32 %v3806, %v4142
  %v4195 = vadd.f32 %v3807, %v3962
  %v4196 = vadd.f32 %v3808, %v3964
  %v4197 = vadd.f32 %v3809, %v4055
  %v4198 = vadd.f32 %v3810, %v4057
  %v4199 = vadd.f32 %v3811, %v4145
  %v4200 = vadd.f32 %v3812, %v3968
  %v4201 = vadd.f32 %v3813, %v3970
  %v4202 = vadd.f32 %v3814, %v4061
  %v4203 = vadd.f32 %v3815, %v4063
  %v4204 = vadd.f32 %v3816, %v4150
  %v4205 = vadd.f32 %v3817, %v3972
  %v4206 = vadd.f32 %v3818, %v3974
  %v4207 = vadd.f32 %v3819, %v4065
  %v4208 = vadd.f32 %v3820, %v4067
  %v4209 = vadd.f32 %v3821, %v4153
  %v4210 = vadd.f32 %v3822, %v3978
  %v4211 = vadd.f32 %v3823, %v3980
  %v4212 = vadd.f32 %v3824, %v4071
  %v4213 = vadd.f32 %v3825, %v4073
  %v4214 = vadd.f32 %v3826, %v4158
  %v4215 = vadd.f32 %v3827, %v3982
  %v4216 = vadd.f32 %v3828, %v3984
  %v4217 = vadd.f32 %v3829, %v4075
  %v4218 = vadd.f32 %v3830, %v4077
  %v4219 = vadd.f32 %v3831, %v4161
  %v4220 = vadd.f32 %v3832, %v3988
  %v4221 = vadd.f32 %v3833, %v3990
  %v4222 = vadd.f32 %v3834, %v4081
  %v4223 = vadd.f32 %v3835, %v4083
  %v4224 = vadd.f32 %v3836, %v4166
  %v4225 = vadd.f32 %v3837, %v3992
  %v4226 = vadd.f32 %v3838, %v3994
  %v4227 = vadd.f32 %v3839, %v4085
  %v4228 = vadd.f32 %v3840, %v4087
  %v4229 = vadd.f32 %v3841, %v4169
  %v4230 = vadd.f32 %v3842, %v3998
  %v4231 = vadd.f32 %v3843, %v4000
  %v4232 = vadd.f32 %v3844, %v4091
  %v4233 = vadd.f32 %v3845, %v4093
  %v4234 = vadd.f32 %v3846, %v4174
  %v4235 = vadd.f32 %v3847, %v4002
  %v4236 = vadd.f32 %v3848, %v4004
  %v4237 = vadd.f32 %v3849, %v4095
  %v4238 = vadd.f32 %v3850, %v4097
  %v4239 = vadd.f32 %v3851, %v4177
  %v4240 = vld [vmem:[#allocation2 + $0x8] sm:$0xff]
  %v4241 = vld [vmem:[#allocation2 + $0x10] sm:$0xff]
  %v4242 = vld [vmem:[#allocation2 + $0x18] sm:$0xff]
  %v4243 = vld [vmem:[#allocation2 + $0x20] sm:$0xff]
  %v4244 = vld [vmem:[#allocation2 + $0x28] sm:$0xff]
  %v4245 = vld [vmem:[#allocation2 + $0x30] sm:$0xff]
  %v4246 = vld [vmem:[#allocation2 + $0x40] sm:$0xff]
  %v4247 = vld [vmem:[#allocation2 + $0x48] sm:$0xff]
  %v4248 = vld [vmem:[#allocation2 + $0x50] sm:$0xff]
  %v4249 = vld [vmem:[#allocation2 + $0x58] sm:$0xff]
  %v4250 = vld [vmem:[#allocation2 + $0x60] sm:$0xff]
  %v4251 = vld [vmem:[#allocation2 + $0x68] sm:$0xff]
  %v4252 = vld [vmem:[#allocation2 + $0x78] sm:$0xff]
  %v4253 = vld [vmem:[#allocation2 + $0x80] sm:$0xff]
  %v4254 = vld [vmem:[#allocation2 + $0x88] sm:$0xff]
  %v4255 = vld [vmem:[#allocation2 + $0x90] sm:$0xff]
  %v4256 = vld [vmem:[#allocation2 + $0x98] sm:$0xff]
  %v4257 = vld [vmem:[#allocation2 + $0xa0] sm:$0xff]
  %v4258 = vld [vmem:[#allocation2 + $0xb0] sm:$0xff]
  %v4259 = vld [vmem:[#allocation2 + $0xb8] sm:$0xff]
  %v4260 = vld [vmem:[#allocation2 + $0xc0] sm:$0xff]
  %v4261 = vld [vmem:[#allocation2 + $0xc8] sm:$0xff]
  %v4262 = vld [vmem:[#allocation2 + $0xd0] sm:$0xff]
  %v4263 = vld [vmem:[#allocation2 + $0xd8] sm:$0xff]
  %4264 = vrot.lane.b32.xlu0 %v2702, 1
  %v4265 = vpop.permute.xlu0 %4264
  %4266 = vrot.lane.b32.xlu0 %v2709, 1
  %v4267 = vpop.permute.xlu0 %4266
  %4268 = vrot.lane.b32.xlu0 %v2716, 1
  %v4269 = vpop.permute.xlu0 %4268
  %4270 = vrot.lane.b32.xlu0 %v2723, 1
  %v4271 = vpop.permute.xlu0 %4270
  %4272 = vrot.lane.b32.xlu0 %v2730, 1
  %v4273 = vpop.permute.xlu0 %4272
  %v4274 = vsel %vm3466, %v4265, %v4267
  %v4275 = vsel %vm3466, %v4267, %v4269
  %v4276 = vsel %vm3466, %v4269, %v4271
  %v4277 = vsel %vm3466, %v4271, %v4273
  %v4284 = vmul.bf16 %v4240, %v4265
  %v4285 = vmul.bf16 %v4241, %v4274
  %v4286 = vmul.bf16 %v4242, %v4275
  %v4287 = vmul.bf16 %v4243, %v4276
  %v4288 = vmul.bf16 %v4244, %v4277
  %v4289 = vmul.bf16 %v4245, %v4273
  %v4290 = vmul.bf16 %v4246, %v4265
  %v4291 = vmul.bf16 %v4247, %v4274
  %v4292 = vmul.bf16 %v4248, %v4275
  %v4293 = vmul.bf16 %v4249, %v4276
  %v4294 = vmul.bf16 %v4250, %v4277
  %v4295 = vmul.bf16 %v4251, %v4273
  %v4296 = vmul.bf16 %v4252, %v4265
  %v4297 = vmul.bf16 %v4253, %v4274
  %v4298 = vmul.bf16 %v4254, %v4275
  %v4299 = vmul.bf16 %v4255, %v4276
  %v4300 = vmul.bf16 %v4256, %v4277
  %v4301 = vmul.bf16 %v4257, %v4273
  %v4302 = vmul.bf16 %v4258, %v4265
  %v4303 = vmul.bf16 %v4259, %v4274
  %v4304 = vmul.bf16 %v4260, %v4275
  %v4305 = vmul.bf16 %v4261, %v4276
  %v4306 = vmul.bf16 %v4262, %v4277
  %v4307 = vmul.bf16 %v4263, %v4273
  %s4308 = scalar_lea.vmem %s2, 240
  %v4309 = vld [vmem:[%s4308] sm:$0xf]
  %v4310 = vld [vmem:[%s4308 + $0x4] sm:$0xf]
  %v4311 = vld [vmem:[%s4308 + $0x8] sm:$0xf]
  %v4312 = vld [vmem:[%s4308 + $0xc] sm:$0xf]
  %v4313 = vld [vmem:[%s4308 + $0x10] sm:$0xf]
  %v4314 = vld [vmem:[%s4308 + $0x14] sm:$0xf]
  %v4315 = vld [vmem:[%s4308 + $0x18] sm:$0xf]
  %v4316 = vld [vmem:[%s4308 + $0x1c] sm:$0xf]
  %v4317 = vld [vmem:[%s4308 + $0x20] sm:$0xf]
  %v4318 = vld [vmem:[%s4308 + $0x24] sm:$0xf]
  %v4319 = vld [vmem:[%s4308 + $0x28] sm:$0xf]
  %v4320 = vld [vmem:[%s4308 + $0x2c] sm:$0xf]
  %v4333 = vunpack.c.l.b16 %v4309
  %v4334 = vunpack.c.l.b16 %v4310
  %v4335 = vunpack.c.l.b16 %v4311
  %v4336 = vunpack.c.l.b16 %v4312
  %v4337 = vunpack.c.l.b16 %v4313
  %v4338 = vunpack.c.l.b16 %v4314
  %v4339 = vunpack.c.l.b16 %v4315
  %v4340 = vunpack.c.l.b16 %v4316
  %v4341 = vunpack.c.l.b16 %v4317
  %v4342 = vunpack.c.l.b16 %v4318
  %v4343 = vunpack.c.l.b16 %v4319
  %v4344 = vunpack.c.l.b16 %v4320
  %v4345 = vpack.c.b16 %v4334, %v4333
  %v4346 = vpack.c.b16 %v4336, %v4335
  %v4347 = vpack.c.b16 %v4338, %v4337
  %v4348 = vpack.c.b16 %v4340, %v4339
  %v4349 = vpack.c.b16 %v4342, %v4341
  %v4350 = vpack.c.b16 %v4344, %v4343
  %4375 = vrot.lane.b32.xlu0 %v4284, 127
  %v4376 = vpop.permute.xlu0 %4375
  %4377 = vrot.lane.b32.xlu0 %v4285, 127
  %v4378 = vpop.permute.xlu0 %4377
  %4379 = vrot.lane.b32.xlu0 %v4286, 127
  %v4380 = vpop.permute.xlu0 %4379
  %4381 = vrot.lane.b32.xlu0 %v4287, 127
  %v4382 = vpop.permute.xlu0 %4381
  %4383 = vrot.lane.b32.xlu0 %v4288, 127
  %v4384 = vpop.permute.xlu0 %4383
  %4385 = vrot.lane.b32.xlu0 %v4289, 127
  %v4386 = vpop.permute.xlu0 %4385
  %4387 = vrot.lane.b32.xlu0 %v4290, 127
  %v4388 = vpop.permute.xlu0 %4387
  %4389 = vrot.lane.b32.xlu0 %v4291, 127
  %v4390 = vpop.permute.xlu0 %4389
  %4391 = vrot.lane.b32.xlu0 %v4292, 127
  %v4392 = vpop.permute.xlu0 %4391
  %4393 = vrot.lane.b32.xlu0 %v4293, 127
  %v4394 = vpop.permute.xlu0 %4393
  %4395 = vrot.lane.b32.xlu0 %v4294, 127
  %v4396 = vpop.permute.xlu0 %4395
  %4397 = vrot.lane.b32.xlu0 %v4295, 127
  %v4398 = vpop.permute.xlu0 %4397
  %4399 = vrot.lane.b32.xlu0 %v4296, 127
  %v4400 = vpop.permute.xlu0 %4399
  %4401 = vrot.lane.b32.xlu0 %v4297, 127
  %v4402 = vpop.permute.xlu0 %4401
  %4403 = vrot.lane.b32.xlu0 %v4298, 127
  %v4404 = vpop.permute.xlu0 %4403
  %4405 = vrot.lane.b32.xlu0 %v4299, 127
  %v4406 = vpop.permute.xlu0 %4405
  %4407 = vrot.lane.b32.xlu0 %v4300, 127
  %v4408 = vpop.permute.xlu0 %4407
  %4409 = vrot.lane.b32.xlu0 %v4301, 127
  %v4410 = vpop.permute.xlu0 %4409
  %4411 = vrot.lane.b32.xlu0 %v4302, 127
  %v4412 = vpop.permute.xlu0 %4411
  %4413 = vrot.lane.b32.xlu0 %v4303, 127
  %v4414 = vpop.permute.xlu0 %4413
  %4415 = vrot.lane.b32.xlu0 %v4304, 127
  %v4416 = vpop.permute.xlu0 %4415
  %4417 = vrot.lane.b32.xlu0 %v4305, 127
  %v4418 = vpop.permute.xlu0 %4417
  %4419 = vrot.lane.b32.xlu0 %v4306, 127
  %v4420 = vpop.permute.xlu0 %4419
  %4421 = vrot.lane.b32.xlu0 %v4307, 127
  %v4422 = vpop.permute.xlu0 %4421
  %v4423 = vsel %vm3316, %v4376, %v4378
  %v4424 = vsel %vm3316, %v4378, %v4380
  %v4425 = vsel %vm3316, %v4380, %v4382
  %v4426 = vsel %vm3316, %v4382, %v4384
  %v4427 = vsel %vm3316, %v4384, %v4386
  %v4428 = vsel %vm3316, %v4388, %v4390
  %v4429 = vsel %vm3316, %v4390, %v4392
  %v4430 = vsel %vm3316, %v4392, %v4394
  %v4431 = vsel %vm3316, %v4394, %v4396
  %v4432 = vsel %vm3316, %v4396, %v4398
  %v4433 = vsel %vm3316, %v4400, %v4402
  %v4434 = vsel %vm3316, %v4402, %v4404
  %v4435 = vsel %vm3316, %v4404, %v4406
  %v4436 = vsel %vm3316, %v4406, %v4408
  %v4437 = vsel %vm3316, %v4408, %v4410
  %v4438 = vsel %vm3316, %v4412, %v4414
  %v4439 = vsel %vm3316, %v4414, %v4416
  %v4440 = vsel %vm3316, %v4416, %v4418
  %v4441 = vsel %vm3316, %v4418, %v4420
  %v4442 = vsel %vm3316, %v4420, %v4422
  %v4464 = vsel %vm1941, %v4345, 0
  %v4467 = vsel %vm1941, %v4346, 0
  %v4470 = vsel %vm1941, %v4347, 0
  %v4473 = vsel %vm1941, %v4348, 0
  %v4476 = vsel %vm1941, %v4349, 0
  %v4479 = vsel %vm1941, %v4350, 0
  %4481 = vmatprep.subr.bf16.mxu0 %v4424
  %4482 = vmatpush1.bf16.msra.mxu0 %v4423
  %4483 = vmatprep.subr.bf16.mxu0 %v4429
  %4484 = vmatpush1.bf16.msra.mxu0 %v4428
  %4485 = vmatprep.subr.bf16.mxu0 %v4434
  %4486 = vmatpush1.bf16.msra.mxu0 %v4433
  %4487 = vmatprep.subr.bf16.mxu0 %v4439
  %4488 = vmatpush1.bf16.msra.mxu0 %v4438
  %4489 = vmatprep.subr.bf16.mxu0 0
  %4490 = vmatpush1.bf16.msra.mxu0 0
  %4491 = vmatprep.subr.bf16.mxu0 0
  %4492 = vmatpush1.bf16.msra.mxu0 0
  %4493 = vmatprep.subr.bf16.mxu0 0
  %4494 = vmatpush1.bf16.msra.mxu0 0
  %4495 = vmatprep.subr.bf16.mxu0 0
  %4496 = vmatpush1.bf16.msra.mxu0 0
  %4497 = vmatprep.subr.bf16.mxu0 0
  %4498 = vmatpush1.bf16.msra.mxu0 0
  %4499 = vmatprep.subr.bf16.mxu0 0
  %4500 = vmatpush1.bf16.msra.mxu0 0
  %4501 = vmatprep.subr.bf16.mxu0 0
  %4502 = vmatpush1.bf16.msra.mxu0 0
  %4503 = vmatprep.subr.bf16.mxu0 0
  %4504 = vmatpush1.bf16.msra.mxu0 0
  %4505 = vmatprep.subr.bf16.mxu0 0
  %4506 = vmatpush1.bf16.msra.mxu0 0
  %4507 = vmatprep.subr.bf16.mxu0 0
  %4508 = vmatpush1.bf16.msra.mxu0 0
  %4509 = vmatprep.subr.bf16.mxu0 0
  %4510 = vmatpush1.bf16.msra.mxu0 0
  %4511 = vmatprep.subr.bf16.mxu0 0
  %4512 = vmatpush1.bf16.msra.mxu0 0
  %4513 = vmatprep.mubr.bf16.mxu0 0
  %4514 = vmatmul.mubr.bf16.gmra.mrb[0].mxu0 %v4464
  %v4515 = vpop.f32.mrb[0].mxu0
  %v4516 = vadd.f32 0.0, %v4515
  %v4517 = vpop.f32.mrb[0].mxu0
  %v4518 = vadd.f32 0.0, %v4517
  %v4519 = vpop.f32.mrb[0].mxu0
  %v4520 = vadd.f32 0.0, %v4519
  %v4521 = vpop.f32.mrb[0].mxu0
  %v4522 = vadd.f32 0.0, %v4521
  %4523 = vmatprep.mubr.bf16.mxu0 0
  %4524 = vmatmul.mubr.bf16.gmra.mrb[0].mxu0 %v4467
  %v4525 = vpop.f32.mrb[0].mxu0
  %v4526 = vadd.f32 0.0, %v4525
  %v4527 = vpop.f32.mrb[0].mxu0
  %v4528 = vadd.f32 0.0, %v4527
  %v4529 = vpop.f32.mrb[0].mxu0
  %v4530 = vadd.f32 0.0, %v4529
  %v4531 = vpop.f32.mrb[0].mxu0
  %v4532 = vadd.f32 0.0, %v4531
  %4533 = vmatprep.mubr.bf16.mxu0 0
  %4534 = vmatmul.mubr.bf16.gmra.mrb[0].mxu0 %v4470
  %v4535 = vpop.f32.mrb[0].mxu0
  %v4536 = vadd.f32 0.0, %v4535
  %v4537 = vpop.f32.mrb[0].mxu0
  %v4538 = vadd.f32 0.0, %v4537
  %v4539 = vpop.f32.mrb[0].mxu0
  %v4540 = vadd.f32 0.0, %v4539
  %v4541 = vpop.f32.mrb[0].mxu0
  %v4542 = vadd.f32 0.0, %v4541
  %4543 = vmatprep.mubr.bf16.mxu0 0
  %4544 = vmatmul.mubr.bf16.gmra.mrb[0].mxu0 %v4473
  %v4545 = vpop.f32.mrb[0].mxu0
  %v4546 = vadd.f32 0.0, %v4545
  %v4547 = vpop.f32.mrb[0].mxu0
  %v4548 = vadd.f32 0.0, %v4547
  %v4549 = vpop.f32.mrb[0].mxu0
  %v4550 = vadd.f32 0.0, %v4549
  %v4551 = vpop.f32.mrb[0].mxu0
  %v4552 = vadd.f32 0.0, %v4551
  %4553 = vmatprep.mubr.bf16.mxu0 0
  %4554 = vmatmul.mubr.bf16.gmra.mrb[0].mxu0 %v4476
  %v4555 = vpop.f32.mrb[0].mxu0
  %v4556 = vadd.f32 0.0, %v4555
  %v4557 = vpop.f32.mrb[0].mxu0
  %v4558 = vadd.f32 0.0, %v4557
  %v4559 = vpop.f32.mrb[0].mxu0
  %v4560 = vadd.f32 0.0, %v4559
  %v4561 = vpop.f32.mrb[0].mxu0
  %v4562 = vadd.f32 0.0, %v4561
  %4563 = vmatprep.mubr.bf16.mxu0 0
  %4564 = vmatmul.mubr.bf16.gmra.mrb[0].mxu0 %v4479
  %v4565 = vpop.f32.mrb[0].mxu0
  %v4566 = vadd.f32 0.0, %v4565
  %v4567 = vpop.f32.mrb[0].mxu0
  %v4568 = vadd.f32 0.0, %v4567
  %v4569 = vpop.f32.mrb[0].mxu0
  %v4570 = vadd.f32 0.0, %v4569
  %v4571 = vpop.f32.mrb[0].mxu0
  %v4572 = vadd.f32 0.0, %v4571
  %4573 = vdwg.mxu0
  %4574 = vmatprep.subr.bf16.mxu0 %v4426
  %4575 = vmatpush1.bf16.msra.mxu0 %v4425
  %4576 = vmatprep.subr.bf16.mxu0 %v4431
  %4577 = vmatpush1.bf16.msra.mxu0 %v4430
  %4578 = vmatprep.subr.bf16.mxu0 %v4436
  %4579 = vmatpush1.bf16.msra.mxu0 %v4435
  %4580 = vmatprep.subr.bf16.mxu0 %v4441
  %4581 = vmatpush1.bf16.msra.mxu0 %v4440
  %4582 = vmatprep.subr.bf16.mxu0 0
  %4583 = vmatpush1.bf16.msra.mxu0 0
  %4584 = vmatprep.subr.bf16.mxu0 0
  %4585 = vmatpush1.bf16.msra.mxu0 0
  %4586 = vmatprep.subr.bf16.mxu0 0
  %4587 = vmatpush1.bf16.msra.mxu0 0
  %4588 = vmatprep.subr.bf16.mxu0 0
  %4589 = vmatpush1.bf16.msra.mxu0 0
  %4590 = vmatprep.subr.bf16.mxu0 0
  %4591 = vmatpush1.bf16.msra.mxu0 0
  %4592 = vmatprep.subr.bf16.mxu0 0
  %4593 = vmatpush1.bf16.msra.mxu0 0
  %4594 = vmatprep.subr.bf16.mxu0 0
  %4595 = vmatpush1.bf16.msra.mxu0 0
  %4596 = vmatprep.subr.bf16.mxu0 0
  %4597 = vmatpush1.bf16.msra.mxu0 0
  %4598 = vmatprep.subr.bf16.mxu0 0
  %4599 = vmatpush1.bf16.msra.mxu0 0
  %4600 = vmatprep.subr.bf16.mxu0 0
  %4601 = vmatpush1.bf16.msra.mxu0 0
  %4602 = vmatprep.subr.bf16.mxu0 0
  %4603 = vmatpush1.bf16.msra.mxu0 0
  %4604 = vmatprep.subr.bf16.mxu0 0
  %4605 = vmatpush1.bf16.msra.mxu0 0
  %4606 = vmatprep.mubr.bf16.mxu0 0
  %4607 = vmatmul.mubr.bf16.gmra.mrb[0].mxu0 %v4464
  %v4608 = vpop.f32.mrb[0].mxu0
  %v4609 = vadd.f32 0.0, %v4608
  %v4610 = vpop.f32.mrb[0].mxu0
  %v4611 = vadd.f32 0.0, %v4610
  %v4612 = vpop.f32.mrb[0].mxu0
  %v4613 = vadd.f32 0.0, %v4612
  %v4614 = vpop.f32.mrb[0].mxu0
  %v4615 = vadd.f32 0.0, %v4614
  %4616 = vmatprep.mubr.bf16.mxu0 0
  %4617 = vmatmul.mubr.bf16.gmra.mrb[0].mxu0 %v4467
  %v4618 = vpop.f32.mrb[0].mxu0
  %v4619 = vadd.f32 0.0, %v4618
  %v4620 = vpop.f32.mrb[0].mxu0
  %v4621 = vadd.f32 0.0, %v4620
  %v4622 = vpop.f32.mrb[0].mxu0
  %v4623 = vadd.f32 0.0, %v4622
  %v4624 = vpop.f32.mrb[0].mxu0
  %v4625 = vadd.f32 0.0, %v4624
  %4626 = vmatprep.mubr.bf16.mxu0 0
  %4627 = vmatmul.mubr.bf16.gmra.mrb[0].mxu0 %v4470
  %v4628 = vpop.f32.mrb[0].mxu0
  %v4629 = vadd.f32 0.0, %v4628
  %v4630 = vpop.f32.mrb[0].mxu0
  %v4631 = vadd.f32 0.0, %v4630
  %v4632 = vpop.f32.mrb[0].mxu0
  %v4633 = vadd.f32 0.0, %v4632
  %v4634 = vpop.f32.mrb[0].mxu0
  %v4635 = vadd.f32 0.0, %v4634
  %4636 = vmatprep.mubr.bf16.mxu0 0
  %4637 = vmatmul.mubr.bf16.gmra.mrb[0].mxu0 %v4473
  %v4638 = vpop.f32.mrb[0].mxu0
  %v4639 = vadd.f32 0.0, %v4638
  %v4640 = vpop.f32.mrb[0].mxu0
  %v4641 = vadd.f32 0.0, %v4640
  %v4642 = vpop.f32.mrb[0].mxu0
  %v4643 = vadd.f32 0.0, %v4642
  %v4644 = vpop.f32.mrb[0].mxu0
  %v4645 = vadd.f32 0.0, %v4644
  %4646 = vmatprep.mubr.bf16.mxu0 0
  %4647 = vmatmul.mubr.bf16.gmra.mrb[0].mxu0 %v4476
  %v4648 = vpop.f32.mrb[0].mxu0
  %v4649 = vadd.f32 0.0, %v4648
  %v4650 = vpop.f32.mrb[0].mxu0
  %v4651 = vadd.f32 0.0, %v4650
  %v4652 = vpop.f32.mrb[0].mxu0
  %v4653 = vadd.f32 0.0, %v4652
  %v4654 = vpop.f32.mrb[0].mxu0
  %v4655 = vadd.f32 0.0, %v4654
  %4656 = vmatprep.mubr.bf16.mxu0 0
  %4657 = vmatmul.mubr.bf16.gmra.mrb[0].mxu0 %v4479
  %v4658 = vpop.f32.mrb[0].mxu0
  %v4659 = vadd.f32 0.0, %v4658
  %v4660 = vpop.f32.mrb[0].mxu0
  %v4661 = vadd.f32 0.0, %v4660
  %v4662 = vpop.f32.mrb[0].mxu0
  %v4663 = vadd.f32 0.0, %v4662
  %v4664 = vpop.f32.mrb[0].mxu0
  %v4665 = vadd.f32 0.0, %v4664
  %4666 = vdwg.mxu0
  %4667 = vmatprep.subr.bf16.mxu0 0
  %4668 = vmatpush1.bf16.msra.mxu0 %v4427
  %4669 = vmatprep.subr.bf16.mxu0 0
  %4670 = vmatpush1.bf16.msra.mxu0 %v4432
  %4671 = vmatprep.subr.bf16.mxu0 0
  %4672 = vmatpush1.bf16.msra.mxu0 %v4437
  %4673 = vmatprep.subr.bf16.mxu0 0
  %4674 = vmatpush1.bf16.msra.mxu0 %v4442
  %4675 = vmatprep.subr.bf16.mxu0 0
  %4676 = vmatpush1.bf16.msra.mxu0 0
  %4677 = vmatprep.subr.bf16.mxu0 0
  %4678 = vmatpush1.bf16.msra.mxu0 0
  %4679 = vmatprep.subr.bf16.mxu0 0
  %4680 = vmatpush1.bf16.msra.mxu0 0
  %4681 = vmatprep.subr.bf16.mxu0 0
  %4682 = vmatpush1.bf16.msra.mxu0 0
  %4683 = vmatprep.subr.bf16.mxu0 0
  %4684 = vmatpush1.bf16.msra.mxu0 0
  %4685 = vmatprep.subr.bf16.mxu0 0
  %4686 = vmatpush1.bf16.msra.mxu0 0
  %4687 = vmatprep.subr.bf16.mxu0 0
  %4688 = vmatpush1.bf16.msra.mxu0 0
  %4689 = vmatprep.subr.bf16.mxu0 0
  %4690 = vmatpush1.bf16.msra.mxu0 0
  %4691 = vmatprep.subr.bf16.mxu0 0
  %4692 = vmatpush1.bf16.msra.mxu0 0
  %4693 = vmatprep.subr.bf16.mxu0 0
  %4694 = vmatpush1.bf16.msra.mxu0 0
  %4695 = vmatprep.subr.bf16.mxu0 0
  %4696 = vmatpush1.bf16.msra.mxu0 0
  %4697 = vmatprep.subr.bf16.mxu0 0
  %4698 = vmatpush1.bf16.msra.mxu0 0
  %4699 = vmatprep.mubr.bf16.mxu0 0
  %4700 = vmatmul.mubr.bf16.gmra.mrb[0].mxu0 %v4464
  %v4701 = vpop.f32.mrb[0].mxu0
  %v4702 = vadd.f32 0.0, %v4701
  %v4703 = vpop.f32.mrb[0].mxu0
  %v4704 = vpop.f32.mrb[0].mxu0
  %v4705 = vadd.f32 0.0, %v4704
  %v4706 = vpop.f32.mrb[0].mxu0
  %4707 = vmatprep.mubr.bf16.mxu0 0
  %4708 = vmatmul.mubr.bf16.gmra.mrb[0].mxu0 %v4467
  %v4709 = vpop.f32.mrb[0].mxu0
  %v4710 = vadd.f32 0.0, %v4709
  %v4711 = vpop.f32.mrb[0].mxu0
  %v4712 = vpop.f32.mrb[0].mxu0
  %v4713 = vadd.f32 0.0, %v4712
  %v4714 = vpop.f32.mrb[0].mxu0
  %4715 = vmatprep.mubr.bf16.mxu0 0
  %4716 = vmatmul.mubr.bf16.gmra.mrb[0].mxu0 %v4470
  %v4717 = vpop.f32.mrb[0].mxu0
  %v4718 = vadd.f32 0.0, %v4717
  %v4719 = vpop.f32.mrb[0].mxu0
  %v4720 = vpop.f32.mrb[0].mxu0
  %v4721 = vadd.f32 0.0, %v4720
  %v4722 = vpop.f32.mrb[0].mxu0
  %4723 = vmatprep.mubr.bf16.mxu0 0
  %4724 = vmatmul.mubr.bf16.gmra.mrb[0].mxu0 %v4473
  %v4725 = vpop.f32.mrb[0].mxu0
  %v4726 = vadd.f32 0.0, %v4725
  %v4727 = vpop.f32.mrb[0].mxu0
  %v4728 = vpop.f32.mrb[0].mxu0
  %v4729 = vadd.f32 0.0, %v4728
  %v4730 = vpop.f32.mrb[0].mxu0
  %4731 = vmatprep.mubr.bf16.mxu0 0
  %4732 = vmatmul.mubr.bf16.gmra.mrb[0].mxu0 %v4476
  %v4733 = vpop.f32.mrb[0].mxu0
  %v4734 = vadd.f32 0.0, %v4733
  %v4735 = vpop.f32.mrb[0].mxu0
  %v4736 = vpop.f32.mrb[0].mxu0
  %v4737 = vadd.f32 0.0, %v4736
  %v4738 = vpop.f32.mrb[0].mxu0
  %4739 = vmatprep.mubr.bf16.mxu0 0
  %4740 = vmatmul.mubr.bf16.gmra.mrb[0].mxu0 %v4479
  %v4741 = vpop.f32.mrb[0].mxu0
  %v4742 = vadd.f32 0.0, %v4741
  %v4743 = vpop.f32.mrb[0].mxu0
  %v4744 = vpop.f32.mrb[0].mxu0
  %v4745 = vadd.f32 0.0, %v4744
  %v4746 = vpop.f32.mrb[0].mxu0
  %4747 = vdwg.mxu0
  %v4748 = vadd.f32 %v4180, %v4516
  %v4749 = vadd.f32 %v4181, %v4518
  %v4750 = vadd.f32 %v4182, %v4609
  %v4751 = vadd.f32 %v4183, %v4611
  %v4752 = vadd.f32 %v4184, %v4702
  %v4753 = vadd.f32 %v4185, %v4520
  %v4754 = vadd.f32 %v4186, %v4522
  %v4755 = vadd.f32 %v4187, %v4613
  %v4756 = vadd.f32 %v4188, %v4615
  %v4757 = vadd.f32 %v4189, %v4705
  %v4758 = vadd.f32 %v4190, %v4526
  %v4759 = vadd.f32 %v4191, %v4528
  %v4760 = vadd.f32 %v4192, %v4619
  %v4761 = vadd.f32 %v4193, %v4621
  %v4762 = vadd.f32 %v4194, %v4710
  %v4763 = vadd.f32 %v4195, %v4530
  %v4764 = vadd.f32 %v4196, %v4532
  %v4765 = vadd.f32 %v4197, %v4623
  %v4766 = vadd.f32 %v4198, %v4625
  %v4767 = vadd.f32 %v4199, %v4713
  %v4768 = vadd.f32 %v4200, %v4536
  %v4769 = vadd.f32 %v4201, %v4538
  %v4770 = vadd.f32 %v4202, %v4629
  %v4771 = vadd.f32 %v4203, %v4631
  %v4772 = vadd.f32 %v4204, %v4718
  %v4773 = vadd.f32 %v4205, %v4540
  %v4774 = vadd.f32 %v4206, %v4542
  %v4775 = vadd.f32 %v4207, %v4633
  %v4776 = vadd.f32 %v4208, %v4635
  %v4777 = vadd.f32 %v4209, %v4721
  %v4778 = vadd.f32 %v4210, %v4546
  %v4779 = vadd.f32 %v4211, %v4548
  %v4780 = vadd.f32 %v4212, %v4639
  %v4781 = vadd.f32 %v4213, %v4641
  %v4782 = vadd.f32 %v4214, %v4726
  %v4783 = vadd.f32 %v4215, %v4550
  %v4784 = vadd.f32 %v4216, %v4552
  %v4785 = vadd.f32 %v4217, %v4643
  %v4786 = vadd.f32 %v4218, %v4645
  %v4787 = vadd.f32 %v4219, %v4729
  %v4788 = vadd.f32 %v4220, %v4556
  %v4789 = vadd.f32 %v4221, %v4558
  %v4790 = vadd.f32 %v4222, %v4649
  %v4791 = vadd.f32 %v4223, %v4651
  %v4792 = vadd.f32 %v4224, %v4734
  %v4793 = vadd.f32 %v4225, %v4560
  %v4794 = vadd.f32 %v4226, %v4562
  %v4795 = vadd.f32 %v4227, %v4653
  %v4796 = vadd.f32 %v4228, %v4655
  %v4797 = vadd.f32 %v4229, %v4737
  %v4798 = vadd.f32 %v4230, %v4566
  %v4799 = vadd.f32 %v4231, %v4568
  %v4800 = vadd.f32 %v4232, %v4659
  %v4801 = vadd.f32 %v4233, %v4661
  %v4802 = vadd.f32 %v4234, %v4742
  %v4803 = vadd.f32 %v4235, %v4570
  %v4804 = vadd.f32 %v4236, %v4572
  %v4805 = vadd.f32 %v4237, %v4663
  %v4806 = vadd.f32 %v4238, %v4665
  %v4807 = vadd.f32 %v4239, %v4745
  %4808 = vrot.lane.b32.xlu0 %v1694, 24
  %v4809 = vpop.permute.xlu0 %4808
  %4810 = vrot.lane.b32.xlu0 %v1701, 24
  %v4811 = vpop.permute.xlu0 %4810
  %4812 = vrot.lane.b32.xlu0 %v1708, 24
  %v4813 = vpop.permute.xlu0 %4812
  %4814 = vrot.lane.b32.xlu0 %v1715, 24
  %v4815 = vpop.permute.xlu0 %4814
  %4816 = vrot.lane.b32.xlu0 %v1722, 24
  %v4817 = vpop.permute.xlu0 %4816
  %v4818 = vsel %vm2896, %v4809, %v4811
  %v4819 = vsel %vm2896, %v4811, %v4813
  %v4820 = vsel %vm2896, %v4813, %v4815
  %v4821 = vsel %vm2896, %v4815, %v4817
  %v4828 = vmul.bf16 %v4240, %v4809
  %v4829 = vmul.bf16 %v4241, %v4818
  %v4830 = vmul.bf16 %v4242, %v4819
  %v4831 = vmul.bf16 %v4243, %v4820
  %v4832 = vmul.bf16 %v4244, %v4821
  %v4833 = vmul.bf16 %v4245, %v4817
  %v4834 = vmul.bf16 %v4246, %v4809
  %v4835 = vmul.bf16 %v4247, %v4818
  %v4836 = vmul.bf16 %v4248, %v4819
  %v4837 = vmul.bf16 %v4249, %v4820
  %v4838 = vmul.bf16 %v4250, %v4821
  %v4839 = vmul.bf16 %v4251, %v4817
  %v4840 = vmul.bf16 %v4252, %v4809
  %v4841 = vmul.bf16 %v4253, %v4818
  %v4842 = vmul.bf16 %v4254, %v4819
  %v4843 = vmul.bf16 %v4255, %v4820
  %v4844 = vmul.bf16 %v4256, %v4821
  %v4845 = vmul.bf16 %v4257, %v4817
  %v4846 = vmul.bf16 %v4258, %v4809
  %v4847 = vmul.bf16 %v4259, %v4818
  %v4848 = vmul.bf16 %v4260, %v4819
  %v4849 = vmul.bf16 %v4261, %v4820
  %v4850 = vmul.bf16 %v4262, %v4821
  %v4851 = vmul.bf16 %v4263, %v4817
  %s4852 = scalar_lea.vmem %s2, 288
  %v4853 = vld [vmem:[%s4852] sm:$0xf]
  %v4854 = vld [vmem:[%s4852 + $0x4] sm:$0xf]
  %v4855 = vld [vmem:[%s4852 + $0x8] sm:$0xf]
  %v4856 = vld [vmem:[%s4852 + $0xc] sm:$0xf]
  %v4857 = vld [vmem:[%s4852 + $0x10] sm:$0xf]
  %v4858 = vld [vmem:[%s4852 + $0x14] sm:$0xf]
  %v4859 = vld [vmem:[%s4852 + $0x18] sm:$0xf]
  %v4860 = vld [vmem:[%s4852 + $0x1c] sm:$0xf]
  %v4861 = vld [vmem:[%s4852 + $0x20] sm:$0xf]
  %v4862 = vld [vmem:[%s4852 + $0x24] sm:$0xf]
  %v4863 = vld [vmem:[%s4852 + $0x28] sm:$0xf]
  %v4864 = vld [vmem:[%s4852 + $0x2c] sm:$0xf]
  %v4877 = vunpack.c.l.b16 %v4853
  %v4878 = vunpack.c.l.b16 %v4854
  %v4879 = vunpack.c.l.b16 %v4855
  %v4880 = vunpack.c.l.b16 %v4856
  %v4881 = vunpack.c.l.b16 %v4857
  %v4882 = vunpack.c.l.b16 %v4858
  %v4883 = vunpack.c.l.b16 %v4859
  %v4884 = vunpack.c.l.b16 %v4860
  %v4885 = vunpack.c.l.b16 %v4861
  %v4886 = vunpack.c.l.b16 %v4862
  %v4887 = vunpack.c.l.b16 %v4863
  %v4888 = vunpack.c.l.b16 %v4864
  %v4889 = vpack.c.b16 %v4878, %v4877
  %v4890 = vpack.c.b16 %v4880, %v4879
  %v4891 = vpack.c.b16 %v4882, %v4881
  %v4892 = vpack.c.b16 %v4884, %v4883
  %v4893 = vpack.c.b16 %v4886, %v4885
  %v4894 = vpack.c.b16 %v4888, %v4887
  %4919 = vrot.lane.b32.xlu0 %v4828, 104
  %v4920 = vpop.permute.xlu0 %4919
  %4921 = vrot.lane.b32.xlu0 %v4829, 104
  %v4922 = vpop.permute.xlu0 %4921
  %4923 = vrot.lane.b32.xlu0 %v4830, 104
  %v4924 = vpop.permute.xlu0 %4923
  %4925 = vrot.lane.b32.xlu0 %v4831, 104
  %v4926 = vpop.permute.xlu0 %4925
  %4927 = vrot.lane.b32.xlu0 %v4832, 104
  %v4928 = vpop.permute.xlu0 %4927
  %4929 = vrot.lane.b32.xlu0 %v4833, 104
  %v4930 = vpop.permute.xlu0 %4929
  %4931 = vrot.lane.b32.xlu0 %v4834, 104
  %v4932 = vpop.permute.xlu0 %4931
  %4933 = vrot.lane.b32.xlu0 %v4835, 104
  %v4934 = vpop.permute.xlu0 %4933
  %4935 = vrot.lane.b32.xlu0 %v4836, 104
  %v4936 = vpop.permute.xlu0 %4935
  %4937 = vrot.lane.b32.xlu0 %v4837, 104
  %v4938 = vpop.permute.xlu0 %4937
  %4939 = vrot.lane.b32.xlu0 %v4838, 104
  %v4940 = vpop.permute.xlu0 %4939
  %4941 = vrot.lane.b32.xlu0 %v4839, 104
  %v4942 = vpop.permute.xlu0 %4941
  %4943 = vrot.lane.b32.xlu0 %v4840, 104
  %v4944 = vpop.permute.xlu0 %4943
  %4945 = vrot.lane.b32.xlu0 %v4841, 104
  %v4946 = vpop.permute.xlu0 %4945
  %4947 = vrot.lane.b32.xlu0 %v4842, 104
  %v4948 = vpop.permute.xlu0 %4947
  %4949 = vrot.lane.b32.xlu0 %v4843, 104
  %v4950 = vpop.permute.xlu0 %4949
  %4951 = vrot.lane.b32.xlu0 %v4844, 104
  %v4952 = vpop.permute.xlu0 %4951
  %4953 = vrot.lane.b32.xlu0 %v4845, 104
  %v4954 = vpop.permute.xlu0 %4953
  %4955 = vrot.lane.b32.xlu0 %v4846, 104
  %v4956 = vpop.permute.xlu0 %4955
  %4957 = vrot.lane.b32.xlu0 %v4847, 104
  %v4958 = vpop.permute.xlu0 %4957
  %4959 = vrot.lane.b32.xlu0 %v4848, 104
  %v4960 = vpop.permute.xlu0 %4959
  %4961 = vrot.lane.b32.xlu0 %v4849, 104
  %v4962 = vpop.permute.xlu0 %4961
  %4963 = vrot.lane.b32.xlu0 %v4850, 104
  %v4964 = vpop.permute.xlu0 %4963
  %4965 = vrot.lane.b32.xlu0 %v4851, 104
  %v4966 = vpop.permute.xlu0 %4965
  %v4967 = vsel %vm2746, %v4920, %v4922
  %v4968 = vsel %vm2746, %v4922, %v4924
  %v4969 = vsel %vm2746, %v4924, %v4926
  %v4970 = vsel %vm2746, %v4926, %v4928
  %v4971 = vsel %vm2746, %v4928, %v4930
  %v4972 = vsel %vm2746, %v4932, %v4934
  %v4973 = vsel %vm2746, %v4934, %v4936
  %v4974 = vsel %vm2746, %v4936, %v4938
  %v4975 = vsel %vm2746, %v4938, %v4940
  %v4976 = vsel %vm2746, %v4940, %v4942
  %v4977 = vsel %vm2746, %v4944, %v4946
  %v4978 = vsel %vm2746, %v4946, %v4948
  %v4979 = vsel %vm2746, %v4948, %v4950
  %v4980 = vsel %vm2746, %v4950, %v4952
  %v4981 = vsel %vm2746, %v4952, %v4954
  %v4982 = vsel %vm2746, %v4956, %v4958
  %v4983 = vsel %vm2746, %v4958, %v4960
  %v4984 = vsel %vm2746, %v4960, %v4962
  %v4985 = vsel %vm2746, %v4962, %v4964
  %v4986 = vsel %vm2746, %v4964, %v4966
  %v5008 = vsel %vm1941, %v4889, 0
  %v5011 = vsel %vm1941, %v4890, 0
  %v5014 = vsel %vm1941, %v4891, 0
  %v5017 = vsel %vm1941, %v4892, 0
  %v5020 = vsel %vm1941, %v4893, 0
  %v5023 = vsel %vm1941, %v4894, 0
  %5025 = vmatprep.subr.bf16.mxu0 %v4968
  %5026 = vmatpush1.bf16.msra.mxu0 %v4967
  %5027 = vmatprep.subr.bf16.mxu0 %v4973
  %5028 = vmatpush1.bf16.msra.mxu0 %v4972
  %5029 = vmatprep.subr.bf16.mxu0 %v4978
  %5030 = vmatpush1.bf16.msra.mxu0 %v4977
  %5031 = vmatprep.subr.bf16.mxu0 %v4983
  %5032 = vmatpush1.bf16.msra.mxu0 %v4982
  %5033 = vmatprep.subr.bf16.mxu0 0
  %5034 = vmatpush1.bf16.msra.mxu0 0
  %5035 = vmatprep.subr.bf16.mxu0 0
  %5036 = vmatpush1.bf16.msra.mxu0 0
  %5037 = vmatprep.subr.bf16.mxu0 0
  %5038 = vmatpush1.bf16.msra.mxu0 0
  %5039 = vmatprep.subr.bf16.mxu0 0
  %5040 = vmatpush1.bf16.msra.mxu0 0
  %5041 = vmatprep.subr.bf16.mxu0 0
  %5042 = vmatpush1.bf16.msra.mxu0 0
  %5043 = vmatprep.subr.bf16.mxu0 0
  %5044 = vmatpush1.bf16.msra.mxu0 0
  %5045 = vmatprep.subr.bf16.mxu0 0
  %5046 = vmatpush1.bf16.msra.mxu0 0
  %5047 = vmatprep.subr.bf16.mxu0 0
  %5048 = vmatpush1.bf16.msra.mxu0 0
  %5049 = vmatprep.subr.bf16.mxu0 0
  %5050 = vmatpush1.bf16.msra.mxu0 0
  %5051 = vmatprep.subr.bf16.mxu0 0
  %5052 = vmatpush1.bf16.msra.mxu0 0
  %5053 = vmatprep.subr.bf16.mxu0 0
  %5054 = vmatpush1.bf16.msra.mxu0 0
  %5055 = vmatprep.subr.bf16.mxu0 0
  %5056 = vmatpush1.bf16.msra.mxu0 0
  %5057 = vmatprep.mubr.bf16.mxu0 0
  %5058 = vmatmul.mubr.bf16.gmra.mrb[0].mxu0 %v5008
  %v5059 = vpop.f32.mrb[0].mxu0
  %v5060 = vadd.f32 0.0, %v5059
  %v5061 = vpop.f32.mrb[0].mxu0
  %v5062 = vadd.f32 0.0, %v5061
  %v5063 = vpop.f32.mrb[0].mxu0
  %v5064 = vadd.f32 0.0, %v5063
  %v5065 = vpop.f32.mrb[0].mxu0
  %v5066 = vadd.f32 0.0, %v5065
  %5067 = vmatprep.mubr.bf16.mxu0 0
  %5068 = vmatmul.mubr.bf16.gmra.mrb[0].mxu0 %v5011
  %v5069 = vpop.f32.mrb[0].mxu0
  %v5070 = vadd.f32 0.0, %v5069
  %v5071 = vpop.f32.mrb[0].mxu0
  %v5072 = vadd.f32 0.0, %v5071
  %v5073 = vpop.f32.mrb[0].mxu0
  %v5074 = vadd.f32 0.0, %v5073
  %v5075 = vpop.f32.mrb[0].mxu0
  %v5076 = vadd.f32 0.0, %v5075
  %5077 = vmatprep.mubr.bf16.mxu0 0
  %5078 = vmatmul.mubr.bf16.gmra.mrb[0].mxu0 %v5014
  %v5079 = vpop.f32.mrb[0].mxu0
  %v5080 = vadd.f32 0.0, %v5079
  %v5081 = vpop.f32.mrb[0].mxu0
  %v5082 = vadd.f32 0.0, %v5081
  %v5083 = vpop.f32.mrb[0].mxu0
  %v5084 = vadd.f32 0.0, %v5083
  %v5085 = vpop.f32.mrb[0].mxu0
  %v5086 = vadd.f32 0.0, %v5085
  %5087 = vmatprep.mubr.bf16.mxu0 0
  %5088 = vmatmul.mubr.bf16.gmra.mrb[0].mxu0 %v5017
  %v5089 = vpop.f32.mrb[0].mxu0
  %v5090 = vadd.f32 0.0, %v5089
  %v5091 = vpop.f32.mrb[0].mxu0
  %v5092 = vadd.f32 0.0, %v5091
  %v5093 = vpop.f32.mrb[0].mxu0
  %v5094 = vadd.f32 0.0, %v5093
  %v5095 = vpop.f32.mrb[0].mxu0
  %v5096 = vadd.f32 0.0, %v5095
  %5097 = vmatprep.mubr.bf16.mxu0 0
  %5098 = vmatmul.mubr.bf16.gmra.mrb[0].mxu0 %v5020
  %v5099 = vpop.f32.mrb[0].mxu0
  %v5100 = vadd.f32 0.0, %v5099
  %v5101 = vpop.f32.mrb[0].mxu0
  %v5102 = vadd.f32 0.0, %v5101
  %v5103 = vpop.f32.mrb[0].mxu0
  %v5104 = vadd.f32 0.0, %v5103
  %v5105 = vpop.f32.mrb[0].mxu0
  %v5106 = vadd.f32 0.0, %v5105
  %5107 = vmatprep.mubr.bf16.mxu0 0
  %5108 = vmatmul.mubr.bf16.gmra.mrb[0].mxu0 %v5023
  %v5109 = vpop.f32.mrb[0].mxu0
  %v5110 = vadd.f32 0.0, %v5109
  %v5111 = vpop.f32.mrb[0].mxu0
  %v5112 = vadd.f32 0.0, %v5111
  %v5113 = vpop.f32.mrb[0].mxu0
  %v5114 = vadd.f32 0.0, %v5113
  %v5115 = vpop.f32.mrb[0].mxu0
  %v5116 = vadd.f32 0.0, %v5115
  %5117 = vdwg.mxu0
  %5118 = vmatprep.subr.bf16.mxu0 %v4970
  %5119 = vmatpush1.bf16.msra.mxu0 %v4969
  %5120 = vmatprep.subr.bf16.mxu0 %v4975
  %5121 = vmatpush1.bf16.msra.mxu0 %v4974
  %5122 = vmatprep.subr.bf16.mxu0 %v4980
  %5123 = vmatpush1.bf16.msra.mxu0 %v4979
  %5124 = vmatprep.subr.bf16.mxu0 %v4985
  %5125 = vmatpush1.bf16.msra.mxu0 %v4984
  %5126 = vmatprep.subr.bf16.mxu0 0
  %5127 = vmatpush1.bf16.msra.mxu0 0
  %5128 = vmatprep.subr.bf16.mxu0 0
  %5129 = vmatpush1.bf16.msra.mxu0 0
  %5130 = vmatprep.subr.bf16.mxu0 0
  %5131 = vmatpush1.bf16.msra.mxu0 0
  %5132 = vmatprep.subr.bf16.mxu0 0
  %5133 = vmatpush1.bf16.msra.mxu0 0
  %5134 = vmatprep.subr.bf16.mxu0 0
  %5135 = vmatpush1.bf16.msra.mxu0 0
  %5136 = vmatprep.subr.bf16.mxu0 0
  %5137 = vmatpush1.bf16.msra.mxu0 0
  %5138 = vmatprep.subr.bf16.mxu0 0
  %5139 = vmatpush1.bf16.msra.mxu0 0
  %5140 = vmatprep.subr.bf16.mxu0 0
  %5141 = vmatpush1.bf16.msra.mxu0 0
  %5142 = vmatprep.subr.bf16.mxu0 0
  %5143 = vmatpush1.bf16.msra.mxu0 0
  %5144 = vmatprep.subr.bf16.mxu0 0
  %5145 = vmatpush1.bf16.msra.mxu0 0
  %5146 = vmatprep.subr.bf16.mxu0 0
  %5147 = vmatpush1.bf16.msra.mxu0 0
  %5148 = vmatprep.subr.bf16.mxu0 0
  %5149 = vmatpush1.bf16.msra.mxu0 0
  %5150 = vmatprep.mubr.bf16.mxu0 0
  %5151 = vmatmul.mubr.bf16.gmra.mrb[0].mxu0 %v5008
  %v5152 = vpop.f32.mrb[0].mxu0
  %v5153 = vadd.f32 0.0, %v5152
  %v5154 = vpop.f32.mrb[0].mxu0
  %v5155 = vadd.f32 0.0, %v5154
  %v5156 = vpop.f32.mrb[0].mxu0
  %v5157 = vadd.f32 0.0, %v5156
  %v5158 = vpop.f32.mrb[0].mxu0
  %v5159 = vadd.f32 0.0, %v5158
  %5160 = vmatprep.mubr.bf16.mxu0 0
  %5161 = vmatmul.mubr.bf16.gmra.mrb[0].mxu0 %v5011
  %v5162 = vpop.f32.mrb[0].mxu0
  %v5163 = vadd.f32 0.0, %v5162
  %v5164 = vpop.f32.mrb[0].mxu0
  %v5165 = vadd.f32 0.0, %v5164
  %v5166 = vpop.f32.mrb[0].mxu0
  %v5167 = vadd.f32 0.0, %v5166
  %v5168 = vpop.f32.mrb[0].mxu0
  %v5169 = vadd.f32 0.0, %v5168
  %5170 = vmatprep.mubr.bf16.mxu0 0
  %5171 = vmatmul.mubr.bf16.gmra.mrb[0].mxu0 %v5014
  %v5172 = vpop.f32.mrb[0].mxu0
  %v5173 = vadd.f32 0.0, %v5172
  %v5174 = vpop.f32.mrb[0].mxu0
  %v5175 = vadd.f32 0.0, %v5174
  %v5176 = vpop.f32.mrb[0].mxu0
  %v5177 = vadd.f32 0.0, %v5176
  %v5178 = vpop.f32.mrb[0].mxu0
  %v5179 = vadd.f32 0.0, %v5178
  %5180 = vmatprep.mubr.bf16.mxu0 0
  %5181 = vmatmul.mubr.bf16.gmra.mrb[0].mxu0 %v5017
  %v5182 = vpop.f32.mrb[0].mxu0
  %v5183 = vadd.f32 0.0, %v5182
  %v5184 = vpop.f32.mrb[0].mxu0
  %v5185 = vadd.f32 0.0, %v5184
  %v5186 = vpop.f32.mrb[0].mxu0
  %v5187 = vadd.f32 0.0, %v5186
  %v5188 = vpop.f32.mrb[0].mxu0
  %v5189 = vadd.f32 0.0, %v5188
  %5190 = vmatprep.mubr.bf16.mxu0 0
  %5191 = vmatmul.mubr.bf16.gmra.mrb[0].mxu0 %v5020
  %v5192 = vpop.f32.mrb[0].mxu0
  %v5193 = vadd.f32 0.0, %v5192
  %v5194 = vpop.f32.mrb[0].mxu0
  %v5195 = vadd.f32 0.0, %v5194
  %v5196 = vpop.f32.mrb[0].mxu0
  %v5197 = vadd.f32 0.0, %v5196
  %v5198 = vpop.f32.mrb[0].mxu0
  %v5199 = vadd.f32 0.0, %v5198
  %5200 = vmatprep.mubr.bf16.mxu0 0
  %5201 = vmatmul.mubr.bf16.gmra.mrb[0].mxu0 %v5023
  %v5202 = vpop.f32.mrb[0].mxu0
  %v5203 = vadd.f32 0.0, %v5202
  %v5204 = vpop.f32.mrb[0].mxu0
  %v5205 = vadd.f32 0.0, %v5204
  %v5206 = vpop.f32.mrb[0].mxu0
  %v5207 = vadd.f32 0.0, %v5206
  %v5208 = vpop.f32.mrb[0].mxu0
  %v5209 = vadd.f32 0.0, %v5208
  %5210 = vdwg.mxu0
  %5211 = vmatprep.subr.bf16.mxu0 0
  %5212 = vmatpush1.bf16.msra.mxu0 %v4971
  %5213 = vmatprep.subr.bf16.mxu0 0
  %5214 = vmatpush1.bf16.msra.mxu0 %v4976
  %5215 = vmatprep.subr.bf16.mxu0 0
  %5216 = vmatpush1.bf16.msra.mxu0 %v4981
  %5217 = vmatprep.subr.bf16.mxu0 0
  %5218 = vmatpush1.bf16.msra.mxu0 %v4986
  %5219 = vmatprep.subr.bf16.mxu0 0
  %5220 = vmatpush1.bf16.msra.mxu0 0
  %5221 = vmatprep.subr.bf16.mxu0 0
  %5222 = vmatpush1.bf16.msra.mxu0 0
  %5223 = vmatprep.subr.bf16.mxu0 0
  %5224 = vmatpush1.bf16.msra.mxu0 0
  %5225 = vmatprep.subr.bf16.mxu0 0
  %5226 = vmatpush1.bf16.msra.mxu0 0
  %5227 = vmatprep.subr.bf16.mxu0 0
  %5228 = vmatpush1.bf16.msra.mxu0 0
  %5229 = vmatprep.subr.bf16.mxu0 0
  %5230 = vmatpush1.bf16.msra.mxu0 0
  %5231 = vmatprep.subr.bf16.mxu0 0
  %5232 = vmatpush1.bf16.msra.mxu0 0
  %5233 = vmatprep.subr.bf16.mxu0 0
  %5234 = vmatpush1.bf16.msra.mxu0 0
  %5235 = vmatprep.subr.bf16.mxu0 0
  %5236 = vmatpush1.bf16.msra.mxu0 0
  %5237 = vmatprep.subr.bf16.mxu0 0
  %5238 = vmatpush1.bf16.msra.mxu0 0
  %5239 = vmatprep.subr.bf16.mxu0 0
  %5240 = vmatpush1.bf16.msra.mxu0 0
  %5241 = vmatprep.subr.bf16.mxu0 0
  %5242 = vmatpush1.bf16.msra.mxu0 0
  %5243 = vmatprep.mubr.bf16.mxu0 0
  %5244 = vmatmul.mubr.bf16.gmra.mrb[0].mxu0 %v5008
  %v5245 = vpop.f32.mrb[0].mxu0
  %v5246 = vadd.f32 0.0, %v5245
  %v5247 = vpop.f32.mrb[0].mxu0
  %v5248 = vpop.f32.mrb[0].mxu0
  %v5249 = vadd.f32 0.0, %v5248
  %v5250 = vpop.f32.mrb[0].mxu0
  %5251 = vmatprep.mubr.bf16.mxu0 0
  %5252 = vmatmul.mubr.bf16.gmra.mrb[0].mxu0 %v5011
  %v5253 = vpop.f32.mrb[0].mxu0
  %v5254 = vadd.f32 0.0, %v5253
  %v5255 = vpop.f32.mrb[0].mxu0
  %v5256 = vpop.f32.mrb[0].mxu0
  %v5257 = vadd.f32 0.0, %v5256
  %v5258 = vpop.f32.mrb[0].mxu0
  %5259 = vmatprep.mubr.bf16.mxu0 0
  %5260 = vmatmul.mubr.bf16.gmra.mrb[0].mxu0 %v5014
  %v5261 = vpop.f32.mrb[0].mxu0
  %v5262 = vadd.f32 0.0, %v5261
  %v5263 = vpop.f32.mrb[0].mxu0
  %v5264 = vpop.f32.mrb[0].mxu0
  %v5265 = vadd.f32 0.0, %v5264
  %v5266 = vpop.f32.mrb[0].mxu0
  %5267 = vmatprep.mubr.bf16.mxu0 0
  %5268 = vmatmul.mubr.bf16.gmra.mrb[0].mxu0 %v5017
  %v5269 = vpop.f32.mrb[0].mxu0
  %v5270 = vadd.f32 0.0, %v5269
  %v5271 = vpop.f32.mrb[0].mxu0
  %v5272 = vpop.f32.mrb[0].mxu0
  %v5273 = vadd.f32 0.0, %v5272
  %v5274 = vpop.f32.mrb[0].mxu0
  %5275 = vmatprep.mubr.bf16.mxu0 0
  %5276 = vmatmul.mubr.bf16.gmra.mrb[0].mxu0 %v5020
  %v5277 = vpop.f32.mrb[0].mxu0
  %v5278 = vadd.f32 0.0, %v5277
  %v5279 = vpop.f32.mrb[0].mxu0
  %v5280 = vpop.f32.mrb[0].mxu0
  %v5281 = vadd.f32 0.0, %v5280
  %v5282 = vpop.f32.mrb[0].mxu0
  %5283 = vmatprep.mubr.bf16.mxu0 0
  %5284 = vmatmul.mubr.bf16.gmra.mrb[0].mxu0 %v5023
  %v5285 = vpop.f32.mrb[0].mxu0
  %v5286 = vadd.f32 0.0, %v5285
  %v5287 = vpop.f32.mrb[0].mxu0
  %v5288 = vpop.f32.mrb[0].mxu0
  %v5289 = vadd.f32 0.0, %v5288
  %v5290 = vpop.f32.mrb[0].mxu0
  %5291 = vdwg.mxu0
  %v5292 = vadd.f32 %v4748, %v5060
  %v5293 = vadd.f32 %v4749, %v5062
  %v5294 = vadd.f32 %v4750, %v5153
  %v5295 = vadd.f32 %v4751, %v5155
  %v5296 = vadd.f32 %v4752, %v5246
  %v5297 = vadd.f32 %v4753, %v5064
  %v5298 = vadd.f32 %v4754, %v5066
  %v5299 = vadd.f32 %v4755, %v5157
  %v5300 = vadd.f32 %v4756, %v5159
  %v5301 = vadd.f32 %v4757, %v5249
  %v5302 = vadd.f32 %v4758, %v5070
  %v5303 = vadd.f32 %v4759, %v5072
  %v5304 = vadd.f32 %v4760, %v5163
  %v5305 = vadd.f32 %v4761, %v5165
  %v5306 = vadd.f32 %v4762, %v5254
  %v5307 = vadd.f32 %v4763, %v5074
  %v5308 = vadd.f32 %v4764, %v5076
  %v5309 = vadd.f32 %v4765, %v5167
  %v5310 = vadd.f32 %v4766, %v5169
  %v5311 = vadd.f32 %v4767, %v5257
  %v5312 = vadd.f32 %v4768, %v5080
  %v5313 = vadd.f32 %v4769, %v5082
  %v5314 = vadd.f32 %v4770, %v5173
  %v5315 = vadd.f32 %v4771, %v5175
  %v5316 = vadd.f32 %v4772, %v5262
  %v5317 = vadd.f32 %v4773, %v5084
  %v5318 = vadd.f32 %v4774, %v5086
  %v5319 = vadd.f32 %v4775, %v5177
  %v5320 = vadd.f32 %v4776, %v5179
  %v5321 = vadd.f32 %v4777, %v5265
  %v5322 = vadd.f32 %v4778, %v5090
  %v5323 = vadd.f32 %v4779, %v5092
  %v5324 = vadd.f32 %v4780, %v5183
  %v5325 = vadd.f32 %v4781, %v5185
  %v5326 = vadd.f32 %v4782, %v5270
  %v5327 = vadd.f32 %v4783, %v5094
  %v5328 = vadd.f32 %v4784, %v5096
  %v5329 = vadd.f32 %v4785, %v5187
  %v5330 = vadd.f32 %v4786, %v5189
  %v5331 = vadd.f32 %v4787, %v5273
  %v5332 = vadd.f32 %v4788, %v5100
  %v5333 = vadd.f32 %v4789, %v5102
  %v5334 = vadd.f32 %v4790, %v5193
  %v5335 = vadd.f32 %v4791, %v5195
  %v5336 = vadd.f32 %v4792, %v5278
  %v5337 = vadd.f32 %v4793, %v5104
  %v5338 = vadd.f32 %v4794, %v5106
  %v5339 = vadd.f32 %v4795, %v5197
  %v5340 = vadd.f32 %v4796, %v5199
  %v5341 = vadd.f32 %v4797, %v5281
  %v5342 = vadd.f32 %v4798, %v5110
  %v5343 = vadd.f32 %v4799, %v5112
  %v5344 = vadd.f32 %v4800, %v5203
  %v5345 = vadd.f32 %v4801, %v5205
  %v5346 = vadd.f32 %v4802, %v5286
  %v5347 = vadd.f32 %v4803, %v5114
  %v5348 = vadd.f32 %v4804, %v5116
  %v5349 = vadd.f32 %v4805, %v5207
  %v5350 = vadd.f32 %v4806, %v5209
  %v5351 = vadd.f32 %v4807, %v5289
  %s5352 = scalar_lea.vmem %s2, 336
  %v5353 = vld [vmem:[%s5352] sm:$0xf]
  %v5354 = vld [vmem:[%s5352 + $0x4] sm:$0xf]
  %v5355 = vld [vmem:[%s5352 + $0x8] sm:$0xf]
  %v5356 = vld [vmem:[%s5352 + $0xc] sm:$0xf]
  %v5357 = vld [vmem:[%s5352 + $0x10] sm:$0xf]
  %v5358 = vld [vmem:[%s5352 + $0x14] sm:$0xf]
  %v5359 = vld [vmem:[%s5352 + $0x18] sm:$0xf]
  %v5360 = vld [vmem:[%s5352 + $0x1c] sm:$0xf]
  %v5361 = vld [vmem:[%s5352 + $0x20] sm:$0xf]
  %v5362 = vld [vmem:[%s5352 + $0x24] sm:$0xf]
  %v5363 = vld [vmem:[%s5352 + $0x28] sm:$0xf]
  %v5364 = vld [vmem:[%s5352 + $0x2c] sm:$0xf]
  %v5377 = vunpack.c.l.b16 %v5353
  %v5378 = vunpack.c.l.b16 %v5354
  %v5379 = vunpack.c.l.b16 %v5355
  %v5380 = vunpack.c.l.b16 %v5356
  %v5381 = vunpack.c.l.b16 %v5357
  %v5382 = vunpack.c.l.b16 %v5358
  %v5383 = vunpack.c.l.b16 %v5359
  %v5384 = vunpack.c.l.b16 %v5360
  %v5385 = vunpack.c.l.b16 %v5361
  %v5386 = vunpack.c.l.b16 %v5362
  %v5387 = vunpack.c.l.b16 %v5363
  %v5388 = vunpack.c.l.b16 %v5364
  %v5389 = vpack.c.b16 %v5378, %v5377
  %v5390 = vpack.c.b16 %v5380, %v5379
  %v5391 = vpack.c.b16 %v5382, %v5381
  %v5392 = vpack.c.b16 %v5384, %v5383
  %v5393 = vpack.c.b16 %v5386, %v5385
  %v5394 = vpack.c.b16 %v5388, %v5387
  %5419 = vrot.lane.b32.xlu0 %v4240, 103
  %v5420 = vpop.permute.xlu0 %5419
  %5421 = vrot.lane.b32.xlu0 %v4241, 103
  %v5422 = vpop.permute.xlu0 %5421
  %5423 = vrot.lane.b32.xlu0 %v4242, 103
  %v5424 = vpop.permute.xlu0 %5423
  %5425 = vrot.lane.b32.xlu0 %v4243, 103
  %v5426 = vpop.permute.xlu0 %5425
  %5427 = vrot.lane.b32.xlu0 %v4244, 103
  %v5428 = vpop.permute.xlu0 %5427
  %5429 = vrot.lane.b32.xlu0 %v4245, 103
  %v5430 = vpop.permute.xlu0 %5429
  %5431 = vrot.lane.b32.xlu0 %v4246, 103
  %v5432 = vpop.permute.xlu0 %5431
  %5433 = vrot.lane.b32.xlu0 %v4247, 103
  %v5434 = vpop.permute.xlu0 %5433
  %5435 = vrot.lane.b32.xlu0 %v4248, 103
  %v5436 = vpop.permute.xlu0 %5435
  %5437 = vrot.lane.b32.xlu0 %v4249, 103
  %v5438 = vpop.permute.xlu0 %5437
  %5439 = vrot.lane.b32.xlu0 %v4250, 103
  %v5440 = vpop.permute.xlu0 %5439
  %5441 = vrot.lane.b32.xlu0 %v4251, 103
  %v5442 = vpop.permute.xlu0 %5441
  %5443 = vrot.lane.b32.xlu0 %v4252, 103
  %v5444 = vpop.permute.xlu0 %5443
  %5445 = vrot.lane.b32.xlu0 %v4253, 103
  %v5446 = vpop.permute.xlu0 %5445
  %5447 = vrot.lane.b32.xlu0 %v4254, 103
  %v5448 = vpop.permute.xlu0 %5447
  %5449 = vrot.lane.b32.xlu0 %v4255, 103
  %v5450 = vpop.permute.xlu0 %5449
  %5451 = vrot.lane.b32.xlu0 %v4256, 103
  %v5452 = vpop.permute.xlu0 %5451
  %5453 = vrot.lane.b32.xlu0 %v4257, 103
  %v5454 = vpop.permute.xlu0 %5453
  %5455 = vrot.lane.b32.xlu0 %v4258, 103
  %v5456 = vpop.permute.xlu0 %5455
  %5457 = vrot.lane.b32.xlu0 %v4259, 103
  %v5458 = vpop.permute.xlu0 %5457
  %5459 = vrot.lane.b32.xlu0 %v4260, 103
  %v5460 = vpop.permute.xlu0 %5459
  %5461 = vrot.lane.b32.xlu0 %v4261, 103
  %v5462 = vpop.permute.xlu0 %5461
  %5463 = vrot.lane.b32.xlu0 %v4262, 103
  %v5464 = vpop.permute.xlu0 %5463
  %5465 = vrot.lane.b32.xlu0 %v4263, 103
  %v5466 = vpop.permute.xlu0 %5465
  %vm5467 = vcmask 842752
  %v5468 = vsel %vm5467, %v5420, %v5422
  %v5469 = vsel %vm5467, %v5422, %v5424
  %v5470 = vsel %vm5467, %v5424, %v5426
  %v5471 = vsel %vm5467, %v5426, %v5428
  %v5472 = vsel %vm5467, %v5428, %v5430
  %v5473 = vsel %vm5467, %v5432, %v5434
  %v5474 = vsel %vm5467, %v5434, %v5436
  %v5475 = vsel %vm5467, %v5436, %v5438
  %v5476 = vsel %vm5467, %v5438, %v5440
  %v5477 = vsel %vm5467, %v5440, %v5442
  %v5478 = vsel %vm5467, %v5444, %v5446
  %v5479 = vsel %vm5467, %v5446, %v5448
  %v5480 = vsel %vm5467, %v5448, %v5450
  %v5481 = vsel %vm5467, %v5450, %v5452
  %v5482 = vsel %vm5467, %v5452, %v5454
  %v5483 = vsel %vm5467, %v5456, %v5458
  %v5484 = vsel %vm5467, %v5458, %v5460
  %v5485 = vsel %vm5467, %v5460, %v5462
  %v5486 = vsel %vm5467, %v5462, %v5464
  %v5487 = vsel %vm5467, %v5464, %v5466
  %v5509 = vsel %vm1941, %v5389, 0
  %v5512 = vsel %vm1941, %v5390, 0
  %v5515 = vsel %vm1941, %v5391, 0
  %v5518 = vsel %vm1941, %v5392, 0
  %v5521 = vsel %vm1941, %v5393, 0
  %v5524 = vsel %vm1941, %v5394, 0
  %5526 = vmatprep.subr.bf16.mxu0 %v5469
  %5527 = vmatpush1.bf16.msra.mxu0 %v5468
  %5528 = vmatprep.subr.bf16.mxu0 %v5474
  %5529 = vmatpush1.bf16.msra.mxu0 %v5473
  %5530 = vmatprep.subr.bf16.mxu0 %v5479
  %5531 = vmatpush1.bf16.msra.mxu0 %v5478
  %5532 = vmatprep.subr.bf16.mxu0 %v5484
  %5533 = vmatpush1.bf16.msra.mxu0 %v5483
  %5534 = vmatprep.subr.bf16.mxu0 0
  %5535 = vmatpush1.bf16.msra.mxu0 0
  %5536 = vmatprep.subr.bf16.mxu0 0
  %5537 = vmatpush1.bf16.msra.mxu0 0
  %5538 = vmatprep.subr.bf16.mxu0 0
  %5539 = vmatpush1.bf16.msra.mxu0 0
  %5540 = vmatprep.subr.bf16.mxu0 0
  %5541 = vmatpush1.bf16.msra.mxu0 0
  %5542 = vmatprep.subr.bf16.mxu0 0
  %5543 = vmatpush1.bf16.msra.mxu0 0
  %5544 = vmatprep.subr.bf16.mxu0 0
  %5545 = vmatpush1.bf16.msra.mxu0 0
  %5546 = vmatprep.subr.bf16.mxu0 0
  %5547 = vmatpush1.bf16.msra.mxu0 0
  %5548 = vmatprep.subr.bf16.mxu0 0
  %5549 = vmatpush1.bf16.msra.mxu0 0
  %5550 = vmatprep.subr.bf16.mxu0 0
  %5551 = vmatpush1.bf16.msra.mxu0 0
  %5552 = vmatprep.subr.bf16.mxu0 0
  %5553 = vmatpush1.bf16.msra.mxu0 0
  %5554 = vmatprep.subr.bf16.mxu0 0
  %5555 = vmatpush1.bf16.msra.mxu0 0
  %5556 = vmatprep.subr.bf16.mxu0 0
  %5557 = vmatpush1.bf16.msra.mxu0 0
  %5558 = vmatprep.mubr.bf16.mxu0 0
  %5559 = vmatmul.mubr.bf16.gmra.mrb[0].mxu0 %v5509
  %v5560 = vpop.f32.mrb[0].mxu0
  %v5561 = vadd.f32 0.0, %v5560
  %v5562 = vpop.f32.mrb[0].mxu0
  %v5563 = vadd.f32 0.0, %v5562
  %v5564 = vpop.f32.mrb[0].mxu0
  %v5565 = vadd.f32 0.0, %v5564
  %v5566 = vpop.f32.mrb[0].mxu0
  %v5567 = vadd.f32 0.0, %v5566
  %5568 = vmatprep.mubr.bf16.mxu0 0
  %5569 = vmatmul.mubr.bf16.gmra.mrb[0].mxu0 %v5512
  %v5570 = vpop.f32.mrb[0].mxu0
  %v5571 = vadd.f32 0.0, %v5570
  %v5572 = vpop.f32.mrb[0].mxu0
  %v5573 = vadd.f32 0.0, %v5572
  %v5574 = vpop.f32.mrb[0].mxu0
  %v5575 = vadd.f32 0.0, %v5574
  %v5576 = vpop.f32.mrb[0].mxu0
  %v5577 = vadd.f32 0.0, %v5576
  %5578 = vmatprep.mubr.bf16.mxu0 0
  %5579 = vmatmul.mubr.bf16.gmra.mrb[0].mxu0 %v5515
  %v5580 = vpop.f32.mrb[0].mxu0
  %v5581 = vadd.f32 0.0, %v5580
  %v5582 = vpop.f32.mrb[0].mxu0
  %v5583 = vadd.f32 0.0, %v5582
  %v5584 = vpop.f32.mrb[0].mxu0
  %v5585 = vadd.f32 0.0, %v5584
  %v5586 = vpop.f32.mrb[0].mxu0
  %v5587 = vadd.f32 0.0, %v5586
  %5588 = vmatprep.mubr.bf16.mxu0 0
  %5589 = vmatmul.mubr.bf16.gmra.mrb[0].mxu0 %v5518
  %v5590 = vpop.f32.mrb[0].mxu0
  %v5591 = vadd.f32 0.0, %v5590
  %v5592 = vpop.f32.mrb[0].mxu0
  %v5593 = vadd.f32 0.0, %v5592
  %v5594 = vpop.f32.mrb[0].mxu0
  %v5595 = vadd.f32 0.0, %v5594
  %v5596 = vpop.f32.mrb[0].mxu0
  %v5597 = vadd.f32 0.0, %v5596
  %5598 = vmatprep.mubr.bf16.mxu0 0
  %5599 = vmatmul.mubr.bf16.gmra.mrb[0].mxu0 %v5521
  %v5600 = vpop.f32.mrb[0].mxu0
  %v5601 = vadd.f32 0.0, %v5600
  %v5602 = vpop.f32.mrb[0].mxu0
  %v5603 = vadd.f32 0.0, %v5602
  %v5604 = vpop.f32.mrb[0].mxu0
  %v5605 = vadd.f32 0.0, %v5604
  %v5606 = vpop.f32.mrb[0].mxu0
  %v5607 = vadd.f32 0.0, %v5606
  %5608 = vmatprep.mubr.bf16.mxu0 0
  %5609 = vmatmul.mubr.bf16.gmra.mrb[0].mxu0 %v5524
  %v5610 = vpop.f32.mrb[0].mxu0
  %v5611 = vadd.f32 0.0, %v5610
  %v5612 = vpop.f32.mrb[0].mxu0
  %v5613 = vadd.f32 0.0, %v5612
  %v5614 = vpop.f32.mrb[0].mxu0
  %v5615 = vadd.f32 0.0, %v5614
  %v5616 = vpop.f32.mrb[0].mxu0
  %v5617 = vadd.f32 0.0, %v5616
  %5618 = vdwg.mxu0
  %5619 = vmatprep.subr.bf16.mxu0 %v5471
  %5620 = vmatpush1.bf16.msra.mxu0 %v5470
  %5621 = vmatprep.subr.bf16.mxu0 %v5476
  %5622 = vmatpush1.bf16.msra.mxu0 %v5475
  %5623 = vmatprep.subr.bf16.mxu0 %v5481
  %5624 = vmatpush1.bf16.msra.mxu0 %v5480
  %5625 = vmatprep.subr.bf16.mxu0 %v5486
  %5626 = vmatpush1.bf16.msra.mxu0 %v5485
  %5627 = vmatprep.subr.bf16.mxu0 0
  %5628 = vmatpush1.bf16.msra.mxu0 0
  %5629 = vmatprep.subr.bf16.mxu0 0
  %5630 = vmatpush1.bf16.msra.mxu0 0
  %5631 = vmatprep.subr.bf16.mxu0 0
  %5632 = vmatpush1.bf16.msra.mxu0 0
  %5633 = vmatprep.subr.bf16.mxu0 0
  %5634 = vmatpush1.bf16.msra.mxu0 0
  %5635 = vmatprep.subr.bf16.mxu0 0
  %5636 = vmatpush1.bf16.msra.mxu0 0
  %5637 = vmatprep.subr.bf16.mxu0 0
  %5638 = vmatpush1.bf16.msra.mxu0 0
  %5639 = vmatprep.subr.bf16.mxu0 0
  %5640 = vmatpush1.bf16.msra.mxu0 0
  %5641 = vmatprep.subr.bf16.mxu0 0
  %5642 = vmatpush1.bf16.msra.mxu0 0
  %5643 = vmatprep.subr.bf16.mxu0 0
  %5644 = vmatpush1.bf16.msra.mxu0 0
  %5645 = vmatprep.subr.bf16.mxu0 0
  %5646 = vmatpush1.bf16.msra.mxu0 0
  %5647 = vmatprep.subr.bf16.mxu0 0
  %5648 = vmatpush1.bf16.msra.mxu0 0
  %5649 = vmatprep.subr.bf16.mxu0 0
  %5650 = vmatpush1.bf16.msra.mxu0 0
  %5651 = vmatprep.mubr.bf16.mxu0 0
  %5652 = vmatmul.mubr.bf16.gmra.mrb[0].mxu0 %v5509
  %v5653 = vpop.f32.mrb[0].mxu0
  %v5654 = vadd.f32 0.0, %v5653
  %v5655 = vpop.f32.mrb[0].mxu0
  %v5656 = vadd.f32 0.0, %v5655
  %v5657 = vpop.f32.mrb[0].mxu0
  %v5658 = vadd.f32 0.0, %v5657
  %v5659 = vpop.f32.mrb[0].mxu0
  %v5660 = vadd.f32 0.0, %v5659
  %5661 = vmatprep.mubr.bf16.mxu0 0
  %5662 = vmatmul.mubr.bf16.gmra.mrb[0].mxu0 %v5512
  %v5663 = vpop.f32.mrb[0].mxu0
  %v5664 = vadd.f32 0.0, %v5663
  %v5665 = vpop.f32.mrb[0].mxu0
  %v5666 = vadd.f32 0.0, %v5665
  %v5667 = vpop.f32.mrb[0].mxu0
  %v5668 = vadd.f32 0.0, %v5667
  %v5669 = vpop.f32.mrb[0].mxu0
  %v5670 = vadd.f32 0.0, %v5669
  %5671 = vmatprep.mubr.bf16.mxu0 0
  %5672 = vmatmul.mubr.bf16.gmra.mrb[0].mxu0 %v5515
  %v5673 = vpop.f32.mrb[0].mxu0
  %v5674 = vadd.f32 0.0, %v5673
  %v5675 = vpop.f32.mrb[0].mxu0
  %v5676 = vadd.f32 0.0, %v5675
  %v5677 = vpop.f32.mrb[0].mxu0
  %v5678 = vadd.f32 0.0, %v5677
  %v5679 = vpop.f32.mrb[0].mxu0
  %v5680 = vadd.f32 0.0, %v5679
  %5681 = vmatprep.mubr.bf16.mxu0 0
  %5682 = vmatmul.mubr.bf16.gmra.mrb[0].mxu0 %v5518
  %v5683 = vpop.f32.mrb[0].mxu0
  %v5684 = vadd.f32 0.0, %v5683
  %v5685 = vpop.f32.mrb[0].mxu0
  %v5686 = vadd.f32 0.0, %v5685
  %v5687 = vpop.f32.mrb[0].mxu0
  %v5688 = vadd.f32 0.0, %v5687
  %v5689 = vpop.f32.mrb[0].mxu0
  %v5690 = vadd.f32 0.0, %v5689
  %5691 = vmatprep.mubr.bf16.mxu0 0
  %5692 = vmatmul.mubr.bf16.gmra.mrb[0].mxu0 %v5521
  %v5693 = vpop.f32.mrb[0].mxu0
  %v5694 = vadd.f32 0.0, %v5693
  %v5695 = vpop.f32.mrb[0].mxu0
  %v5696 = vadd.f32 0.0, %v5695
  %v5697 = vpop.f32.mrb[0].mxu0
  %v5698 = vadd.f32 0.0, %v5697
  %v5699 = vpop.f32.mrb[0].mxu0
  %v5700 = vadd.f32 0.0, %v5699
  %5701 = vmatprep.mubr.bf16.mxu0 0
  %5702 = vmatmul.mubr.bf16.gmra.mrb[0].mxu0 %v5524
  %v5703 = vpop.f32.mrb[0].mxu0
  %v5704 = vadd.f32 0.0, %v5703
  %v5705 = vpop.f32.mrb[0].mxu0
  %v5706 = vadd.f32 0.0, %v5705
  %v5707 = vpop.f32.mrb[0].mxu0
  %v5708 = vadd.f32 0.0, %v5707
  %v5709 = vpop.f32.mrb[0].mxu0
  %v5710 = vadd.f32 0.0, %v5709
  %5711 = vdwg.mxu0
  %5712 = vmatprep.subr.bf16.mxu0 0
  %5713 = vmatpush1.bf16.msra.mxu0 %v5472
  %5714 = vmatprep.subr.bf16.mxu0 0
  %5715 = vmatpush1.bf16.msra.mxu0 %v5477
  %5716 = vmatprep.subr.bf16.mxu0 0
  %5717 = vmatpush1.bf16.msra.mxu0 %v5482
  %5718 = vmatprep.subr.bf16.mxu0 0
  %5719 = vmatpush1.bf16.msra.mxu0 %v5487
  %5720 = vmatprep.subr.bf16.mxu0 0
  %5721 = vmatpush1.bf16.msra.mxu0 0
  %5722 = vmatprep.subr.bf16.mxu0 0
  %5723 = vmatpush1.bf16.msra.mxu0 0
  %5724 = vmatprep.subr.bf16.mxu0 0
  %5725 = vmatpush1.bf16.msra.mxu0 0
  %5726 = vmatprep.subr.bf16.mxu0 0
  %5727 = vmatpush1.bf16.msra.mxu0 0
  %5728 = vmatprep.subr.bf16.mxu0 0
  %5729 = vmatpush1.bf16.msra.mxu0 0
  %5730 = vmatprep.subr.bf16.mxu0 0
  %5731 = vmatpush1.bf16.msra.mxu0 0
  %5732 = vmatprep.subr.bf16.mxu0 0
  %5733 = vmatpush1.bf16.msra.mxu0 0
  %5734 = vmatprep.subr.bf16.mxu0 0
  %5735 = vmatpush1.bf16.msra.mxu0 0
  %5736 = vmatprep.subr.bf16.mxu0 0
  %5737 = vmatpush1.bf16.msra.mxu0 0
  %5738 = vmatprep.subr.bf16.mxu0 0
  %5739 = vmatpush1.bf16.msra.mxu0 0
  %5740 = vmatprep.subr.bf16.mxu0 0
  %5741 = vmatpush1.bf16.msra.mxu0 0
  %5742 = vmatprep.subr.bf16.mxu0 0
  %5743 = vmatpush1.bf16.msra.mxu0 0
  %5744 = vmatprep.mubr.bf16.mxu0 0
  %5745 = vmatmul.mubr.bf16.gmra.mrb[0].mxu0 %v5509
  %v5746 = vpop.f32.mrb[0].mxu0
  %v5747 = vadd.f32 0.0, %v5746
  %v5748 = vpop.f32.mrb[0].mxu0
  %v5749 = vpop.f32.mrb[0].mxu0
  %v5750 = vadd.f32 0.0, %v5749
  %v5751 = vpop.f32.mrb[0].mxu0
  %5752 = vmatprep.mubr.bf16.mxu0 0
  %5753 = vmatmul.mubr.bf16.gmra.mrb[0].mxu0 %v5512
  %v5754 = vpop.f32.mrb[0].mxu0
  %v5755 = vadd.f32 0.0, %v5754
  %v5756 = vpop.f32.mrb[0].mxu0
  %v5757 = vpop.f32.mrb[0].mxu0
  %v5758 = vadd.f32 0.0, %v5757
  %v5759 = vpop.f32.mrb[0].mxu0
  %5760 = vmatprep.mubr.bf16.mxu0 0
  %5761 = vmatmul.mubr.bf16.gmra.mrb[0].mxu0 %v5515
  %v5762 = vpop.f32.mrb[0].mxu0
  %v5763 = vadd.f32 0.0, %v5762
  %v5764 = vpop.f32.mrb[0].mxu0
  %v5765 = vpop.f32.mrb[0].mxu0
  %v5766 = vadd.f32 0.0, %v5765
  %v5767 = vpop.f32.mrb[0].mxu0
  %5768 = vmatprep.mubr.bf16.mxu0 0
  %5769 = vmatmul.mubr.bf16.gmra.mrb[0].mxu0 %v5518
  %v5770 = vpop.f32.mrb[0].mxu0
  %v5771 = vadd.f32 0.0, %v5770
  %v5772 = vpop.f32.mrb[0].mxu0
  %v5773 = vpop.f32.mrb[0].mxu0
  %v5774 = vadd.f32 0.0, %v5773
  %v5775 = vpop.f32.mrb[0].mxu0
  %5776 = vmatprep.mubr.bf16.mxu0 0
  %5777 = vmatmul.mubr.bf16.gmra.mrb[0].mxu0 %v5521
  %v5778 = vpop.f32.mrb[0].mxu0
  %v5779 = vadd.f32 0.0, %v5778
  %v5780 = vpop.f32.mrb[0].mxu0
  %v5781 = vpop.f32.mrb[0].mxu0
  %v5782 = vadd.f32 0.0, %v5781
  %v5783 = vpop.f32.mrb[0].mxu0
  %5784 = vmatprep.mubr.bf16.mxu0 0
  %5785 = vmatmul.mubr.bf16.gmra.mrb[0].mxu0 %v5524
  %v5786 = vpop.f32.mrb[0].mxu0
  %v5787 = vadd.f32 0.0, %v5786
  %v5788 = vpop.f32.mrb[0].mxu0
  %v5789 = vpop.f32.mrb[0].mxu0
  %v5790 = vadd.f32 0.0, %v5789
  %v5791 = vpop.f32.mrb[0].mxu0
  %5792 = vdwg.mxu0
  %v5793 = vadd.f32 %v5292, %v5561
  %v5794 = vadd.f32 %v5293, %v5563
  %v5795 = vadd.f32 %v5294, %v5654
  %v5796 = vadd.f32 %v5295, %v5656
  %v5797 = vadd.f32 %v5296, %v5747
  %v5798 = vadd.f32 %v5297, %v5565
  %v5799 = vadd.f32 %v5298, %v5567
  %v5800 = vadd.f32 %v5299, %v5658
  %v5801 = vadd.f32 %v5300, %v5660
  %v5802 = vadd.f32 %v5301, %v5750
  %v5803 = vadd.f32 %v5302, %v5571
  %v5804 = vadd.f32 %v5303, %v5573
  %v5805 = vadd.f32 %v5304, %v5664
  %v5806 = vadd.f32 %v5305, %v5666
  %v5807 = vadd.f32 %v5306, %v5755
  %v5808 = vadd.f32 %v5307, %v5575
  %v5809 = vadd.f32 %v5308, %v5577
  %v5810 = vadd.f32 %v5309, %v5668
  %v5811 = vadd.f32 %v5310, %v5670
  %v5812 = vadd.f32 %v5311, %v5758
  %v5813 = vadd.f32 %v5312, %v5581
  %v5814 = vadd.f32 %v5313, %v5583
  %v5815 = vadd.f32 %v5314, %v5674
  %v5816 = vadd.f32 %v5315, %v5676
  %v5817 = vadd.f32 %v5316, %v5763
  %v5818 = vadd.f32 %v5317, %v5585
  %v5819 = vadd.f32 %v5318, %v5587
  %v5820 = vadd.f32 %v5319, %v5678
  %v5821 = vadd.f32 %v5320, %v5680
  %v5822 = vadd.f32 %v5321, %v5766
  %v5823 = vadd.f32 %v5322, %v5591
  %v5824 = vadd.f32 %v5323, %v5593
  %v5825 = vadd.f32 %v5324, %v5684
  %v5826 = vadd.f32 %v5325, %v5686
  %v5827 = vadd.f32 %v5326, %v5771
  %v5828 = vadd.f32 %v5327, %v5595
  %v5829 = vadd.f32 %v5328, %v5597
  %v5830 = vadd.f32 %v5329, %v5688
  %v5831 = vadd.f32 %v5330, %v5690
  %v5832 = vadd.f32 %v5331, %v5774
  %v5833 = vadd.f32 %v5332, %v5601
  %v5834 = vadd.f32 %v5333, %v5603
  %v5835 = vadd.f32 %v5334, %v5694
  %v5836 = vadd.f32 %v5335, %v5696
  %v5837 = vadd.f32 %v5336, %v5779
  %v5838 = vadd.f32 %v5337, %v5605
  %v5839 = vadd.f32 %v5338, %v5607
  %v5840 = vadd.f32 %v5339, %v5698
  %v5841 = vadd.f32 %v5340, %v5700
  %v5842 = vadd.f32 %v5341, %v5782
  %v5843 = vadd.f32 %v5342, %v5611
  %v5844 = vadd.f32 %v5343, %v5613
  %v5845 = vadd.f32 %v5344, %v5704
  %v5846 = vadd.f32 %v5345, %v5706
  %v5847 = vadd.f32 %v5346, %v5787
  %v5848 = vadd.f32 %v5347, %v5615
  %v5849 = vadd.f32 %v5348, %v5617
  %v5850 = vadd.f32 %v5349, %v5708
  %v5851 = vadd.f32 %v5350, %v5710
  %v5852 = vadd.f32 %v5351, %v5790
  %5853 = vrot.lane.b32.xlu0 %v2702, 26
  %v5854 = vpop.permute.xlu0 %5853
  %5855 = vrot.lane.b32.xlu0 %v2709, 26
  %v5856 = vpop.permute.xlu0 %5855
  %5857 = vrot.lane.b32.xlu0 %v2716, 26
  %v5858 = vpop.permute.xlu0 %5857
  %5859 = vrot.lane.b32.xlu0 %v2723, 26
  %v5860 = vpop.permute.xlu0 %5859
  %5861 = vrot.lane.b32.xlu0 %v2730, 26
  %v5862 = vpop.permute.xlu0 %5861
  %v5863 = vsel %vm2329, %v5854, %v5856
  %v5864 = vsel %vm2329, %v5856, %v5858
  %v5865 = vsel %vm2329, %v5858, %v5860
  %v5866 = vsel %vm2329, %v5860, %v5862
  %v5873 = vmul.bf16 %v4240, %v5854
  %v5874 = vmul.bf16 %v4241, %v5863
  %v5875 = vmul.bf16 %v4242, %v5864
  %v5876 = vmul.bf16 %v4243, %v5865
  %v5877 = vmul.bf16 %v4244, %v5866
  %v5878 = vmul.bf16 %v4245, %v5862
  %v5879 = vmul.bf16 %v4246, %v5854
  %v5880 = vmul.bf16 %v4247, %v5863
  %v5881 = vmul.bf16 %v4248, %v5864
  %v5882 = vmul.bf16 %v4249, %v5865
  %v5883 = vmul.bf16 %v4250, %v5866
  %v5884 = vmul.bf16 %v4251, %v5862
  %v5885 = vmul.bf16 %v4252, %v5854
  %v5886 = vmul.bf16 %v4253, %v5863
  %v5887 = vmul.bf16 %v4254, %v5864
  %v5888 = vmul.bf16 %v4255, %v5865
  %v5889 = vmul.bf16 %v4256, %v5866
  %v5890 = vmul.bf16 %v4257, %v5862
  %v5891 = vmul.bf16 %v4258, %v5854
  %v5892 = vmul.bf16 %v4259, %v5863
  %v5893 = vmul.bf16 %v4260, %v5864
  %v5894 = vmul.bf16 %v4261, %v5865
  %v5895 = vmul.bf16 %v4262, %v5866
  %v5896 = vmul.bf16 %v4263, %v5862
  %s5897 = scalar_lea.vmem %s2, 384
  %v5898 = vld [vmem:[%s5897] sm:$0xf]
  %v5899 = vld [vmem:[%s5897 + $0x4] sm:$0xf]
  %v5900 = vld [vmem:[%s5897 + $0x8] sm:$0xf]
  %v5901 = vld [vmem:[%s5897 + $0xc] sm:$0xf]
  %v5902 = vld [vmem:[%s5897 + $0x10] sm:$0xf]
  %v5903 = vld [vmem:[%s5897 + $0x14] sm:$0xf]
  %v5904 = vld [vmem:[%s5897 + $0x18] sm:$0xf]
  %v5905 = vld [vmem:[%s5897 + $0x1c] sm:$0xf]
  %v5906 = vld [vmem:[%s5897 + $0x20] sm:$0xf]
  %v5907 = vld [vmem:[%s5897 + $0x24] sm:$0xf]
  %v5908 = vld [vmem:[%s5897 + $0x28] sm:$0xf]
  %v5909 = vld [vmem:[%s5897 + $0x2c] sm:$0xf]
  %v5922 = vunpack.c.l.b16 %v5898
  %v5923 = vunpack.c.l.b16 %v5899
  %v5924 = vunpack.c.l.b16 %v5900
  %v5925 = vunpack.c.l.b16 %v5901
  %v5926 = vunpack.c.l.b16 %v5902
  %v5927 = vunpack.c.l.b16 %v5903
  %v5928 = vunpack.c.l.b16 %v5904
  %v5929 = vunpack.c.l.b16 %v5905
  %v5930 = vunpack.c.l.b16 %v5906
  %v5931 = vunpack.c.l.b16 %v5907
  %v5932 = vunpack.c.l.b16 %v5908
  %v5933 = vunpack.c.l.b16 %v5909
  %v5934 = vpack.c.b16 %v5923, %v5922
  %v5935 = vpack.c.b16 %v5925, %v5924
  %v5936 = vpack.c.b16 %v5927, %v5926
  %v5937 = vpack.c.b16 %v5929, %v5928
  %v5938 = vpack.c.b16 %v5931, %v5930
  %v5939 = vpack.c.b16 %v5933, %v5932
  %5964 = vrot.lane.b32.xlu0 %v5873, 102
  %v5965 = vpop.permute.xlu0 %5964
  %5966 = vrot.lane.b32.xlu0 %v5874, 102
  %v5967 = vpop.permute.xlu0 %5966
  %5968 = vrot.lane.b32.xlu0 %v5875, 102
  %v5969 = vpop.permute.xlu0 %5968
  %5970 = vrot.lane.b32.xlu0 %v5876, 102
  %v5971 = vpop.permute.xlu0 %5970
  %5972 = vrot.lane.b32.xlu0 %v5877, 102
  %v5973 = vpop.permute.xlu0 %5972
  %5974 = vrot.lane.b32.xlu0 %v5878, 102
  %v5975 = vpop.permute.xlu0 %5974
  %5976 = vrot.lane.b32.xlu0 %v5879, 102
  %v5977 = vpop.permute.xlu0 %5976
  %5978 = vrot.lane.b32.xlu0 %v5880, 102
  %v5979 = vpop.permute.xlu0 %5978
  %5980 = vrot.lane.b32.xlu0 %v5881, 102
  %v5981 = vpop.permute.xlu0 %5980
  %5982 = vrot.lane.b32.xlu0 %v5882, 102
  %v5983 = vpop.permute.xlu0 %5982
  %5984 = vrot.lane.b32.xlu0 %v5883, 102
  %v5985 = vpop.permute.xlu0 %5984
  %5986 = vrot.lane.b32.xlu0 %v5884, 102
  %v5987 = vpop.permute.xlu0 %5986
  %5988 = vrot.lane.b32.xlu0 %v5885, 102
  %v5989 = vpop.permute.xlu0 %5988
  %5990 = vrot.lane.b32.xlu0 %v5886, 102
  %v5991 = vpop.permute.xlu0 %5990
  %5992 = vrot.lane.b32.xlu0 %v5887, 102
  %v5993 = vpop.permute.xlu0 %5992
  %5994 = vrot.lane.b32.xlu0 %v5888, 102
  %v5995 = vpop.permute.xlu0 %5994
  %5996 = vrot.lane.b32.xlu0 %v5889, 102
  %v5997 = vpop.permute.xlu0 %5996
  %5998 = vrot.lane.b32.xlu0 %v5890, 102
  %v5999 = vpop.permute.xlu0 %5998
  %6000 = vrot.lane.b32.xlu0 %v5891, 102
  %v6001 = vpop.permute.xlu0 %6000
  %6002 = vrot.lane.b32.xlu0 %v5892, 102
  %v6003 = vpop.permute.xlu0 %6002
  %6004 = vrot.lane.b32.xlu0 %v5893, 102
  %v6005 = vpop.permute.xlu0 %6004
  %6006 = vrot.lane.b32.xlu0 %v5894, 102
  %v6007 = vpop.permute.xlu0 %6006
  %6008 = vrot.lane.b32.xlu0 %v5895, 102
  %v6009 = vpop.permute.xlu0 %6008
  %6010 = vrot.lane.b32.xlu0 %v5896, 102
  %v6011 = vpop.permute.xlu0 %6010
  %v6012 = vsel %vm1738, %v5965, %v5967
  %v6013 = vsel %vm1738, %v5967, %v5969
  %v6014 = vsel %vm1738, %v5969, %v5971
  %v6015 = vsel %vm1738, %v5971, %v5973
  %v6016 = vsel %vm1738, %v5973, %v5975
  %v6017 = vsel %vm1738, %v5977, %v5979
  %v6018 = vsel %vm1738, %v5979, %v5981
  %v6019 = vsel %vm1738, %v5981, %v5983
  %v6020 = vsel %vm1738, %v5983, %v5985
  %v6021 = vsel %vm1738, %v5985, %v5987
  %v6022 = vsel %vm1738, %v5989, %v5991
  %v6023 = vsel %vm1738, %v5991, %v5993
  %v6024 = vsel %vm1738, %v5993, %v5995
  %v6025 = vsel %vm1738, %v5995, %v5997
  %v6026 = vsel %vm1738, %v5997, %v5999
  %v6027 = vsel %vm1738, %v6001, %v6003
  %v6028 = vsel %vm1738, %v6003, %v6005
  %v6029 = vsel %vm1738, %v6005, %v6007
  %v6030 = vsel %vm1738, %v6007, %v6009
  %v6031 = vsel %vm1738, %v6009, %v6011
  %v6053 = vsel %vm1941, %v5934, 0
  %v6056 = vsel %vm1941, %v5935, 0
  %v6059 = vsel %vm1941, %v5936, 0
  %v6062 = vsel %vm1941, %v5937, 0
  %v6065 = vsel %vm1941, %v5938, 0
  %v6068 = vsel %vm1941, %v5939, 0
  %6070 = vmatprep.subr.bf16.mxu0 %v6013
  %6071 = vmatpush1.bf16.msra.mxu0 %v6012
  %6072 = vmatprep.subr.bf16.mxu0 %v6018
  %6073 = vmatpush1.bf16.msra.mxu0 %v6017
  %6074 = vmatprep.subr.bf16.mxu0 %v6023
  %6075 = vmatpush1.bf16.msra.mxu0 %v6022
  %6076 = vmatprep.subr.bf16.mxu0 %v6028
  %6077 = vmatpush1.bf16.msra.mxu0 %v6027
  %6078 = vmatprep.subr.bf16.mxu0 0
  %6079 = vmatpush1.bf16.msra.mxu0 0
  %6080 = vmatprep.subr.bf16.mxu0 0
  %6081 = vmatpush1.bf16.msra.mxu0 0
  %6082 = vmatprep.subr.bf16.mxu0 0
  %6083 = vmatpush1.bf16.msra.mxu0 0
  %6084 = vmatprep.subr.bf16.mxu0 0
  %6085 = vmatpush1.bf16.msra.mxu0 0
  %6086 = vmatprep.subr.bf16.mxu0 0
  %6087 = vmatpush1.bf16.msra.mxu0 0
  %6088 = vmatprep.subr.bf16.mxu0 0
  %6089 = vmatpush1.bf16.msra.mxu0 0
  %6090 = vmatprep.subr.bf16.mxu0 0
  %6091 = vmatpush1.bf16.msra.mxu0 0
  %6092 = vmatprep.subr.bf16.mxu0 0
  %6093 = vmatpush1.bf16.msra.mxu0 0
  %6094 = vmatprep.subr.bf16.mxu0 0
  %6095 = vmatpush1.bf16.msra.mxu0 0
  %6096 = vmatprep.subr.bf16.mxu0 0
  %6097 = vmatpush1.bf16.msra.mxu0 0
  %6098 = vmatprep.subr.bf16.mxu0 0
  %6099 = vmatpush1.bf16.msra.mxu0 0
  %6100 = vmatprep.subr.bf16.mxu0 0
  %6101 = vmatpush1.bf16.msra.mxu0 0
  %6102 = vmatprep.mubr.bf16.mxu0 0
  %6103 = vmatmul.mubr.bf16.gmra.mrb[0].mxu0 %v6053
  %v6104 = vpop.f32.mrb[0].mxu0
  %v6105 = vadd.f32 0.0, %v6104
  %v6106 = vpop.f32.mrb[0].mxu0
  %v6107 = vadd.f32 0.0, %v6106
  %v6108 = vpop.f32.mrb[0].mxu0
  %v6109 = vadd.f32 0.0, %v6108
  %v6110 = vpop.f32.mrb[0].mxu0
  %v6111 = vadd.f32 0.0, %v6110
  %6112 = vmatprep.mubr.bf16.mxu0 0
  %6113 = vmatmul.mubr.bf16.gmra.mrb[0].mxu0 %v6056
  %v6114 = vpop.f32.mrb[0].mxu0
  %v6115 = vadd.f32 0.0, %v6114
  %v6116 = vpop.f32.mrb[0].mxu0
  %v6117 = vadd.f32 0.0, %v6116
  %v6118 = vpop.f32.mrb[0].mxu0
  %v6119 = vadd.f32 0.0, %v6118
  %v6120 = vpop.f32.mrb[0].mxu0
  %v6121 = vadd.f32 0.0, %v6120
  %6122 = vmatprep.mubr.bf16.mxu0 0
  %6123 = vmatmul.mubr.bf16.gmra.mrb[0].mxu0 %v6059
  %v6124 = vpop.f32.mrb[0].mxu0
  %v6125 = vadd.f32 0.0, %v6124
  %v6126 = vpop.f32.mrb[0].mxu0
  %v6127 = vadd.f32 0.0, %v6126
  %v6128 = vpop.f32.mrb[0].mxu0
  %v6129 = vadd.f32 0.0, %v6128
  %v6130 = vpop.f32.mrb[0].mxu0
  %v6131 = vadd.f32 0.0, %v6130
  %6132 = vmatprep.mubr.bf16.mxu0 0
  %6133 = vmatmul.mubr.bf16.gmra.mrb[0].mxu0 %v6062
  %v6134 = vpop.f32.mrb[0].mxu0
  %v6135 = vadd.f32 0.0, %v6134
  %v6136 = vpop.f32.mrb[0].mxu0
  %v6137 = vadd.f32 0.0, %v6136
  %v6138 = vpop.f32.mrb[0].mxu0
  %v6139 = vadd.f32 0.0, %v6138
  %v6140 = vpop.f32.mrb[0].mxu0
  %v6141 = vadd.f32 0.0, %v6140
  %6142 = vmatprep.mubr.bf16.mxu0 0
  %6143 = vmatmul.mubr.bf16.gmra.mrb[0].mxu0 %v6065
  %v6144 = vpop.f32.mrb[0].mxu0
  %v6145 = vadd.f32 0.0, %v6144
  %v6146 = vpop.f32.mrb[0].mxu0
  %v6147 = vadd.f32 0.0, %v6146
  %v6148 = vpop.f32.mrb[0].mxu0
  %v6149 = vadd.f32 0.0, %v6148
  %v6150 = vpop.f32.mrb[0].mxu0
  %v6151 = vadd.f32 0.0, %v6150
  %6152 = vmatprep.mubr.bf16.mxu0 0
  %6153 = vmatmul.mubr.bf16.gmra.mrb[0].mxu0 %v6068
  %v6154 = vpop.f32.mrb[0].mxu0
  %v6155 = vadd.f32 0.0, %v6154
  %v6156 = vpop.f32.mrb[0].mxu0
  %v6157 = vadd.f32 0.0, %v6156
  %v6158 = vpop.f32.mrb[0].mxu0
  %v6159 = vadd.f32 0.0, %v6158
  %v6160 = vpop.f32.mrb[0].mxu0
  %v6161 = vadd.f32 0.0, %v6160
  %6162 = vdwg.mxu0
  %6163 = vmatprep.subr.bf16.mxu0 %v6015
  %6164 = vmatpush1.bf16.msra.mxu0 %v6014
  %6165 = vmatprep.subr.bf16.mxu0 %v6020
  %6166 = vmatpush1.bf16.msra.mxu0 %v6019
  %6167 = vmatprep.subr.bf16.mxu0 %v6025
  %6168 = vmatpush1.bf16.msra.mxu0 %v6024
  %6169 = vmatprep.subr.bf16.mxu0 %v6030
  %6170 = vmatpush1.bf16.msra.mxu0 %v6029
  %6171 = vmatprep.subr.bf16.mxu0 0
  %6172 = vmatpush1.bf16.msra.mxu0 0
  %6173 = vmatprep.subr.bf16.mxu0 0
  %6174 = vmatpush1.bf16.msra.mxu0 0
  %6175 = vmatprep.subr.bf16.mxu0 0
  %6176 = vmatpush1.bf16.msra.mxu0 0
  %6177 = vmatprep.subr.bf16.mxu0 0
  %6178 = vmatpush1.bf16.msra.mxu0 0
  %6179 = vmatprep.subr.bf16.mxu0 0
  %6180 = vmatpush1.bf16.msra.mxu0 0
  %6181 = vmatprep.subr.bf16.mxu0 0
  %6182 = vmatpush1.bf16.msra.mxu0 0
  %6183 = vmatprep.subr.bf16.mxu0 0
  %6184 = vmatpush1.bf16.msra.mxu0 0
  %6185 = vmatprep.subr.bf16.mxu0 0
  %6186 = vmatpush1.bf16.msra.mxu0 0
  %6187 = vmatprep.subr.bf16.mxu0 0
  %6188 = vmatpush1.bf16.msra.mxu0 0
  %6189 = vmatprep.subr.bf16.mxu0 0
  %6190 = vmatpush1.bf16.msra.mxu0 0
  %6191 = vmatprep.subr.bf16.mxu0 0
  %6192 = vmatpush1.bf16.msra.mxu0 0
  %6193 = vmatprep.subr.bf16.mxu0 0
  %6194 = vmatpush1.bf16.msra.mxu0 0
  %6195 = vmatprep.mubr.bf16.mxu0 0
  %6196 = vmatmul.mubr.bf16.gmra.mrb[0].mxu0 %v6053
  %v6197 = vpop.f32.mrb[0].mxu0
  %v6198 = vadd.f32 0.0, %v6197
  %v6199 = vpop.f32.mrb[0].mxu0
  %v6200 = vadd.f32 0.0, %v6199
  %v6201 = vpop.f32.mrb[0].mxu0
  %v6202 = vadd.f32 0.0, %v6201
  %v6203 = vpop.f32.mrb[0].mxu0
  %v6204 = vadd.f32 0.0, %v6203
  %6205 = vmatprep.mubr.bf16.mxu0 0
  %6206 = vmatmul.mubr.bf16.gmra.mrb[0].mxu0 %v6056
  %v6207 = vpop.f32.mrb[0].mxu0
  %v6208 = vadd.f32 0.0, %v6207
  %v6209 = vpop.f32.mrb[0].mxu0
  %v6210 = vadd.f32 0.0, %v6209
  %v6211 = vpop.f32.mrb[0].mxu0
  %v6212 = vadd.f32 0.0, %v6211
  %v6213 = vpop.f32.mrb[0].mxu0
  %v6214 = vadd.f32 0.0, %v6213
  %6215 = vmatprep.mubr.bf16.mxu0 0
  %6216 = vmatmul.mubr.bf16.gmra.mrb[0].mxu0 %v6059
  %v6217 = vpop.f32.mrb[0].mxu0
  %v6218 = vadd.f32 0.0, %v6217
  %v6219 = vpop.f32.mrb[0].mxu0
  %v6220 = vadd.f32 0.0, %v6219
  %v6221 = vpop.f32.mrb[0].mxu0
  %v6222 = vadd.f32 0.0, %v6221
  %v6223 = vpop.f32.mrb[0].mxu0
  %v6224 = vadd.f32 0.0, %v6223
  %6225 = vmatprep.mubr.bf16.mxu0 0
  %6226 = vmatmul.mubr.bf16.gmra.mrb[0].mxu0 %v6062
  %v6227 = vpop.f32.mrb[0].mxu0
  %v6228 = vadd.f32 0.0, %v6227
  %v6229 = vpop.f32.mrb[0].mxu0
  %v6230 = vadd.f32 0.0, %v6229
  %v6231 = vpop.f32.mrb[0].mxu0
  %v6232 = vadd.f32 0.0, %v6231
  %v6233 = vpop.f32.mrb[0].mxu0
  %v6234 = vadd.f32 0.0, %v6233
  %6235 = vmatprep.mubr.bf16.mxu0 0
  %6236 = vmatmul.mubr.bf16.gmra.mrb[0].mxu0 %v6065
  %v6237 = vpop.f32.mrb[0].mxu0
  %v6238 = vadd.f32 0.0, %v6237
  %v6239 = vpop.f32.mrb[0].mxu0
  %v6240 = vadd.f32 0.0, %v6239
  %v6241 = vpop.f32.mrb[0].mxu0
  %v6242 = vadd.f32 0.0, %v6241
  %v6243 = vpop.f32.mrb[0].mxu0
  %v6244 = vadd.f32 0.0, %v6243
  %6245 = vmatprep.mubr.bf16.mxu0 0
  %6246 = vmatmul.mubr.bf16.gmra.mrb[0].mxu0 %v6068
  %v6247 = vpop.f32.mrb[0].mxu0
  %v6248 = vadd.f32 0.0, %v6247
  %v6249 = vpop.f32.mrb[0].mxu0
  %v6250 = vadd.f32 0.0, %v6249
  %v6251 = vpop.f32.mrb[0].mxu0
  %v6252 = vadd.f32 0.0, %v6251
  %v6253 = vpop.f32.mrb[0].mxu0
  %v6254 = vadd.f32 0.0, %v6253
  %6255 = vdwg.mxu0
  %6256 = vmatprep.subr.bf16.mxu0 0
  %6257 = vmatpush1.bf16.msra.mxu0 %v6016
  %6258 = vmatprep.subr.bf16.mxu0 0
  %6259 = vmatpush1.bf16.msra.mxu0 %v6021
  %6260 = vmatprep.subr.bf16.mxu0 0
  %6261 = vmatpush1.bf16.msra.mxu0 %v6026
  %6262 = vmatprep.subr.bf16.mxu0 0
  %6263 = vmatpush1.bf16.msra.mxu0 %v6031
  %6264 = vmatprep.subr.bf16.mxu0 0
  %6265 = vmatpush1.bf16.msra.mxu0 0
  %6266 = vmatprep.subr.bf16.mxu0 0
  %6267 = vmatpush1.bf16.msra.mxu0 0
  %6268 = vmatprep.subr.bf16.mxu0 0
  %6269 = vmatpush1.bf16.msra.mxu0 0
  %6270 = vmatprep.subr.bf16.mxu0 0
  %6271 = vmatpush1.bf16.msra.mxu0 0
  %6272 = vmatprep.subr.bf16.mxu0 0
  %6273 = vmatpush1.bf16.msra.mxu0 0
  %6274 = vmatprep.subr.bf16.mxu0 0
  %6275 = vmatpush1.bf16.msra.mxu0 0
  %6276 = vmatprep.subr.bf16.mxu0 0
  %6277 = vmatpush1.bf16.msra.mxu0 0
  %6278 = vmatprep.subr.bf16.mxu0 0
  %6279 = vmatpush1.bf16.msra.mxu0 0
  %6280 = vmatprep.subr.bf16.mxu0 0
  %6281 = vmatpush1.bf16.msra.mxu0 0
  %6282 = vmatprep.subr.bf16.mxu0 0
  %6283 = vmatpush1.bf16.msra.mxu0 0
  %6284 = vmatprep.subr.bf16.mxu0 0
  %6285 = vmatpush1.bf16.msra.mxu0 0
  %6286 = vmatprep.subr.bf16.mxu0 0
  %6287 = vmatpush1.bf16.msra.mxu0 0
  %6288 = vmatprep.mubr.bf16.mxu0 0
  %6289 = vmatmul.mubr.bf16.gmra.mrb[0].mxu0 %v6053
  %v6290 = vpop.f32.mrb[0].mxu0
  %v6291 = vadd.f32 0.0, %v6290
  %v6292 = vpop.f32.mrb[0].mxu0
  %v6293 = vpop.f32.mrb[0].mxu0
  %v6294 = vadd.f32 0.0, %v6293
  %v6295 = vpop.f32.mrb[0].mxu0
  %6296 = vmatprep.mubr.bf16.mxu0 0
  %6297 = vmatmul.mubr.bf16.gmra.mrb[0].mxu0 %v6056
  %v6298 = vpop.f32.mrb[0].mxu0
  %v6299 = vadd.f32 0.0, %v6298
  %v6300 = vpop.f32.mrb[0].mxu0
  %v6301 = vpop.f32.mrb[0].mxu0
  %v6302 = vadd.f32 0.0, %v6301
  %v6303 = vpop.f32.mrb[0].mxu0
  %6304 = vmatprep.mubr.bf16.mxu0 0
  %6305 = vmatmul.mubr.bf16.gmra.mrb[0].mxu0 %v6059
  %v6306 = vpop.f32.mrb[0].mxu0
  %v6307 = vadd.f32 0.0, %v6306
  %v6308 = vpop.f32.mrb[0].mxu0
  %v6309 = vpop.f32.mrb[0].mxu0
  %v6310 = vadd.f32 0.0, %v6309
  %v6311 = vpop.f32.mrb[0].mxu0
  %6312 = vmatprep.mubr.bf16.mxu0 0
  %6313 = vmatmul.mubr.bf16.gmra.mrb[0].mxu0 %v6062
  %v6314 = vpop.f32.mrb[0].mxu0
  %v6315 = vadd.f32 0.0, %v6314
  %v6316 = vpop.f32.mrb[0].mxu0
  %v6317 = vpop.f32.mrb[0].mxu0
  %v6318 = vadd.f32 0.0, %v6317
  %v6319 = vpop.f32.mrb[0].mxu0
  %6320 = vmatprep.mubr.bf16.mxu0 0
  %6321 = vmatmul.mubr.bf16.gmra.mrb[0].mxu0 %v6065
  %v6322 = vpop.f32.mrb[0].mxu0
  %v6323 = vadd.f32 0.0, %v6322
  %v6324 = vpop.f32.mrb[0].mxu0
  %v6325 = vpop.f32.mrb[0].mxu0
  %v6326 = vadd.f32 0.0, %v6325
  %v6327 = vpop.f32.mrb[0].mxu0
  %6328 = vmatprep.mubr.bf16.mxu0 0
  %6329 = vmatmul.mubr.bf16.gmra.mrb[0].mxu0 %v6068
  %v6330 = vpop.f32.mrb[0].mxu0
  %v6331 = vadd.f32 0.0, %v6330
  %v6332 = vpop.f32.mrb[0].mxu0
  %v6333 = vpop.f32.mrb[0].mxu0
  %v6334 = vadd.f32 0.0, %v6333
  %v6335 = vpop.f32.mrb[0].mxu0
  %6336 = vdwg.mxu0
  %v6337 = vadd.f32 %v5793, %v6105
  %v6338 = vadd.f32 %v5794, %v6107
  %v6339 = vadd.f32 %v5795, %v6198
  %v6340 = vadd.f32 %v5796, %v6200
  %v6341 = vadd.f32 %v5797, %v6291
  %v6342 = vadd.f32 %v5798, %v6109
  %v6343 = vadd.f32 %v5799, %v6111
  %v6344 = vadd.f32 %v5800, %v6202
  %v6345 = vadd.f32 %v5801, %v6204
  %v6346 = vadd.f32 %v5802, %v6294
  %v6347 = vadd.f32 %v5803, %v6115
  %v6348 = vadd.f32 %v5804, %v6117
  %v6349 = vadd.f32 %v5805, %v6208
  %v6350 = vadd.f32 %v5806, %v6210
  %v6351 = vadd.f32 %v5807, %v6299
  %v6352 = vadd.f32 %v5808, %v6119
  %v6353 = vadd.f32 %v5809, %v6121
  %v6354 = vadd.f32 %v5810, %v6212
  %v6355 = vadd.f32 %v5811, %v6214
  %v6356 = vadd.f32 %v5812, %v6302
  %v6357 = vadd.f32 %v5813, %v6125
  %v6358 = vadd.f32 %v5814, %v6127
  %v6359 = vadd.f32 %v5815, %v6218
  %v6360 = vadd.f32 %v5816, %v6220
  %v6361 = vadd.f32 %v5817, %v6307
  %v6362 = vadd.f32 %v5818, %v6129
  %v6363 = vadd.f32 %v5819, %v6131
  %v6364 = vadd.f32 %v5820, %v6222
  %v6365 = vadd.f32 %v5821, %v6224
  %v6366 = vadd.f32 %v5822, %v6310
  %v6367 = vadd.f32 %v5823, %v6135
  %v6368 = vadd.f32 %v5824, %v6137
  %v6369 = vadd.f32 %v5825, %v6228
  %v6370 = vadd.f32 %v5826, %v6230
  %v6371 = vadd.f32 %v5827, %v6315
  %v6372 = vadd.f32 %v5828, %v6139
  %v6373 = vadd.f32 %v5829, %v6141
  %v6374 = vadd.f32 %v5830, %v6232
  %v6375 = vadd.f32 %v5831, %v6234
  %v6376 = vadd.f32 %v5832, %v6318
  %v6377 = vadd.f32 %v5833, %v6145
  %v6378 = vadd.f32 %v5834, %v6147
  %v6379 = vadd.f32 %v5835, %v6238
  %v6380 = vadd.f32 %v5836, %v6240
  %v6381 = vadd.f32 %v5837, %v6323
  %v6382 = vadd.f32 %v5838, %v6149
  %v6383 = vadd.f32 %v5839, %v6151
  %v6384 = vadd.f32 %v5840, %v6242
  %v6385 = vadd.f32 %v5841, %v6244
  %v6386 = vadd.f32 %v5842, %v6326
  %v6387 = vadd.f32 %v5843, %v6155
  %v6388 = vadd.f32 %v5844, %v6157
  %v6389 = vadd.f32 %v5845, %v6248
  %v6390 = vadd.f32 %v5846, %v6250
  %v6391 = vadd.f32 %v5847, %v6331
  %v6392 = vadd.f32 %v5848, %v6159
  %v6393 = vadd.f32 %v5849, %v6161
  %v6394 = vadd.f32 %v5850, %v6252
  %v6395 = vadd.f32 %v5851, %v6254
  %v6396 = vadd.f32 %v5852, %v6334
  %6397 = vst [vmem:[%s7] sm:$0xff] %v6337
  %6398 = vst [vmem:[%s7 + $0x8] sm:$0xff] %v6338
  %6399 = vst [vmem:[%s7 + $0x10] sm:$0xff] %v6339
  %6400 = vst [vmem:[%s7 + $0x18] sm:$0xff] %v6340
  %6401 = vst [vmem:[%s7 + $0x20] sm:$0xff] %v6341
  %6402 = vst [vmem:[%s7 + $0x28] sm:$0xff] %v6342
  %6403 = vst [vmem:[%s7 + $0x30] sm:$0xff] %v6343
  %6404 = vst [vmem:[%s7 + $0x38] sm:$0xff] %v6344
  %6405 = vst [vmem:[%s7 + $0x40] sm:$0xff] %v6345
  %6406 = vst [vmem:[%s7 + $0x48] sm:$0xff] %v6346
  %6407 = vst [vmem:[%s7 + $0x50] sm:$0xff] %v6347
  %6408 = vst [vmem:[%s7 + $0x58] sm:$0xff] %v6348
  %6409 = vst [vmem:[%s7 + $0x60] sm:$0xff] %v6349
  %6410 = vst [vmem:[%s7 + $0x68] sm:$0xff] %v6350
  %6411 = vst [vmem:[%s7 + $0x70] sm:$0xff] %v6351
  %6412 = vst [vmem:[%s7 + $0x78] sm:$0xff] %v6352
  %6413 = vst [vmem:[%s7 + $0x80] sm:$0xff] %v6353
  %6414 = vst [vmem:[%s7 + $0x88] sm:$0xff] %v6354
  %6415 = vst [vmem:[%s7 + $0x90] sm:$0xff] %v6355
  %6416 = vst [vmem:[%s7 + $0x98] sm:$0xff] %v6356
  %6417 = vst [vmem:[%s7 + $0xa0] sm:$0xff] %v6357
  %6418 = vst [vmem:[%s7 + $0xa8] sm:$0xff] %v6358
  %6419 = vst [vmem:[%s7 + $0xb0] sm:$0xff] %v6359
  %6420 = vst [vmem:[%s7 + $0xb8] sm:$0xff] %v6360
  %6421 = vst [vmem:[%s7 + $0xc0] sm:$0xff] %v6361
  %6422 = vst [vmem:[%s7 + $0xc8] sm:$0xff] %v6362
  %6423 = vst [vmem:[%s7 + $0xd0] sm:$0xff] %v6363
  %6424 = vst [vmem:[%s7 + $0xd8] sm:$0xff] %v6364
  %6425 = vst [vmem:[%s7 + $0xe0] sm:$0xff] %v6365
  %6426 = vst [vmem:[%s7 + $0xe8] sm:$0xff] %v6366
  %6427 = vst [vmem:[%s7 + $0xf0] sm:$0xff] %v6367
  %6428 = vst [vmem:[%s7 + $0xf8] sm:$0xff] %v6368
  %6429 = vst [vmem:[%s7 + $0x100] sm:$0xff] %v6369
  %6430 = vst [vmem:[%s7 + $0x108] sm:$0xff] %v6370
  %6431 = vst [vmem:[%s7 + $0x110] sm:$0xff] %v6371
  %6432 = vst [vmem:[%s7 + $0x118] sm:$0xff] %v6372
  %6433 = vst [vmem:[%s7 + $0x120] sm:$0xff] %v6373
  %6434 = vst [vmem:[%s7 + $0x128] sm:$0xff] %v6374
  %6435 = vst [vmem:[%s7 + $0x130] sm:$0xff] %v6375
  %6436 = vst [vmem:[%s7 + $0x138] sm:$0xff] %v6376
  %6437 = vst [vmem:[%s7 + $0x140] sm:$0xff] %v6377
  %6438 = vst [vmem:[%s7 + $0x148] sm:$0xff] %v6378
  %6439 = vst [vmem:[%s7 + $0x150] sm:$0xff] %v6379
  %6440 = vst [vmem:[%s7 + $0x158] sm:$0xff] %v6380
  %6441 = vst [vmem:[%s7 + $0x160] sm:$0xff] %v6381
  %6442 = vst [vmem:[%s7 + $0x168] sm:$0xff] %v6382
  %6443 = vst [vmem:[%s7 + $0x170] sm:$0xff] %v6383
  %6444 = vst [vmem:[%s7 + $0x178] sm:$0xff] %v6384
  %6445 = vst [vmem:[%s7 + $0x180] sm:$0xff] %v6385
  %6446 = vst [vmem:[%s7 + $0x188] sm:$0xff] %v6386
  %6447 = vst [vmem:[%s7 + $0x190] sm:$0xff] %v6387
  %6448 = vst [vmem:[%s7 + $0x198] sm:$0xff] %v6388
  %6449 = vst [vmem:[%s7 + $0x1a0] sm:$0xff] %v6389
  %6450 = vst [vmem:[%s7 + $0x1a8] sm:$0xff] %v6390
  %6451 = vst [vmem:[%s7 + $0x1b0] sm:$0xff] %v6391
  %6452 = vst [vmem:[%s7 + $0x1b8] sm:$0xff] %v6392
  %6453 = vst [vmem:[%s7 + $0x1c0] sm:$0xff] %v6393
  %6454 = vst [vmem:[%s7 + $0x1c8] sm:$0xff] %v6394
  %6455 = vst [vmem:[%s7 + $0x1d0] sm:$0xff] %v6395
  %6456 = vst [vmem:[%s7 + $0x1d8] sm:$0xff] %v6396
  // Predicated region
  $region30: #{forward.1} parent=0 // pred_check
    _
  $region31: #{forward.1} parent=0 // pred_check_branch
    %6458 = sbr.rel (0) target = $region33
  $region32: #{forward.1} parent=0 // pred_region
    _
  $region33: #{forward.1} parent=0 // pred_fallthru
    _
  // Predicated region
  $region34: #{forward.1} parent=0 // pred_check
    _
  $region35: #{forward.1} parent=0 // pred_check_branch
    %6460 = sbr.rel (0) target = $region37
  $region36: #{forward.1} parent=0 // pred_region
    _
  $region37: #{forward.1} parent=0 // pred_fallthru
    _

</llo_original>
